<compile_context>
chip_gen: v6e
topology: v6e:2x2x1
jax: 0.10.0
libtpu: 0.0.40
codegen_flags: <defaults>
</compile_context>

<pallas_src>
import functools

import jax
import jax.numpy as jnp
from jax.experimental import pallas as pl
from jax.experimental.pallas import tpu as pltpu

# ---------------- model hyper-parameters (consistent with GPT.__init__) ------------
VOCAB_SIZE = 64
PADDED_VOCAB = 128          # lane-dense output store (sliced back to VOCAB_SIZE)
MAX_SEQ_LEN = 16
NUM_LAYERS = 2
EMBED_DIM = 32
NUM_HEADS = 4
HIDDEN_DIM = 64
# dropout = 0.0 -> identity in forward, omitted


# ---------------- Pallas kernel ------------------------------------------------------
def gpt_kernel(x_ref,                      # (B*S, E)   f32 activations
               wqkv_ref,                   # (L, E, 3E) bf16 fused QKV weight
               wo_ref, bo_ref,             # (L, E, E) bf16, (L, 1, E) f32
               ln1g_ref, ln1b_ref,         # (L, 1, E) f32
               ln2g_ref, ln2b_ref,         # (L, 1, E) f32
               w1_ref, b1_ref,             # (L, E, Hff) bf16, (L, 1, Hff) f32
               w2_ref, b2_ref,             # (L, Hff, E) bf16, (L, 1, E) f32
               lnfg_ref, lnfb_ref,         # (1, E) f32
               wcls_ref,                   # (E, PADDED_VOCAB) bf16 (zero-padded cols)
               out_ref,                    # (B*S, PADDED_VOCAB) f32
               *, num_heads, batch, seq_len):
    x = x_ref[...]                          # (B*S, E) f32 residual stream stays f32
    E = x.shape[-1]
    L = wqkv_ref.shape[0]
    H = num_heads
    hd = E // H
    S = seq_len
    B = batch
    scale = 1.0 / (hd ** 0.5)

    # Additive causal-mask bias, built once per kernel invocation (hoisted out of
    # the layer loop): 0 where k <= q, a large finite negative elsewhere
    # (no -inf -> no NaN risk). Broadcasts over the B*H batched score block.
    row = jax.lax.broadcasted_iota(jnp.int32, (1, S, S), 1)
    col = jax.lax.broadcasted_iota(jnp.int32, (1, S, S), 2)
    mask_bias = jnp.where(row >= col, 0.0, -1e9).astype(jnp.float32)   # (1, S, S)

    def layernorm(v, g, bb):
        mu = jnp.mean(v, axis=-1, keepdims=True)
        var = jnp.mean((v - mu) ** 2, axis=-1, keepdims=True)
        return (v - mu) * jax.lax.rsqrt(var + 1e-5) * g + bb

    def bf16(v):
        return v.astype(jnp.bfloat16)

    for l in range(L):                      # static unroll over decoder layers
        # ---- pre-attention layernorm (f32) ----
        nx = layernorm(x, ln1g_ref[l], ln1b_ref[l])
        # ---- fused QKV projection: one MXU push, bf16 operands, f32 accum ----
        qkv = jnp.dot(bf16(nx), wqkv_ref[l],
                      preferred_element_type=jnp.float32)              # (B*S, 3E)
        q = qkv[:, 0:E]
        k = qkv[:, E:2 * E]
        v = qkv[:, 2 * E:3 * E]

        # ---- attention: all (batch, head) slices batched into one contraction ----
        def head_stack(m):
            # (B*S, E) -> (B*H, S, hd); static B, H (tiny)
            return jnp.stack(
                [m[b * S:(b + 1) * S, h * hd:(h + 1) * hd]
                 for b in range(B) for h in range(H)], axis=0)

        qh = head_stack(q)                                             # (B*H, S, hd)
        kh = head_stack(k)
        vh = head_stack(v)
        # (B*H, S, hd) x (B*H, S, hd) -> (B*H, S, S)  one batched MXU push
        sc = jnp.einsum('nqd,nkd->nqk', bf16(qh), bf16(kh),
                        preferred_element_type=jnp.float32) * scale
        sc = sc + mask_bias
        sc = sc - jnp.max(sc, axis=-1, keepdims=True)
        p = jnp.exp(sc)
        denom = jnp.sum(p, axis=-1, keepdims=True)
        p = p * pl.reciprocal(denom, approx=True)                      # EUP slot
        # (B*H, S, S) x (B*H, S, hd) -> (B*H, S, hd)  one batched MXU push
        ob = jnp.einsum('nqk,nkd->nqd', bf16(p), bf16(vh),
                        preferred_element_type=jnp.float32)
        # reassemble (B*H, S, hd) -> (B*S, E)
        attn = jnp.concatenate(
            [jnp.concatenate([ob[b * H + h] for h in range(H)], axis=-1)
             for b in range(B)], axis=0)                               # (B*S, E)

        # ---- output projection (bias) + residual ----
        attn = jnp.dot(bf16(attn), wo_ref[l],
                       preferred_element_type=jnp.float32) + bo_ref[l]
        x = x + attn

        # ---- post-attention layernorm + SiLU MLP + residual ----
        nx = layernorm(x, ln2g_ref[l], ln2b_ref[l])
        h1 = jnp.dot(bf16(nx), w1_ref[l],
                     preferred_element_type=jnp.float32) + b1_ref[l]
        h1 = h1 * jax.nn.sigmoid(h1)                                   # SiLU (f32)
        h2 = jnp.dot(bf16(h1), w2_ref[l],
                     preferred_element_type=jnp.float32) + b2_ref[l]
        x = x + h2

    # ---- final layernorm + lane-dense vocab head (padded to 128) ----
    x = layernorm(x, lnfg_ref[...], lnfb_ref[...])
    out_ref[...] = jnp.dot(bf16(x), wcls_ref[...],
                           preferred_element_type=jnp.float32)         # (B*S, 128)


# ---------------- wrapper -------------------------------------------------------------
def gpt_forward_pallas(token_ids, kparams):
    """token_ids: (B, S) int32 -> logits (B, S, VOCAB_SIZE) float32."""
    B, S = token_ids.shape
    E, V = EMBED_DIM, VOCAB_SIZE
    # TODO(synk): embedding gathers stay in plain JAX (data-dependent row gather
    # is glue, not the kernel hot path); flatten batch*seq outside the kernel.
    x = kparams["tok_emb"][token_ids] + kparams["pos_emb"][:S][None, :, :]  # (B,S,E)
    x2 = x.reshape(B * S, E)

    weight_names = ["wqkv", "wo", "bo",
                    "ln1g", "ln1b", "ln2g", "ln2b",
                    "w1", "b1", "w2", "b2",
                    "lnfg", "lnfb", "wcls_pad"]
    weights = [kparams[n] for n in weight_names]

    kernel = functools.partial(gpt_kernel, num_heads=NUM_HEADS, batch=B, seq_len=S)
    # No grid: a single invocation; every operand is a whole-array VMEM ref and
    # is therefore inherently single-buffered (no per-step pipeline overhead).
    logits_pad = pl.pallas_call(
        kernel,
        out_shape=jax.ShapeDtypeStruct((B * S, PADDED_VOCAB), jnp.float32),
        compiler_params=pltpu.CompilerParams(vmem_limit_bytes=32 * 1024 * 1024),
    )(x2, *weights)
    return logits_pad.reshape(B, S, PADDED_VOCAB)[:, :, :V]


# ---------------- kernel-side parameter packing ---------------------------------------
def prepare_kernel_params(p):
    """Fuse QKV, pad the vocab head to 128 lanes, cast matmul weights to bf16."""
    E, V = EMBED_DIM, VOCAB_SIZE
    kp = dict(p)
    kp["wqkv"] = jnp.concatenate([p["wq"], p["wk"], p["wv"]],
                                 axis=-1).astype(jnp.bfloat16)          # (L, E, 3E)
    wcls_pad = jnp.zeros((E, PADDED_VOCAB), jnp.float32).at[:, :V].set(p["wcls"])
    kp["wcls_pad"] = wcls_pad.astype(jnp.bfloat16)                      # (E, 128)
    kp["wo"] = p["wo"].astype(jnp.bfloat16)
    kp["w1"] = p["w1"].astype(jnp.bfloat16)
    kp["w2"] = p["w2"].astype(jnp.bfloat16)
    return kp


# ---------------- pure-JAX reference (f32, same weight values) ------------------------
def gpt_forward_ref(token_ids, p):
    B, S = token_ids.shape
    x = p["tok_emb"][token_ids] + p["pos_emb"][:S][None, :, :]
    mask = jnp.tril(jnp.ones((S, S)))

    def ln(v, g, b):
        mu = v.mean(-1, keepdims=True)
        var = ((v - mu) ** 2).mean(-1, keepdims=True)
        return (v - mu) / jnp.sqrt(var + 1e-5) * g + b

    H, hd = NUM_HEADS, EMBED_DIM // NUM_HEADS
    for l in range(NUM_LAYERS):
        nx = ln(x, p["ln1g"][l, 0], p["ln1b"][l, 0])
        q = nx @ p["wq"][l]
        k = nx @ p["wk"][l]
        v = nx @ p["wv"][l]
        qh = q.reshape(B, S, H, hd).transpose(0, 2, 1, 3)
        kh = k.reshape(B, S, H, hd).transpose(0, 2, 1, 3)
        vh = v.reshape(B, S, H, hd).transpose(0, 2, 1, 3)
        s = qh @ kh.transpose(0, 1, 3, 2) / hd ** 0.5
        s = jnp.where(mask == 0, -jnp.inf, s)
        w = jax.nn.softmax(s, axis=-1)
        o = (w @ vh).transpose(0, 2, 1, 3).reshape(B, S, EMBED_DIM)
        x = x + (o @ p["wo"][l] + p["bo"][l, 0])
        nx = ln(x, p["ln2g"][l, 0], p["ln2b"][l, 0])
        h = nx @ p["w1"][l] + p["b1"][l, 0]
        h = h * jax.nn.sigmoid(h)
        x = x + (h @ p["w2"][l] + p["b2"][l, 0])
    x = ln(x, p["lnfg"][0], p["lnfb"][0])
    return x @ p["wcls"]


# ---------------- deterministic parameter init ----------------------------------------
def init_params(key):
    ks = jax.random.split(key, 16)
    L, E, Hff, V = NUM_LAYERS, EMBED_DIM, HIDDEN_DIM, VOCAB_SIZE
    s = 0.02

    def rb(a):
        # round matmul weights to bf16 precision once, so the kernel's bf16
        # weights and the f32 reference weights are the same values.
        return a.astype(jnp.bfloat16).astype(jnp.float32)

    return {
        "tok_emb": jax.random.normal(ks[0], (V, E), jnp.float32) * s,
        "pos_emb": jax.random.normal(ks[1], (MAX_SEQ_LEN, E), jnp.float32) * s,
        "wq": rb(jax.random.normal(ks[2], (L, E, E), jnp.float32) * s),
        "wk": rb(jax.random.normal(ks[3], (L, E, E), jnp.float32) * s),
        "wv": rb(jax.random.normal(ks[4], (L, E, E), jnp.float32) * s),
        "wo": rb(jax.random.normal(ks[5], (L, E, E), jnp.float32) * s),
        "bo": jax.random.normal(ks[6], (L, 1, E), jnp.float32) * s,
        "ln1g": jnp.ones((L, 1, E), jnp.float32),
        "ln1b": jnp.zeros((L, 1, E), jnp.float32),
        "ln2g": jnp.ones((L, 1, E), jnp.float32),
        "ln2b": jnp.zeros((L, 1, E), jnp.float32),
        "w1": rb(jax.random.normal(ks[7], (L, E, Hff), jnp.float32) * s),
        "b1": jax.random.normal(ks[8], (L, 1, Hff), jnp.float32) * s,
        "w2": rb(jax.random.normal(ks[9], (L, Hff, E), jnp.float32) * s),
        "b2": jax.random.normal(ks[10], (L, 1, E), jnp.float32) * s,
        "lnfg": jnp.ones((1, E), jnp.float32),
        "lnfb": jnp.zeros((1, E), jnp.float32),
        "wcls": rb(jax.random.normal(ks[11], (E, V), jnp.float32) * s),
    }


if __name__ == "__main__":
    key = jax.random.PRNGKey(0)
    pkey, tkey = jax.random.split(key)
    params = init_params(pkey)
    kparams = prepare_kernel_params(params)

    B, S = 2, 8
    token_ids = jax.random.randint(tkey, (B, S), 0, VOCAB_SIZE, dtype=jnp.int32)

    logits = gpt_forward_pallas(token_ids, kparams)
    logits = jax.block_until_ready(logits)

    ref = gpt_forward_ref(token_ids, params)
    assert logits.shape == (B, S, VOCAB_SIZE)
    # bf16 matmul operands + approx reciprocal -> slightly looser tolerance vs f32 ref
    assert jnp.allclose(logits, ref, atol=2e-2, rtol=2e-2), \
        float(jnp.max(jnp.abs(logits - ref)))

    # TODO(synk): cross-entropy loss path (targets != None) and the autoregressive
    # generate() loop are plain-JAX glue, not part of the kernel hot path.
    print("KERNEL_OK")
</pallas_src>

<mosaic_0001>
module attributes {stable_mosaic.version = 11 : i64} {
  func.func @gpt_kernel(%arg0: memref<16x32xf32, #tpu.memory_space<vmem>>, %arg1: memref<2x32x96xbf16, #tpu.memory_space<vmem>>, %arg2: memref<2x32x32xbf16, #tpu.memory_space<vmem>>, %arg3: memref<2x1x32xf32, #tpu.memory_space<vmem>>, %arg4: memref<2x1x32xf32, #tpu.memory_space<vmem>>, %arg5: memref<2x1x32xf32, #tpu.memory_space<vmem>>, %arg6: memref<2x1x32xf32, #tpu.memory_space<vmem>>, %arg7: memref<2x1x32xf32, #tpu.memory_space<vmem>>, %arg8: memref<2x32x64xbf16, #tpu.memory_space<vmem>>, %arg9: memref<2x1x64xf32, #tpu.memory_space<vmem>>, %arg10: memref<2x64x32xbf16, #tpu.memory_space<vmem>>, %arg11: memref<2x1x32xf32, #tpu.memory_space<vmem>>, %arg12: memref<1x32xf32, #tpu.memory_space<vmem>>, %arg13: memref<1x32xf32, #tpu.memory_space<vmem>>, %arg14: memref<32x128xbf16, #tpu.memory_space<vmem>>, %arg15: memref<16x128xf32, #tpu.memory_space<vmem>>) attributes {dimension_semantics = [], scalar_prefetch = 0 : i64, scratch_operands = 0 : i64, tpu.core_type = #tpu.core_type<tc>} {
    %c0 = arith.constant 0 : index
    %c0_0 = arith.constant 0 : index
    %0 = vector.load %arg0[%c0, %c0_0] : memref<16x32xf32, #tpu.memory_space<vmem>>, vector<16x32xf32>
    %1 = tpu.iota {dimensions = array<i32: 1>} : vector<1x8x8xi32>
    %2 = tpu.iota {dimensions = array<i32: 2>} : vector<1x8x8xi32>
    %3 = arith.cmpi sge, %1, %2 : vector<1x8x8xi32>
    %cst = arith.constant 0.000000e+00 : f32
    %cst_1 = arith.constant -1.000000e+09 : f32
    %4 = vector.broadcast %cst : f32 to vector<1x8x8xf32>
    %5 = vector.broadcast %cst_1 : f32 to vector<1x8x8xf32>
    %6 = arith.select %3, %4, %5 : vector<1x8x8xi1>, vector<1x8x8xf32>
    %c0_2 = arith.constant 0 : index
    %c0_3 = arith.constant 0 : index
    %c0_4 = arith.constant 0 : index
    %7 = vector.load %arg4[%c0_2, %c0_3, %c0_4] : memref<2x1x32xf32, #tpu.memory_space<vmem>>, vector<1x1x32xf32>
    %8 = vector.shape_cast %7 : vector<1x1x32xf32> to vector<1x32xf32>
    %c0_5 = arith.constant 0 : index
    %c0_6 = arith.constant 0 : index
    %c0_7 = arith.constant 0 : index
    %9 = vector.load %arg5[%c0_5, %c0_6, %c0_7] : memref<2x1x32xf32, #tpu.memory_space<vmem>>, vector<1x1x32xf32>
    %10 = vector.shape_cast %9 : vector<1x1x32xf32> to vector<1x32xf32>
    %cst_8 = arith.constant dense<0.000000e+00> : vector<16xf32>
    %11 = vector.multi_reduction <add>, %0, %cst_8 [1] : vector<16x32xf32> to vector<16xf32>
    %12 = vector.shape_cast %11 : vector<16xf32> to vector<16x1xf32>
    %cst_9 = arith.constant 3.200000e+01 : f32
    %13 = vector.broadcast %cst_9 : f32 to vector<16x1xf32>
    %14 = arith.divf %12, %13 : vector<16x1xf32>
    %15 = vector.broadcast %14 : vector<16x1xf32> to vector<16x32xf32>
    %16 = arith.subf %0, %15 : vector<16x32xf32>
    %17 = arith.mulf %16, %16 : vector<16x32xf32>
    %cst_10 = arith.constant dense<0.000000e+00> : vector<16xf32>
    %18 = vector.multi_reduction <add>, %17, %cst_10 [1] : vector<16x32xf32> to vector<16xf32>
    %19 = vector.shape_cast %18 : vector<16xf32> to vector<16x1xf32>
    %cst_11 = arith.constant 3.200000e+01 : f32
    %20 = vector.broadcast %cst_11 : f32 to vector<16x1xf32>
    %21 = arith.divf %19, %20 : vector<16x1xf32>
    %22 = vector.broadcast %14 : vector<16x1xf32> to vector<16x32xf32>
    %23 = arith.subf %0, %22 : vector<16x32xf32>
    %cst_12 = arith.constant 9.99999974E-6 : f32
    %24 = vector.broadcast %cst_12 : f32 to vector<16x1xf32>
    %25 = arith.addf %21, %24 : vector<16x1xf32>
    %26 = math.rsqrt %25 : vector<16x1xf32>
    %27 = vector.broadcast %26 : vector<16x1xf32> to vector<16x32xf32>
    %28 = arith.mulf %23, %27 : vector<16x32xf32>
    %29 = vector.broadcast %8 : vector<1x32xf32> to vector<16x32xf32>
    %30 = arith.mulf %28, %29 : vector<16x32xf32>
    %31 = vector.broadcast %10 : vector<1x32xf32> to vector<16x32xf32>
    %32 = arith.addf %30, %31 : vector<16x32xf32>
    %33 = arith.truncf %32 : vector<16x32xf32> to vector<16x32xbf16>
    %c0_13 = arith.constant 0 : index
    %c0_14 = arith.constant 0 : index
    %c0_15 = arith.constant 0 : index
    %34 = vector.load %arg1[%c0_13, %c0_14, %c0_15] : memref<2x32x96xbf16, #tpu.memory_space<vmem>>, vector<1x32x96xbf16>
    %35 = vector.shape_cast %34 : vector<1x32x96xbf16> to vector<32x96xbf16>
    %cst_16 = arith.constant dense<0.000000e+00> : vector<16x96xf32>
    %36 = tpu.matmul %33, %35, %cst_16 {dimension_numbers = #tpu.dot_dimension_numbers<[1], [0], [0], [1], [0, 0, 1, 1], [], []>} : vector<16x32xbf16>, vector<32x96xbf16>, vector<16x96xf32> -> vector<16x96xf32>
    %37 = vector.extract_strided_slice %36 {offsets = [0, 0], sizes = [16, 32], strides = [1, 1]} : vector<16x96xf32> to vector<16x32xf32>
    %38 = vector.extract_strided_slice %36 {offsets = [0, 32], sizes = [16, 32], strides = [1, 1]} : vector<16x96xf32> to vector<16x32xf32>
    %39 = vector.extract_strided_slice %36 {offsets = [0, 64], sizes = [16, 32], strides = [1, 1]} : vector<16x96xf32> to vector<16x32xf32>
    %40 = vector.extract_strided_slice %37 {offsets = [0, 0], sizes = [8, 8], strides = [1, 1]} : vector<16x32xf32> to vector<8x8xf32>
    %41 = vector.extract_strided_slice %37 {offsets = [0, 8], sizes = [8, 8], strides = [1, 1]} : vector<16x32xf32> to vector<8x8xf32>
    %42 = vector.extract_strided_slice %37 {offsets = [0, 16], sizes = [8, 8], strides = [1, 1]} : vector<16x32xf32> to vector<8x8xf32>
    %43 = vector.extract_strided_slice %37 {offsets = [0, 24], sizes = [8, 8], strides = [1, 1]} : vector<16x32xf32> to vector<8x8xf32>
    %44 = vector.extract_strided_slice %37 {offsets = [8, 0], sizes = [8, 8], strides = [1, 1]} : vector<16x32xf32> to vector<8x8xf32>
    %45 = vector.extract_strided_slice %37 {offsets = [8, 8], sizes = [8, 8], strides = [1, 1]} : vector<16x32xf32> to vector<8x8xf32>
    %46 = vector.extract_strided_slice %37 {offsets = [8, 16], sizes = [8, 8], strides = [1, 1]} : vector<16x32xf32> to vector<8x8xf32>
    %47 = vector.extract_strided_slice %37 {offsets = [8, 24], sizes = [8, 8], strides = [1, 1]} : vector<16x32xf32> to vector<8x8xf32>
    %48 = vector.shape_cast %40 : vector<8x8xf32> to vector<1x8x8xf32>
    %49 = vector.shape_cast %41 : vector<8x8xf32> to vector<1x8x8xf32>
    %50 = vector.shape_cast %42 : vector<8x8xf32> to vector<1x8x8xf32>
    %51 = vector.shape_cast %43 : vector<8x8xf32> to vector<1x8x8xf32>
    %52 = vector.shape_cast %44 : vector<8x8xf32> to vector<1x8x8xf32>
    %53 = vector.shape_cast %45 : vector<8x8xf32> to vector<1x8x8xf32>
    %54 = vector.shape_cast %46 : vector<8x8xf32> to vector<1x8x8xf32>
    %55 = vector.shape_cast %47 : vector<8x8xf32> to vector<1x8x8xf32>
    %56 = tpu.concatenate %48, %49, %50, %51, %52, %53, %54, %55 in 0 : vector<1x8x8xf32>, vector<1x8x8xf32>, vector<1x8x8xf32>, vector<1x8x8xf32>, vector<1x8x8xf32>, vector<1x8x8xf32>, vector<1x8x8xf32>, vector<1x8x8xf32> -> vector<8x8x8xf32>
    %57 = vector.extract_strided_slice %38 {offsets = [0, 0], sizes = [8, 8], strides = [1, 1]} : vector<16x32xf32> to vector<8x8xf32>
    %58 = vector.extract_strided_slice %38 {offsets = [0, 8], sizes = [8, 8], strides = [1, 1]} : vector<16x32xf32> to vector<8x8xf32>
    %59 = vector.extract_strided_slice %38 {offsets = [0, 16], sizes = [8, 8], strides = [1, 1]} : vector<16x32xf32> to vector<8x8xf32>
    %60 = vector.extract_strided_slice %38 {offsets = [0, 24], sizes = [8, 8], strides = [1, 1]} : vector<16x32xf32> to vector<8x8xf32>
    %61 = vector.extract_strided_slice %38 {offsets = [8, 0], sizes = [8, 8], strides = [1, 1]} : vector<16x32xf32> to vector<8x8xf32>
    %62 = vector.extract_strided_slice %38 {offsets = [8, 8], sizes = [8, 8], strides = [1, 1]} : vector<16x32xf32> to vector<8x8xf32>
    %63 = vector.extract_strided_slice %38 {offsets = [8, 16], sizes = [8, 8], strides = [1, 1]} : vector<16x32xf32> to vector<8x8xf32>
    %64 = vector.extract_strided_slice %38 {offsets = [8, 24], sizes = [8, 8], strides = [1, 1]} : vector<16x32xf32> to vector<8x8xf32>
    %65 = vector.shape_cast %57 : vector<8x8xf32> to vector<1x8x8xf32>
    %66 = vector.shape_cast %58 : vector<8x8xf32> to vector<1x8x8xf32>
    %67 = vector.shape_cast %59 : vector<8x8xf32> to vector<1x8x8xf32>
    %68 = vector.shape_cast %60 : vector<8x8xf32> to vector<1x8x8xf32>
    %69 = vector.shape_cast %61 : vector<8x8xf32> to vector<1x8x8xf32>
    %70 = vector.shape_cast %62 : vector<8x8xf32> to vector<1x8x8xf32>
    %71 = vector.shape_cast %63 : vector<8x8xf32> to vector<1x8x8xf32>
    %72 = vector.shape_cast %64 : vector<8x8xf32> to vector<1x8x8xf32>
    %73 = tpu.concatenate %65, %66, %67, %68, %69, %70, %71, %72 in 0 : vector<1x8x8xf32>, vector<1x8x8xf32>, vector<1x8x8xf32>, vector<1x8x8xf32>, vector<1x8x8xf32>, vector<1x8x8xf32>, vector<1x8x8xf32>, vector<1x8x8xf32> -> vector<8x8x8xf32>
    %74 = vector.extract_strided_slice %39 {offsets = [0, 0], sizes = [8, 8], strides = [1, 1]} : vector<16x32xf32> to vector<8x8xf32>
    %75 = vector.extract_strided_slice %39 {offsets = [0, 8], sizes = [8, 8], strides = [1, 1]} : vector<16x32xf32> to vector<8x8xf32>
    %76 = vector.extract_strided_slice %39 {offsets = [0, 16], sizes = [8, 8], strides = [1, 1]} : vector<16x32xf32> to vector<8x8xf32>
    %77 = vector.extract_strided_slice %39 {offsets = [0, 24], sizes = [8, 8], strides = [1, 1]} : vector<16x32xf32> to vector<8x8xf32>
    %78 = vector.extract_strided_slice %39 {offsets = [8, 0], sizes = [8, 8], strides = [1, 1]} : vector<16x32xf32> to vector<8x8xf32>
    %79 = vector.extract_strided_slice %39 {offsets = [8, 8], sizes = [8, 8], strides = [1, 1]} : vector<16x32xf32> to vector<8x8xf32>
    %80 = vector.extract_strided_slice %39 {offsets = [8, 16], sizes = [8, 8], strides = [1, 1]} : vector<16x32xf32> to vector<8x8xf32>
    %81 = vector.extract_strided_slice %39 {offsets = [8, 24], sizes = [8, 8], strides = [1, 1]} : vector<16x32xf32> to vector<8x8xf32>
    %82 = vector.shape_cast %74 : vector<8x8xf32> to vector<1x8x8xf32>
    %83 = vector.shape_cast %75 : vector<8x8xf32> to vector<1x8x8xf32>
    %84 = vector.shape_cast %76 : vector<8x8xf32> to vector<1x8x8xf32>
    %85 = vector.shape_cast %77 : vector<8x8xf32> to vector<1x8x8xf32>
    %86 = vector.shape_cast %78 : vector<8x8xf32> to vector<1x8x8xf32>
    %87 = vector.shape_cast %79 : vector<8x8xf32> to vector<1x8x8xf32>
    %88 = vector.shape_cast %80 : vector<8x8xf32> to vector<1x8x8xf32>
    %89 = vector.shape_cast %81 : vector<8x8xf32> to vector<1x8x8xf32>
    %90 = tpu.concatenate %82, %83, %84, %85, %86, %87, %88, %89 in 0 : vector<1x8x8xf32>, vector<1x8x8xf32>, vector<1x8x8xf32>, vector<1x8x8xf32>, vector<1x8x8xf32>, vector<1x8x8xf32>, vector<1x8x8xf32>, vector<1x8x8xf32> -> vector<8x8x8xf32>
    %91 = arith.truncf %56 : vector<8x8x8xf32> to vector<8x8x8xbf16>
    %92 = arith.truncf %73 : vector<8x8x8xf32> to vector<8x8x8xbf16>
    "tpu.trace_start"() <{level = 10 : i32, message = "nqd,nkd->nqk"}> : () -> ()
    %cst_17 = arith.constant dense<0.000000e+00> : vector<8x8x8xf32>
    %93 = tpu.matmul %91, %92, %cst_17 {dimension_numbers = #tpu.dot_dimension_numbers<[2], [2], [1], [1], [0, 0, 0, 1, 1, 1], [0], [0]>} : vector<8x8x8xbf16>, vector<8x8x8xbf16>, vector<8x8x8xf32> -> vector<8x8x8xf32>
    "tpu.trace_stop"() : () -> ()
    %cst_18 = arith.constant 0.353553385 : f32
    %94 = vector.broadcast %cst_18 : f32 to vector<8x8x8xf32>
    %95 = arith.mulf %93, %94 : vector<8x8x8xf32>
    %96 = vector.broadcast %6 : vector<1x8x8xf32> to vector<8x8x8xf32>
    %97 = arith.addf %95, %96 : vector<8x8x8xf32>
    %cst_19 = arith.constant dense<0xFF800000> : vector<8x8xf32>
    %98 = vector.multi_reduction <maximumf>, %97, %cst_19 [2] : vector<8x8x8xf32> to vector<8x8xf32>
    %99 = vector.shape_cast %98 : vector<8x8xf32> to vector<8x8x1xf32>
    %100 = vector.broadcast %99 : vector<8x8x1xf32> to vector<8x8x8xf32>
    %101 = arith.subf %97, %100 : vector<8x8x8xf32>
    %102 = math.exp %101 : vector<8x8x8xf32>
    %cst_20 = arith.constant dense<0.000000e+00> : vector<8x8xf32>
    %103 = vector.multi_reduction <add>, %102, %cst_20 [2] : vector<8x8x8xf32> to vector<8x8xf32>
    %104 = vector.shape_cast %103 : vector<8x8xf32> to vector<8x8x1xf32>
    %105 = tpu.reciprocal %104 {approx = true} : vector<8x8x1xf32> -> vector<8x8x1xf32>
    %106 = vector.broadcast %105 : vector<8x8x1xf32> to vector<8x8x8xf32>
    %107 = arith.mulf %102, %106 : vector<8x8x8xf32>
    %108 = arith.truncf %107 : vector<8x8x8xf32> to vector<8x8x8xbf16>
    %109 = arith.truncf %90 : vector<8x8x8xf32> to vector<8x8x8xbf16>
    "tpu.trace_start"() <{level = 10 : i32, message = "nqk,nkd->nqd"}> : () -> ()
    %cst_21 = arith.constant dense<0.000000e+00> : vector<8x8x8xf32>
    %110 = tpu.matmul %108, %109, %cst_21 {dimension_numbers = #tpu.dot_dimension_numbers<[2], [1], [1], [2], [0, 0, 0, 1, 1, 2], [0], [0]>} : vector<8x8x8xbf16>, vector<8x8x8xbf16>, vector<8x8x8xf32> -> vector<8x8x8xf32>
    "tpu.trace_stop"() : () -> ()
    %111 = vector.extract_strided_slice %110 {offsets = [0, 0, 0], sizes = [1, 8, 8], strides = [1, 1, 1]} : vector<8x8x8xf32> to vector<1x8x8xf32>
    %112 = vector.shape_cast %111 : vector<1x8x8xf32> to vector<8x8xf32>
    %113 = vector.extract_strided_slice %110 {offsets = [1, 0, 0], sizes = [1, 8, 8], strides = [1, 1, 1]} : vector<8x8x8xf32> to vector<1x8x8xf32>
    %114 = vector.shape_cast %113 : vector<1x8x8xf32> to vector<8x8xf32>
    %115 = vector.extract_strided_slice %110 {offsets = [2, 0, 0], sizes = [1, 8, 8], strides = [1, 1, 1]} : vector<8x8x8xf32> to vector<1x8x8xf32>
    %116 = vector.shape_cast %115 : vector<1x8x8xf32> to vector<8x8xf32>
    %117 = vector.extract_strided_slice %110 {offsets = [3, 0, 0], sizes = [1, 8, 8], strides = [1, 1, 1]} : vector<8x8x8xf32> to vector<1x8x8xf32>
    %118 = vector.shape_cast %117 : vector<1x8x8xf32> to vector<8x8xf32>
    %119 = tpu.concatenate %112, %114, %116, %118 in 1 : vector<8x8xf32>, vector<8x8xf32>, vector<8x8xf32>, vector<8x8xf32> -> vector<8x32xf32>
    %120 = vector.extract_strided_slice %110 {offsets = [4, 0, 0], sizes = [1, 8, 8], strides = [1, 1, 1]} : vector<8x8x8xf32> to vector<1x8x8xf32>
    %121 = vector.shape_cast %120 : vector<1x8x8xf32> to vector<8x8xf32>
    %122 = vector.extract_strided_slice %110 {offsets = [5, 0, 0], sizes = [1, 8, 8], strides = [1, 1, 1]} : vector<8x8x8xf32> to vector<1x8x8xf32>
    %123 = vector.shape_cast %122 : vector<1x8x8xf32> to vector<8x8xf32>
    %124 = vector.extract_strided_slice %110 {offsets = [6, 0, 0], sizes = [1, 8, 8], strides = [1, 1, 1]} : vector<8x8x8xf32> to vector<1x8x8xf32>
    %125 = vector.shape_cast %124 : vector<1x8x8xf32> to vector<8x8xf32>
    %126 = vector.extract_strided_slice %110 {offsets = [7, 0, 0], sizes = [1, 8, 8], strides = [1, 1, 1]} : vector<8x8x8xf32> to vector<1x8x8xf32>
    %127 = vector.shape_cast %126 : vector<1x8x8xf32> to vector<8x8xf32>
    %128 = tpu.concatenate %121, %123, %125, %127 in 1 : vector<8x8xf32>, vector<8x8xf32>, vector<8x8xf32>, vector<8x8xf32> -> vector<8x32xf32>
    %129 = tpu.concatenate %119, %128 in 0 : vector<8x32xf32>, vector<8x32xf32> -> vector<16x32xf32>
    %130 = arith.truncf %129 : vector<16x32xf32> to vector<16x32xbf16>
    %c0_22 = arith.constant 0 : index
    %c0_23 = arith.constant 0 : index
    %c0_24 = arith.constant 0 : index
    %131 = vector.load %arg2[%c0_22, %c0_23, %c0_24] : memref<2x32x32xbf16, #tpu.memory_space<vmem>>, vector<1x32x32xbf16>
    %132 = vector.shape_cast %131 : vector<1x32x32xbf16> to vector<32x32xbf16>
    %cst_25 = arith.constant dense<0.000000e+00> : vector<16x32xf32>
    %133 = tpu.matmul %130, %132, %cst_25 {dimension_numbers = #tpu.dot_dimension_numbers<[1], [0], [0], [1], [0, 0, 1, 1], [], []>} : vector<16x32xbf16>, vector<32x32xbf16>, vector<16x32xf32> -> vector<16x32xf32>
    %c0_26 = arith.constant 0 : index
    %c0_27 = arith.constant 0 : index
    %c0_28 = arith.constant 0 : index
    %134 = vector.load %arg3[%c0_26, %c0_27, %c0_28] : memref<2x1x32xf32, #tpu.memory_space<vmem>>, vector<1x1x32xf32>
    %135 = vector.shape_cast %134 : vector<1x1x32xf32> to vector<1x32xf32>
    %136 = vector.broadcast %135 : vector<1x32xf32> to vector<16x32xf32>
    %137 = arith.addf %133, %136 : vector<16x32xf32>
    %138 = arith.addf %0, %137 : vector<16x32xf32>
    %c0_29 = arith.constant 0 : index
    %c0_30 = arith.constant 0 : index
    %c0_31 = arith.constant 0 : index
    %139 = vector.load %arg6[%c0_29, %c0_30, %c0_31] : memref<2x1x32xf32, #tpu.memory_space<vmem>>, vector<1x1x32xf32>
    %140 = vector.shape_cast %139 : vector<1x1x32xf32> to vector<1x32xf32>
    %c0_32 = arith.constant 0 : index
    %c0_33 = arith.constant 0 : index
    %c0_34 = arith.constant 0 : index
    %141 = vector.load %arg7[%c0_32, %c0_33, %c0_34] : memref<2x1x32xf32, #tpu.memory_space<vmem>>, vector<1x1x32xf32>
    %142 = vector.shape_cast %141 : vector<1x1x32xf32> to vector<1x32xf32>
    %cst_35 = arith.constant dense<0.000000e+00> : vector<16xf32>
    %143 = vector.multi_reduction <add>, %138, %cst_35 [1] : vector<16x32xf32> to vector<16xf32>
    %144 = vector.shape_cast %143 : vector<16xf32> to vector<16x1xf32>
    %cst_36 = arith.constant 3.200000e+01 : f32
    %145 = vector.broadcast %cst_36 : f32 to vector<16x1xf32>
    %146 = arith.divf %144, %145 : vector<16x1xf32>
    %147 = vector.broadcast %146 : vector<16x1xf32> to vector<16x32xf32>
    %148 = arith.subf %138, %147 : vector<16x32xf32>
    %149 = arith.mulf %148, %148 : vector<16x32xf32>
    %cst_37 = arith.constant dense<0.000000e+00> : vector<16xf32>
    %150 = vector.multi_reduction <add>, %149, %cst_37 [1] : vector<16x32xf32> to vector<16xf32>
    %151 = vector.shape_cast %150 : vector<16xf32> to vector<16x1xf32>
    %cst_38 = arith.constant 3.200000e+01 : f32
    %152 = vector.broadcast %cst_38 : f32 to vector<16x1xf32>
    %153 = arith.divf %151, %152 : vector<16x1xf32>
    %154 = vector.broadcast %146 : vector<16x1xf32> to vector<16x32xf32>
    %155 = arith.subf %138, %154 : vector<16x32xf32>
    %cst_39 = arith.constant 9.99999974E-6 : f32
    %156 = vector.broadcast %cst_39 : f32 to vector<16x1xf32>
    %157 = arith.addf %153, %156 : vector<16x1xf32>
    %158 = math.rsqrt %157 : vector<16x1xf32>
    %159 = vector.broadcast %158 : vector<16x1xf32> to vector<16x32xf32>
    %160 = arith.mulf %155, %159 : vector<16x32xf32>
    %161 = vector.broadcast %140 : vector<1x32xf32> to vector<16x32xf32>
    %162 = arith.mulf %160, %161 : vector<16x32xf32>
    %163 = vector.broadcast %142 : vector<1x32xf32> to vector<16x32xf32>
    %164 = arith.addf %162, %163 : vector<16x32xf32>
    %165 = arith.truncf %164 : vector<16x32xf32> to vector<16x32xbf16>
    %c0_40 = arith.constant 0 : index
    %c0_41 = arith.constant 0 : index
    %c0_42 = arith.constant 0 : index
    %166 = vector.load %arg8[%c0_40, %c0_41, %c0_42] : memref<2x32x64xbf16, #tpu.memory_space<vmem>>, vector<1x32x64xbf16>
    %167 = vector.shape_cast %166 : vector<1x32x64xbf16> to vector<32x64xbf16>
    %cst_43 = arith.constant dense<0.000000e+00> : vector<16x64xf32>
    %168 = tpu.matmul %165, %167, %cst_43 {dimension_numbers = #tpu.dot_dimension_numbers<[1], [0], [0], [1], [0, 0, 1, 1], [], []>} : vector<16x32xbf16>, vector<32x64xbf16>, vector<16x64xf32> -> vector<16x64xf32>
    %c0_44 = arith.constant 0 : index
    %c0_45 = arith.constant 0 : index
    %c0_46 = arith.constant 0 : index
    %169 = vector.load %arg9[%c0_44, %c0_45, %c0_46] : memref<2x1x64xf32, #tpu.memory_space<vmem>>, vector<1x1x64xf32>
    %170 = vector.shape_cast %169 : vector<1x1x64xf32> to vector<1x64xf32>
    %171 = vector.broadcast %170 : vector<1x64xf32> to vector<16x64xf32>
    %172 = arith.addf %168, %171 : vector<16x64xf32>
    %173 = arith.negf %172 : vector<16x64xf32>
    %174 = math.exp %173 : vector<16x64xf32>
    %cst_47 = arith.constant 1.000000e+00 : f32
    %175 = vector.broadcast %cst_47 : f32 to vector<16x64xf32>
    %176 = arith.addf %175, %174 : vector<16x64xf32>
    %177 = arith.divf %175, %176 : vector<16x64xf32>
    %178 = arith.mulf %172, %177 : vector<16x64xf32>
    %179 = arith.truncf %178 : vector<16x64xf32> to vector<16x64xbf16>
    %c0_48 = arith.constant 0 : index
    %c0_49 = arith.constant 0 : index
    %c0_50 = arith.constant 0 : index
    %180 = vector.load %arg10[%c0_48, %c0_49, %c0_50] : memref<2x64x32xbf16, #tpu.memory_space<vmem>>, vector<1x64x32xbf16>
    %181 = vector.shape_cast %180 : vector<1x64x32xbf16> to vector<64x32xbf16>
    %cst_51 = arith.constant dense<0.000000e+00> : vector<16x32xf32>
    %182 = tpu.matmul %179, %181, %cst_51 {dimension_numbers = #tpu.dot_dimension_numbers<[1], [0], [0], [1], [0, 0, 1, 1], [], []>} : vector<16x64xbf16>, vector<64x32xbf16>, vector<16x32xf32> -> vector<16x32xf32>
    %c0_52 = arith.constant 0 : index
    %c0_53 = arith.constant 0 : index
    %c0_54 = arith.constant 0 : index
    %183 = vector.load %arg11[%c0_52, %c0_53, %c0_54] : memref<2x1x32xf32, #tpu.memory_space<vmem>>, vector<1x1x32xf32>
    %184 = vector.shape_cast %183 : vector<1x1x32xf32> to vector<1x32xf32>
    %185 = vector.broadcast %184 : vector<1x32xf32> to vector<16x32xf32>
    %186 = arith.addf %182, %185 : vector<16x32xf32>
    %187 = arith.addf %138, %186 : vector<16x32xf32>
    %c1 = arith.constant 1 : index
    %c0_55 = arith.constant 0 : index
    %c0_56 = arith.constant 0 : index
    %188 = vector.load %arg4[%c1, %c0_55, %c0_56] : memref<2x1x32xf32, #tpu.memory_space<vmem>>, vector<1x1x32xf32>
    %189 = vector.shape_cast %188 : vector<1x1x32xf32> to vector<1x32xf32>
    %c1_57 = arith.constant 1 : index
    %c0_58 = arith.constant 0 : index
    %c0_59 = arith.constant 0 : index
    %190 = vector.load %arg5[%c1_57, %c0_58, %c0_59] : memref<2x1x32xf32, #tpu.memory_space<vmem>>, vector<1x1x32xf32>
    %191 = vector.shape_cast %190 : vector<1x1x32xf32> to vector<1x32xf32>
    %cst_60 = arith.constant dense<0.000000e+00> : vector<16xf32>
    %192 = vector.multi_reduction <add>, %187, %cst_60 [1] : vector<16x32xf32> to vector<16xf32>
    %193 = vector.shape_cast %192 : vector<16xf32> to vector<16x1xf32>
    %cst_61 = arith.constant 3.200000e+01 : f32
    %194 = vector.broadcast %cst_61 : f32 to vector<16x1xf32>
    %195 = arith.divf %193, %194 : vector<16x1xf32>
    %196 = vector.broadcast %195 : vector<16x1xf32> to vector<16x32xf32>
    %197 = arith.subf %187, %196 : vector<16x32xf32>
    %198 = arith.mulf %197, %197 : vector<16x32xf32>
    %cst_62 = arith.constant dense<0.000000e+00> : vector<16xf32>
    %199 = vector.multi_reduction <add>, %198, %cst_62 [1] : vector<16x32xf32> to vector<16xf32>
    %200 = vector.shape_cast %199 : vector<16xf32> to vector<16x1xf32>
    %cst_63 = arith.constant 3.200000e+01 : f32
    %201 = vector.broadcast %cst_63 : f32 to vector<16x1xf32>
    %202 = arith.divf %200, %201 : vector<16x1xf32>
    %203 = vector.broadcast %195 : vector<16x1xf32> to vector<16x32xf32>
    %204 = arith.subf %187, %203 : vector<16x32xf32>
    %cst_64 = arith.constant 9.99999974E-6 : f32
    %205 = vector.broadcast %cst_64 : f32 to vector<16x1xf32>
    %206 = arith.addf %202, %205 : vector<16x1xf32>
    %207 = math.rsqrt %206 : vector<16x1xf32>
    %208 = vector.broadcast %207 : vector<16x1xf32> to vector<16x32xf32>
    %209 = arith.mulf %204, %208 : vector<16x32xf32>
    %210 = vector.broadcast %189 : vector<1x32xf32> to vector<16x32xf32>
    %211 = arith.mulf %209, %210 : vector<16x32xf32>
    %212 = vector.broadcast %191 : vector<1x32xf32> to vector<16x32xf32>
    %213 = arith.addf %211, %212 : vector<16x32xf32>
    %214 = arith.truncf %213 : vector<16x32xf32> to vector<16x32xbf16>
    %c1_65 = arith.constant 1 : index
    %c0_66 = arith.constant 0 : index
    %c0_67 = arith.constant 0 : index
    %215 = vector.load %arg1[%c1_65, %c0_66, %c0_67] : memref<2x32x96xbf16, #tpu.memory_space<vmem>>, vector<1x32x96xbf16>
    %216 = vector.shape_cast %215 : vector<1x32x96xbf16> to vector<32x96xbf16>
    %cst_68 = arith.constant dense<0.000000e+00> : vector<16x96xf32>
    %217 = tpu.matmul %214, %216, %cst_68 {dimension_numbers = #tpu.dot_dimension_numbers<[1], [0], [0], [1], [0, 0, 1, 1], [], []>} : vector<16x32xbf16>, vector<32x96xbf16>, vector<16x96xf32> -> vector<16x96xf32>
    %218 = vector.extract_strided_slice %217 {offsets = [0, 0], sizes = [16, 32], strides = [1, 1]} : vector<16x96xf32> to vector<16x32xf32>
    %219 = vector.extract_strided_slice %217 {offsets = [0, 32], sizes = [16, 32], strides = [1, 1]} : vector<16x96xf32> to vector<16x32xf32>
    %220 = vector.extract_strided_slice %217 {offsets = [0, 64], sizes = [16, 32], strides = [1, 1]} : vector<16x96xf32> to vector<16x32xf32>
    %221 = vector.extract_strided_slice %218 {offsets = [0, 0], sizes = [8, 8], strides = [1, 1]} : vector<16x32xf32> to vector<8x8xf32>
    %222 = vector.extract_strided_slice %218 {offsets = [0, 8], sizes = [8, 8], strides = [1, 1]} : vector<16x32xf32> to vector<8x8xf32>
    %223 = vector.extract_strided_slice %218 {offsets = [0, 16], sizes = [8, 8], strides = [1, 1]} : vector<16x32xf32> to vector<8x8xf32>
    %224 = vector.extract_strided_slice %218 {offsets = [0, 24], sizes = [8, 8], strides = [1, 1]} : vector<16x32xf32> to vector<8x8xf32>
    %225 = vector.extract_strided_slice %218 {offsets = [8, 0], sizes = [8, 8], strides = [1, 1]} : vector<16x32xf32> to vector<8x8xf32>
    %226 = vector.extract_strided_slice %218 {offsets = [8, 8], sizes = [8, 8], strides = [1, 1]} : vector<16x32xf32> to vector<8x8xf32>
    %227 = vector.extract_strided_slice %218 {offsets = [8, 16], sizes = [8, 8], strides = [1, 1]} : vector<16x32xf32> to vector<8x8xf32>
    %228 = vector.extract_strided_slice %218 {offsets = [8, 24], sizes = [8, 8], strides = [1, 1]} : vector<16x32xf32> to vector<8x8xf32>
    %229 = vector.shape_cast %221 : vector<8x8xf32> to vector<1x8x8xf32>
    %230 = vector.shape_cast %222 : vector<8x8xf32> to vector<1x8x8xf32>
    %231 = vector.shape_cast %223 : vector<8x8xf32> to vector<1x8x8xf32>
    %232 = vector.shape_cast %224 : vector<8x8xf32> to vector<1x8x8xf32>
    %233 = vector.shape_cast %225 : vector<8x8xf32> to vector<1x8x8xf32>
    %234 = vector.shape_cast %226 : vector<8x8xf32> to vector<1x8x8xf32>
    %235 = vector.shape_cast %227 : vector<8x8xf32> to vector<1x8x8xf32>
    %236 = vector.shape_cast %228 : vector<8x8xf32> to vector<1x8x8xf32>
    %237 = tpu.concatenate %229, %230, %231, %232, %233, %234, %235, %236 in 0 : vector<1x8x8xf32>, vector<1x8x8xf32>, vector<1x8x8xf32>, vector<1x8x8xf32>, vector<1x8x8xf32>, vector<1x8x8xf32>, vector<1x8x8xf32>, vector<1x8x8xf32> -> vector<8x8x8xf32>
    %238 = vector.extract_strided_slice %219 {offsets = [0, 0], sizes = [8, 8], strides = [1, 1]} : vector<16x32xf32> to vector<8x8xf32>
    %239 = vector.extract_strided_slice %219 {offsets = [0, 8], sizes = [8, 8], strides = [1, 1]} : vector<16x32xf32> to vector<8x8xf32>
    %240 = vector.extract_strided_slice %219 {offsets = [0, 16], sizes = [8, 8], strides = [1, 1]} : vector<16x32xf32> to vector<8x8xf32>
    %241 = vector.extract_strided_slice %219 {offsets = [0, 24], sizes = [8, 8], strides = [1, 1]} : vector<16x32xf32> to vector<8x8xf32>
    %242 = vector.extract_strided_slice %219 {offsets = [8, 0], sizes = [8, 8], strides = [1, 1]} : vector<16x32xf32> to vector<8x8xf32>
    %243 = vector.extract_strided_slice %219 {offsets = [8, 8], sizes = [8, 8], strides = [1, 1]} : vector<16x32xf32> to vector<8x8xf32>
    %244 = vector.extract_strided_slice %219 {offsets = [8, 16], sizes = [8, 8], strides = [1, 1]} : vector<16x32xf32> to vector<8x8xf32>
    %245 = vector.extract_strided_slice %219 {offsets = [8, 24], sizes = [8, 8], strides = [1, 1]} : vector<16x32xf32> to vector<8x8xf32>
    %246 = vector.shape_cast %238 : vector<8x8xf32> to vector<1x8x8xf32>
    %247 = vector.shape_cast %239 : vector<8x8xf32> to vector<1x8x8xf32>
    %248 = vector.shape_cast %240 : vector<8x8xf32> to vector<1x8x8xf32>
    %249 = vector.shape_cast %241 : vector<8x8xf32> to vector<1x8x8xf32>
    %250 = vector.shape_cast %242 : vector<8x8xf32> to vector<1x8x8xf32>
    %251 = vector.shape_cast %243 : vector<8x8xf32> to vector<1x8x8xf32>
    %252 = vector.shape_cast %244 : vector<8x8xf32> to vector<1x8x8xf32>
    %253 = vector.shape_cast %245 : vector<8x8xf32> to vector<1x8x8xf32>
    %254 = tpu.concatenate %246, %247, %248, %249, %250, %251, %252, %253 in 0 : vector<1x8x8xf32>, vector<1x8x8xf32>, vector<1x8x8xf32>, vector<1x8x8xf32>, vector<1x8x8xf32>, vector<1x8x8xf32>, vector<1x8x8xf32>, vector<1x8x8xf32> -> vector<8x8x8xf32>
    %255 = vector.extract_strided_slice %220 {offsets = [0, 0], sizes = [8, 8], strides = [1, 1]} : vector<16x32xf32> to vector<8x8xf32>
    %256 = vector.extract_strided_slice %220 {offsets = [0, 8], sizes = [8, 8], strides = [1, 1]} : vector<16x32xf32> to vector<8x8xf32>
    %257 = vector.extract_strided_slice %220 {offsets = [0, 16], sizes = [8, 8], strides = [1, 1]} : vector<16x32xf32> to vector<8x8xf32>
    %258 = vector.extract_strided_slice %220 {offsets = [0, 24], sizes = [8, 8], strides = [1, 1]} : vector<16x32xf32> to vector<8x8xf32>
    %259 = vector.extract_strided_slice %220 {offsets = [8, 0], sizes = [8, 8], strides = [1, 1]} : vector<16x32xf32> to vector<8x8xf32>
    %260 = vector.extract_strided_slice %220 {offsets = [8, 8], sizes = [8, 8], strides = [1, 1]} : vector<16x32xf32> to vector<8x8xf32>
    %261 = vector.extract_strided_slice %220 {offsets = [8, 16], sizes = [8, 8], strides = [1, 1]} : vector<16x32xf32> to vector<8x8xf32>
    %262 = vector.extract_strided_slice %220 {offsets = [8, 24], sizes = [8, 8], strides = [1, 1]} : vector<16x32xf32> to vector<8x8xf32>
    %263 = vector.shape_cast %255 : vector<8x8xf32> to vector<1x8x8xf32>
    %264 = vector.shape_cast %256 : vector<8x8xf32> to vector<1x8x8xf32>
    %265 = vector.shape_cast %257 : vector<8x8xf32> to vector<1x8x8xf32>
    %266 = vector.shape_cast %258 : vector<8x8xf32> to vector<1x8x8xf32>
    %267 = vector.shape_cast %259 : vector<8x8xf32> to vector<1x8x8xf32>
    %268 = vector.shape_cast %260 : vector<8x8xf32> to vector<1x8x8xf32>
    %269 = vector.shape_cast %261 : vector<8x8xf32> to vector<1x8x8xf32>
    %270 = vector.shape_cast %262 : vector<8x8xf32> to vector<1x8x8xf32>
    %271 = tpu.concatenate %263, %264, %265, %266, %267, %268, %269, %270 in 0 : vector<1x8x8xf32>, vector<1x8x8xf32>, vector<1x8x8xf32>, vector<1x8x8xf32>, vector<1x8x8xf32>, vector<1x8x8xf32>, vector<1x8x8xf32>, vector<1x8x8xf32> -> vector<8x8x8xf32>
    %272 = arith.truncf %237 : vector<8x8x8xf32> to vector<8x8x8xbf16>
    %273 = arith.truncf %254 : vector<8x8x8xf32> to vector<8x8x8xbf16>
    "tpu.trace_start"() <{level = 10 : i32, message = "nqd,nkd->nqk"}> : () -> ()
    %cst_69 = arith.constant dense<0.000000e+00> : vector<8x8x8xf32>
    %274 = tpu.matmul %272, %273, %cst_69 {dimension_numbers = #tpu.dot_dimension_numbers<[2], [2], [1], [1], [0, 0, 0, 1, 1, 1], [0], [0]>} : vector<8x8x8xbf16>, vector<8x8x8xbf16>, vector<8x8x8xf32> -> vector<8x8x8xf32>
    "tpu.trace_stop"() : () -> ()
    %cst_70 = arith.constant 0.353553385 : f32
    %275 = vector.broadcast %cst_70 : f32 to vector<8x8x8xf32>
    %276 = arith.mulf %274, %275 : vector<8x8x8xf32>
    %277 = vector.broadcast %6 : vector<1x8x8xf32> to vector<8x8x8xf32>
    %278 = arith.addf %276, %277 : vector<8x8x8xf32>
    %cst_71 = arith.constant dense<0xFF800000> : vector<8x8xf32>
    %279 = vector.multi_reduction <maximumf>, %278, %cst_71 [2] : vector<8x8x8xf32> to vector<8x8xf32>
    %280 = vector.shape_cast %279 : vector<8x8xf32> to vector<8x8x1xf32>
    %281 = vector.broadcast %280 : vector<8x8x1xf32> to vector<8x8x8xf32>
    %282 = arith.subf %278, %281 : vector<8x8x8xf32>
    %283 = math.exp %282 : vector<8x8x8xf32>
    %cst_72 = arith.constant dense<0.000000e+00> : vector<8x8xf32>
    %284 = vector.multi_reduction <add>, %283, %cst_72 [2] : vector<8x8x8xf32> to vector<8x8xf32>
    %285 = vector.shape_cast %284 : vector<8x8xf32> to vector<8x8x1xf32>
    %286 = tpu.reciprocal %285 {approx = true} : vector<8x8x1xf32> -> vector<8x8x1xf32>
    %287 = vector.broadcast %286 : vector<8x8x1xf32> to vector<8x8x8xf32>
    %288 = arith.mulf %283, %287 : vector<8x8x8xf32>
    %289 = arith.truncf %288 : vector<8x8x8xf32> to vector<8x8x8xbf16>
    %290 = arith.truncf %271 : vector<8x8x8xf32> to vector<8x8x8xbf16>
    "tpu.trace_start"() <{level = 10 : i32, message = "nqk,nkd->nqd"}> : () -> ()
    %cst_73 = arith.constant dense<0.000000e+00> : vector<8x8x8xf32>
    %291 = tpu.matmul %289, %290, %cst_73 {dimension_numbers = #tpu.dot_dimension_numbers<[2], [1], [1], [2], [0, 0, 0, 1, 1, 2], [0], [0]>} : vector<8x8x8xbf16>, vector<8x8x8xbf16>, vector<8x8x8xf32> -> vector<8x8x8xf32>
    "tpu.trace_stop"() : () -> ()
    %292 = vector.extract_strided_slice %291 {offsets = [0, 0, 0], sizes = [1, 8, 8], strides = [1, 1, 1]} : vector<8x8x8xf32> to vector<1x8x8xf32>
    %293 = vector.shape_cast %292 : vector<1x8x8xf32> to vector<8x8xf32>
    %294 = vector.extract_strided_slice %291 {offsets = [1, 0, 0], sizes = [1, 8, 8], strides = [1, 1, 1]} : vector<8x8x8xf32> to vector<1x8x8xf32>
    %295 = vector.shape_cast %294 : vector<1x8x8xf32> to vector<8x8xf32>
    %296 = vector.extract_strided_slice %291 {offsets = [2, 0, 0], sizes = [1, 8, 8], strides = [1, 1, 1]} : vector<8x8x8xf32> to vector<1x8x8xf32>
    %297 = vector.shape_cast %296 : vector<1x8x8xf32> to vector<8x8xf32>
    %298 = vector.extract_strided_slice %291 {offsets = [3, 0, 0], sizes = [1, 8, 8], strides = [1, 1, 1]} : vector<8x8x8xf32> to vector<1x8x8xf32>
    %299 = vector.shape_cast %298 : vector<1x8x8xf32> to vector<8x8xf32>
    %300 = tpu.concatenate %293, %295, %297, %299 in 1 : vector<8x8xf32>, vector<8x8xf32>, vector<8x8xf32>, vector<8x8xf32> -> vector<8x32xf32>
    %301 = vector.extract_strided_slice %291 {offsets = [4, 0, 0], sizes = [1, 8, 8], strides = [1, 1, 1]} : vector<8x8x8xf32> to vector<1x8x8xf32>
    %302 = vector.shape_cast %301 : vector<1x8x8xf32> to vector<8x8xf32>
    %303 = vector.extract_strided_slice %291 {offsets = [5, 0, 0], sizes = [1, 8, 8], strides = [1, 1, 1]} : vector<8x8x8xf32> to vector<1x8x8xf32>
    %304 = vector.shape_cast %303 : vector<1x8x8xf32> to vector<8x8xf32>
    %305 = vector.extract_strided_slice %291 {offsets = [6, 0, 0], sizes = [1, 8, 8], strides = [1, 1, 1]} : vector<8x8x8xf32> to vector<1x8x8xf32>
    %306 = vector.shape_cast %305 : vector<1x8x8xf32> to vector<8x8xf32>
    %307 = vector.extract_strided_slice %291 {offsets = [7, 0, 0], sizes = [1, 8, 8], strides = [1, 1, 1]} : vector<8x8x8xf32> to vector<1x8x8xf32>
    %308 = vector.shape_cast %307 : vector<1x8x8xf32> to vector<8x8xf32>
    %309 = tpu.concatenate %302, %304, %306, %308 in 1 : vector<8x8xf32>, vector<8x8xf32>, vector<8x8xf32>, vector<8x8xf32> -> vector<8x32xf32>
    %310 = tpu.concatenate %300, %309 in 0 : vector<8x32xf32>, vector<8x32xf32> -> vector<16x32xf32>
    %311 = arith.truncf %310 : vector<16x32xf32> to vector<16x32xbf16>
    %c1_74 = arith.constant 1 : index
    %c0_75 = arith.constant 0 : index
    %c0_76 = arith.constant 0 : index
    %312 = vector.load %arg2[%c1_74, %c0_75, %c0_76] : memref<2x32x32xbf16, #tpu.memory_space<vmem>>, vector<1x32x32xbf16>
    %313 = vector.shape_cast %312 : vector<1x32x32xbf16> to vector<32x32xbf16>
    %cst_77 = arith.constant dense<0.000000e+00> : vector<16x32xf32>
    %314 = tpu.matmul %311, %313, %cst_77 {dimension_numbers = #tpu.dot_dimension_numbers<[1], [0], [0], [1], [0, 0, 1, 1], [], []>} : vector<16x32xbf16>, vector<32x32xbf16>, vector<16x32xf32> -> vector<16x32xf32>
    %c1_78 = arith.constant 1 : index
    %c0_79 = arith.constant 0 : index
    %c0_80 = arith.constant 0 : index
    %315 = vector.load %arg3[%c1_78, %c0_79, %c0_80] : memref<2x1x32xf32, #tpu.memory_space<vmem>>, vector<1x1x32xf32>
    %316 = vector.shape_cast %315 : vector<1x1x32xf32> to vector<1x32xf32>
    %317 = vector.broadcast %316 : vector<1x32xf32> to vector<16x32xf32>
    %318 = arith.addf %314, %317 : vector<16x32xf32>
    %319 = arith.addf %187, %318 : vector<16x32xf32>
    %c1_81 = arith.constant 1 : index
    %c0_82 = arith.constant 0 : index
    %c0_83 = arith.constant 0 : index
    %320 = vector.load %arg6[%c1_81, %c0_82, %c0_83] : memref<2x1x32xf32, #tpu.memory_space<vmem>>, vector<1x1x32xf32>
    %321 = vector.shape_cast %320 : vector<1x1x32xf32> to vector<1x32xf32>
    %c1_84 = arith.constant 1 : index
    %c0_85 = arith.constant 0 : index
    %c0_86 = arith.constant 0 : index
    %322 = vector.load %arg7[%c1_84, %c0_85, %c0_86] : memref<2x1x32xf32, #tpu.memory_space<vmem>>, vector<1x1x32xf32>
    %323 = vector.shape_cast %322 : vector<1x1x32xf32> to vector<1x32xf32>
    %cst_87 = arith.constant dense<0.000000e+00> : vector<16xf32>
    %324 = vector.multi_reduction <add>, %319, %cst_87 [1] : vector<16x32xf32> to vector<16xf32>
    %325 = vector.shape_cast %324 : vector<16xf32> to vector<16x1xf32>
    %cst_88 = arith.constant 3.200000e+01 : f32
    %326 = vector.broadcast %cst_88 : f32 to vector<16x1xf32>
    %327 = arith.divf %325, %326 : vector<16x1xf32>
    %328 = vector.broadcast %327 : vector<16x1xf32> to vector<16x32xf32>
    %329 = arith.subf %319, %328 : vector<16x32xf32>
    %330 = arith.mulf %329, %329 : vector<16x32xf32>
    %cst_89 = arith.constant dense<0.000000e+00> : vector<16xf32>
    %331 = vector.multi_reduction <add>, %330, %cst_89 [1] : vector<16x32xf32> to vector<16xf32>
    %332 = vector.shape_cast %331 : vector<16xf32> to vector<16x1xf32>
    %cst_90 = arith.constant 3.200000e+01 : f32
    %333 = vector.broadcast %cst_90 : f32 to vector<16x1xf32>
    %334 = arith.divf %332, %333 : vector<16x1xf32>
    %335 = vector.broadcast %327 : vector<16x1xf32> to vector<16x32xf32>
    %336 = arith.subf %319, %335 : vector<16x32xf32>
    %cst_91 = arith.constant 9.99999974E-6 : f32
    %337 = vector.broadcast %cst_91 : f32 to vector<16x1xf32>
    %338 = arith.addf %334, %337 : vector<16x1xf32>
    %339 = math.rsqrt %338 : vector<16x1xf32>
    %340 = vector.broadcast %339 : vector<16x1xf32> to vector<16x32xf32>
    %341 = arith.mulf %336, %340 : vector<16x32xf32>
    %342 = vector.broadcast %321 : vector<1x32xf32> to vector<16x32xf32>
    %343 = arith.mulf %341, %342 : vector<16x32xf32>
    %344 = vector.broadcast %323 : vector<1x32xf32> to vector<16x32xf32>
    %345 = arith.addf %343, %344 : vector<16x32xf32>
    %346 = arith.truncf %345 : vector<16x32xf32> to vector<16x32xbf16>
    %c1_92 = arith.constant 1 : index
    %c0_93 = arith.constant 0 : index
    %c0_94 = arith.constant 0 : index
    %347 = vector.load %arg8[%c1_92, %c0_93, %c0_94] : memref<2x32x64xbf16, #tpu.memory_space<vmem>>, vector<1x32x64xbf16>
    %348 = vector.shape_cast %347 : vector<1x32x64xbf16> to vector<32x64xbf16>
    %cst_95 = arith.constant dense<0.000000e+00> : vector<16x64xf32>
    %349 = tpu.matmul %346, %348, %cst_95 {dimension_numbers = #tpu.dot_dimension_numbers<[1], [0], [0], [1], [0, 0, 1, 1], [], []>} : vector<16x32xbf16>, vector<32x64xbf16>, vector<16x64xf32> -> vector<16x64xf32>
    %c1_96 = arith.constant 1 : index
    %c0_97 = arith.constant 0 : index
    %c0_98 = arith.constant 0 : index
    %350 = vector.load %arg9[%c1_96, %c0_97, %c0_98] : memref<2x1x64xf32, #tpu.memory_space<vmem>>, vector<1x1x64xf32>
    %351 = vector.shape_cast %350 : vector<1x1x64xf32> to vector<1x64xf32>
    %352 = vector.broadcast %351 : vector<1x64xf32> to vector<16x64xf32>
    %353 = arith.addf %349, %352 : vector<16x64xf32>
    %354 = arith.negf %353 : vector<16x64xf32>
    %355 = math.exp %354 : vector<16x64xf32>
    %cst_99 = arith.constant 1.000000e+00 : f32
    %356 = vector.broadcast %cst_99 : f32 to vector<16x64xf32>
    %357 = arith.addf %356, %355 : vector<16x64xf32>
    %358 = arith.divf %356, %357 : vector<16x64xf32>
    %359 = arith.mulf %353, %358 : vector<16x64xf32>
    %360 = arith.truncf %359 : vector<16x64xf32> to vector<16x64xbf16>
    %c1_100 = arith.constant 1 : index
    %c0_101 = arith.constant 0 : index
    %c0_102 = arith.constant 0 : index
    %361 = vector.load %arg10[%c1_100, %c0_101, %c0_102] : memref<2x64x32xbf16, #tpu.memory_space<vmem>>, vector<1x64x32xbf16>
    %362 = vector.shape_cast %361 : vector<1x64x32xbf16> to vector<64x32xbf16>
    %cst_103 = arith.constant dense<0.000000e+00> : vector<16x32xf32>
    %363 = tpu.matmul %360, %362, %cst_103 {dimension_numbers = #tpu.dot_dimension_numbers<[1], [0], [0], [1], [0, 0, 1, 1], [], []>} : vector<16x64xbf16>, vector<64x32xbf16>, vector<16x32xf32> -> vector<16x32xf32>
    %c1_104 = arith.constant 1 : index
    %c0_105 = arith.constant 0 : index
    %c0_106 = arith.constant 0 : index
    %364 = vector.load %arg11[%c1_104, %c0_105, %c0_106] : memref<2x1x32xf32, #tpu.memory_space<vmem>>, vector<1x1x32xf32>
    %365 = vector.shape_cast %364 : vector<1x1x32xf32> to vector<1x32xf32>
    %366 = vector.broadcast %365 : vector<1x32xf32> to vector<16x32xf32>
    %367 = arith.addf %363, %366 : vector<16x32xf32>
    %368 = arith.addf %319, %367 : vector<16x32xf32>
    %c0_107 = arith.constant 0 : index
    %c0_108 = arith.constant 0 : index
    %369 = vector.load %arg12[%c0_107, %c0_108] : memref<1x32xf32, #tpu.memory_space<vmem>>, vector<1x32xf32>
    %c0_109 = arith.constant 0 : index
    %c0_110 = arith.constant 0 : index
    %370 = vector.load %arg13[%c0_109, %c0_110] : memref<1x32xf32, #tpu.memory_space<vmem>>, vector<1x32xf32>
    %cst_111 = arith.constant dense<0.000000e+00> : vector<16xf32>
    %371 = vector.multi_reduction <add>, %368, %cst_111 [1] : vector<16x32xf32> to vector<16xf32>
    %372 = vector.shape_cast %371 : vector<16xf32> to vector<16x1xf32>
    %cst_112 = arith.constant 3.200000e+01 : f32
    %373 = vector.broadcast %cst_112 : f32 to vector<16x1xf32>
    %374 = arith.divf %372, %373 : vector<16x1xf32>
    %375 = vector.broadcast %374 : vector<16x1xf32> to vector<16x32xf32>
    %376 = arith.subf %368, %375 : vector<16x32xf32>
    %377 = arith.mulf %376, %376 : vector<16x32xf32>
    %cst_113 = arith.constant dense<0.000000e+00> : vector<16xf32>
    %378 = vector.multi_reduction <add>, %377, %cst_113 [1] : vector<16x32xf32> to vector<16xf32>
    %379 = vector.shape_cast %378 : vector<16xf32> to vector<16x1xf32>
    %cst_114 = arith.constant 3.200000e+01 : f32
    %380 = vector.broadcast %cst_114 : f32 to vector<16x1xf32>
    %381 = arith.divf %379, %380 : vector<16x1xf32>
    %382 = vector.broadcast %374 : vector<16x1xf32> to vector<16x32xf32>
    %383 = arith.subf %368, %382 : vector<16x32xf32>
    %cst_115 = arith.constant 9.99999974E-6 : f32
    %384 = vector.broadcast %cst_115 : f32 to vector<16x1xf32>
    %385 = arith.addf %381, %384 : vector<16x1xf32>
    %386 = math.rsqrt %385 : vector<16x1xf32>
    %387 = vector.broadcast %386 : vector<16x1xf32> to vector<16x32xf32>
    %388 = arith.mulf %383, %387 : vector<16x32xf32>
    %389 = vector.broadcast %369 : vector<1x32xf32> to vector<16x32xf32>
    %390 = arith.mulf %388, %389 : vector<16x32xf32>
    %391 = vector.broadcast %370 : vector<1x32xf32> to vector<16x32xf32>
    %392 = arith.addf %390, %391 : vector<16x32xf32>
    %393 = arith.truncf %392 : vector<16x32xf32> to vector<16x32xbf16>
    %c0_116 = arith.constant 0 : index
    %c0_117 = arith.constant 0 : index
    %394 = vector.load %arg14[%c0_116, %c0_117] : memref<32x128xbf16, #tpu.memory_space<vmem>>, vector<32x128xbf16>
    %cst_118 = arith.constant dense<0.000000e+00> : vector<16x128xf32>
    %395 = tpu.matmul %393, %394, %cst_118 {dimension_numbers = #tpu.dot_dimension_numbers<[1], [0], [0], [1], [0, 0, 1, 1], [], []>} : vector<16x32xbf16>, vector<32x128xbf16>, vector<16x128xf32> -> vector<16x128xf32>
    %c0_119 = arith.constant 0 : index
    %c0_120 = arith.constant 0 : index
    %396 = vector.load %arg15[%c0_119, %c0_120] : memref<16x128xf32, #tpu.memory_space<vmem>>, vector<16x128xf32>
    tpu.vector_store %arg15[%c0_119, %c0_120], %395 {strides = array<i32>} : memref<16x128xf32, #tpu.memory_space<vmem>>, vector<16x128xf32>,
    return
  }
}

</mosaic_0001>

<llo_original>
// kernel: tpu_custom_call.1
$region0: #{tpu_custom_call.1}
  #allocation0 [shape = 'u32[]', space=smem, size = 0x4, offset = 0x4, fixed_abs, tag = 'smem constant byte address 0x4 - core index']
  #allocation1 [shape = 'u32[144,128]{1,0:T(1,128)}', space=vmem, size = 0x12000, scoped, tag = 'internal scratch']
  %s0 = inlined_call_operand.hbm [shape: f32[16,32], index: 0, kind: input, shape index: {}]
  %s1 = inlined_call_operand.vmem [shape: bf16[2,32,96], index: 1, kind: input, shape index: {}]
  %s2 = inlined_call_operand.vmem [shape: bf16[2,32,32], index: 2, kind: input, shape index: {}]
  %s3 = inlined_call_operand.hbm [shape: f32[2,1,32], index: 3, kind: input, shape index: {}]
  %s4 = inlined_call_operand.hbm [shape: f32[2,1,32], index: 4, kind: input, shape index: {}]
  %s5 = inlined_call_operand.hbm [shape: f32[2,1,32], index: 5, kind: input, shape index: {}]
  %s6 = inlined_call_operand.hbm [shape: f32[2,1,32], index: 6, kind: input, shape index: {}]
  %s7 = inlined_call_operand.hbm [shape: f32[2,1,32], index: 7, kind: input, shape index: {}]
  %s8 = inlined_call_operand.vmem [shape: bf16[2,32,64], index: 8, kind: input, shape index: {}]
  %s9 = inlined_call_operand.hbm [shape: f32[2,1,64], index: 9, kind: input, shape index: {}]
  %s10 = inlined_call_operand.vmem [shape: bf16[2,64,32], index: 10, kind: input, shape index: {}]
  %s11 = inlined_call_operand.vmem [shape: f32[2,1,32], index: 11, kind: input, shape index: {}]
  %s12 = inlined_call_operand.vmem [shape: f32[1,32], index: 12, kind: input, shape index: {}]
  %s13 = inlined_call_operand.vmem [shape: f32[1,32], index: 13, kind: input, shape index: {}]
  %s14 = inlined_call_operand.vmem [shape: bf16[32,128], index: 14, kind: input, shape index: {}]
  %s15 = inlined_call_operand.hbm [shape: f32[16,128], index: 15, kind: output, shape index: {}]
  %s16 = sld [smem:[#allocation0]]
  $region98: #{tpu_custom_call.1} parent=0
    _
  %s18 = ssub.s32 1, %s16
  %s19 = scalar_select 0, %s18, %s16
  $region1: #{tpu_custom_call.1} parent=0
    #allocation2 [shape = 'u8[8192]{0}', space=vmem, size = 0x2000, scoped, tag = 'input window, operand 0, single buffered']
    #allocation3 [shape = 's32[1]{0}', space=sflag, size = 0x4, scoped, tag = 'scoped memory for tpu_custom_call.1']
    #allocation4 [shape = 's32[1]{0}', space=sflag, size = 0x4, scoped, tag = 'scoped memory for tpu_custom_call.1']
    #allocation5 [shape = 'u8[1024]{0}', space=vmem, size = 0x400, scoped, tag = 'input window, operand 3, single buffered']
    #allocation6 [shape = 's32[1]{0}', space=sflag, size = 0x4, scoped, tag = 'scoped memory for tpu_custom_call.1']
    #allocation7 [shape = 'u8[1024]{0}', space=vmem, size = 0x400, scoped, tag = 'input window, operand 4, single buffered']
    #allocation8 [shape = 'u8[1024]{0}', space=vmem, size = 0x400, scoped, tag = 'input window, operand 5, single buffered']
    #allocation9 [shape = 's32[1]{0}', space=sflag, size = 0x4, scoped, tag = 'scoped memory for tpu_custom_call.1']
    #allocation10 [shape = 'u8[1024]{0}', space=vmem, size = 0x400, scoped, tag = 'input window, operand 6, single buffered']
    #allocation11 [shape = 'u8[1024]{0}', space=vmem, size = 0x400, scoped, tag = 'input window, operand 7, single buffered']
    #allocation12 [shape = 's32[1]{0}', space=sflag, size = 0x4, scoped, tag = 'scoped memory for tpu_custom_call.1']
    #allocation13 [shape = 'u8[1024]{0}', space=vmem, size = 0x400, scoped, tag = 'input window, operand 9, single buffered']
    #allocation14 [shape = 'u8[8192]{0}', space=vmem, size = 0x2000, scoped, tag = 'output window, operand 0, single buffered']
    %20 = vsyncpa [#allocation3], 0
    %21 = vsyncpa [#allocation6], 0
    %22 = vsyncpa [#allocation9], 0
    %23 = vsyncpa [#allocation12], 0
    %24 = vsyncpa [#allocation4], 0
    // Predicated region
    $region2: #{tpu_custom_call.1} parent=1 // pred_check
      _
    $region3: #{tpu_custom_call.1} parent=1 // pred_check_branch
      %26 = sbr.rel (0) target = $region5
    $region4: #{tpu_custom_call.1} parent=1 // pred_region
      %s28 = ssub.s32 256, 256
      %29 = vsyncadd [#allocation3], %s28
      %s30 = sshll.u32 [#allocation2], 4
      %s31 = int_to_ptr.vmem [resolvable:$true] %s30
      %36 = dma.hbm_to_vmem [thread:$0]  %s0, 256, %s31, [#allocation3], 128, 128, 8
    $region5: #{tpu_custom_call.1} parent=1 // pred_fallthru
      _
    // Predicated region
    $region6: #{tpu_custom_call.1} parent=1 // pred_check
      _
    $region7: #{tpu_custom_call.1} parent=1 // pred_check_branch
      %38 = sbr.rel (0) target = $region9
    $region8: #{tpu_custom_call.1} parent=1 // pred_region
      _
    $region9: #{tpu_custom_call.1} parent=1 // pred_fallthru
      _
    // Predicated region
    $region10: #{tpu_custom_call.1} parent=1 // pred_check
      _
    $region11: #{tpu_custom_call.1} parent=1 // pred_check_branch
      %40 = sbr.rel (0) target = $region13
    $region12: #{tpu_custom_call.1} parent=1 // pred_region
      _
    $region13: #{tpu_custom_call.1} parent=1 // pred_fallthru
      _
    // Predicated region
    $region14: #{tpu_custom_call.1} parent=1 // pred_check
      _
    $region15: #{tpu_custom_call.1} parent=1 // pred_check_branch
      %42 = sbr.rel (0) target = $region17
    $region16: #{tpu_custom_call.1} parent=1 // pred_region
      %s44 = ssub.s32 32, 32
      %45 = vsyncadd [#allocation6], %s44
      %s46 = sshll.u32 [#allocation5], 4
      %s47 = int_to_ptr.vmem [resolvable:$true] %s46
      %52 = dma.hbm_to_vmem [thread:$0]  %s3, 32, %s47, [#allocation6], 16, 16, 1
    $region17: #{tpu_custom_call.1} parent=1 // pred_fallthru
      _
    // Predicated region
    $region18: #{tpu_custom_call.1} parent=1 // pred_check
      _
    $region19: #{tpu_custom_call.1} parent=1 // pred_check_branch
      %54 = sbr.rel (0) target = $region21
    $region20: #{tpu_custom_call.1} parent=1 // pred_region
      %s56 = ssub.s32 32, 32
      %57 = vsyncadd [#allocation6], %s56
      %s58 = sshll.u32 [#allocation7], 4
      %s59 = int_to_ptr.vmem [resolvable:$true] %s58
      %64 = dma.hbm_to_vmem [thread:$0]  %s4, 32, %s59, [#allocation6], 16, 16, 1
    $region21: #{tpu_custom_call.1} parent=1 // pred_fallthru
      _
    // Predicated region
    $region22: #{tpu_custom_call.1} parent=1 // pred_check
      _
    $region23: #{tpu_custom_call.1} parent=1 // pred_check_branch
      %66 = sbr.rel (0) target = $region25
    $region24: #{tpu_custom_call.1} parent=1 // pred_region
      %s68 = ssub.s32 32, 32
      %69 = vsyncadd [#allocation9], %s68
      %s70 = sshll.u32 [#allocation8], 4
      %s71 = int_to_ptr.vmem [resolvable:$true] %s70
      %76 = dma.hbm_to_vmem [thread:$0]  %s5, 32, %s71, [#allocation9], 16, 16, 1
    $region25: #{tpu_custom_call.1} parent=1 // pred_fallthru
      _
    // Predicated region
    $region26: #{tpu_custom_call.1} parent=1 // pred_check
      _
    $region27: #{tpu_custom_call.1} parent=1 // pred_check_branch
      %78 = sbr.rel (0) target = $region29
    $region28: #{tpu_custom_call.1} parent=1 // pred_region
      %s80 = ssub.s32 32, 32
      %81 = vsyncadd [#allocation9], %s80
      %s82 = sshll.u32 [#allocation10], 4
      %s83 = int_to_ptr.vmem [resolvable:$true] %s82
      %88 = dma.hbm_to_vmem [thread:$0]  %s6, 32, %s83, [#allocation9], 16, 16, 1
    $region29: #{tpu_custom_call.1} parent=1 // pred_fallthru
      _
    // Predicated region
    $region30: #{tpu_custom_call.1} parent=1 // pred_check
      _
    $region31: #{tpu_custom_call.1} parent=1 // pred_check_branch
      %90 = sbr.rel (0) target = $region33
    $region32: #{tpu_custom_call.1} parent=1 // pred_region
      %s92 = ssub.s32 32, 32
      %93 = vsyncadd [#allocation12], %s92
      %s94 = sshll.u32 [#allocation11], 4
      %s95 = int_to_ptr.vmem [resolvable:$true] %s94
      %100 = dma.hbm_to_vmem [thread:$0]  %s7, 32, %s95, [#allocation12], 16, 16, 1
    $region33: #{tpu_custom_call.1} parent=1 // pred_fallthru
      _
    // Predicated region
    $region34: #{tpu_custom_call.1} parent=1 // pred_check
      _
    $region35: #{tpu_custom_call.1} parent=1 // pred_check_branch
      %102 = sbr.rel (0) target = $region37
    $region36: #{tpu_custom_call.1} parent=1 // pred_region
      _
    $region37: #{tpu_custom_call.1} parent=1 // pred_fallthru
      _
    // Predicated region
    $region38: #{tpu_custom_call.1} parent=1 // pred_check
      _
    $region39: #{tpu_custom_call.1} parent=1 // pred_check_branch
      %104 = sbr.rel (0) target = $region41
    $region40: #{tpu_custom_call.1} parent=1 // pred_region
      %s106 = ssub.s32 32, 32
      %107 = vsyncadd [#allocation12], %s106
      %s108 = sshll.u32 [#allocation13], 4
      %s109 = int_to_ptr.vmem [resolvable:$true] %s108
      %114 = dma.hbm_to_vmem [thread:$0]  %s9, 32, %s109, [#allocation12], 16, 16, 1
    $region41: #{tpu_custom_call.1} parent=1 // pred_fallthru
      _
    // Predicated region
    $region42: #{tpu_custom_call.1} parent=1 // pred_check
      _
    $region43: #{tpu_custom_call.1} parent=1 // pred_check_branch
      %116 = sbr.rel (0) target = $region45
    $region44: #{tpu_custom_call.1} parent=1 // pred_region
      _
    $region45: #{tpu_custom_call.1} parent=1 // pred_fallthru
      _
    // Predicated region
    $region46: #{tpu_custom_call.1} parent=1 // pred_check
      _
    $region47: #{tpu_custom_call.1} parent=1 // pred_check_branch
      %118 = sbr.rel (0) target = $region49
    $region48: #{tpu_custom_call.1} parent=1 // pred_region
      _
    $region49: #{tpu_custom_call.1} parent=1 // pred_fallthru
      _
    // Predicated region
    $region50: #{tpu_custom_call.1} parent=1 // pred_check
      _
    $region51: #{tpu_custom_call.1} parent=1 // pred_check_branch
      %120 = sbr.rel (0) target = $region53
    $region52: #{tpu_custom_call.1} parent=1 // pred_region
      _
    $region53: #{tpu_custom_call.1} parent=1 // pred_fallthru
      _
    // Predicated region
    $region54: #{tpu_custom_call.1} parent=1 // pred_check
      _
    $region55: #{tpu_custom_call.1} parent=1 // pred_check_branch
      %122 = sbr.rel (0) target = $region57
    $region56: #{tpu_custom_call.1} parent=1 // pred_region
      _
    $region57: #{tpu_custom_call.1} parent=1 // pred_fallthru
      _
    // Predicated region
    $region58: #{tpu_custom_call.1} parent=1 // pred_check
      _
    $region59: #{tpu_custom_call.1} parent=1 // pred_check_branch
      %124 = sbr.rel (0) target = $region61
    $region60: #{tpu_custom_call.1} parent=1 // pred_region
      _
    $region61: #{tpu_custom_call.1} parent=1 // pred_fallthru
      _
    // Predicated region
    $region62: #{tpu_custom_call.1} parent=1 // pred_check
      _
    $region63: #{tpu_custom_call.1} parent=1 // pred_check_branch
      %126 = sbr.rel (0) target = $region65
    $region64: #{tpu_custom_call.1} parent=1 // pred_region
      %127 = dma.done [#allocation3], 256
    $region65: #{tpu_custom_call.1} parent=1 // pred_fallthru
      _
    // Predicated region
    $region66: #{tpu_custom_call.1} parent=1 // pred_check
      _
    $region67: #{tpu_custom_call.1} parent=1 // pred_check_branch
      %129 = sbr.rel (0) target = $region69
    $region68: #{tpu_custom_call.1} parent=1 // pred_region
      %130 = dma.done [#allocation6], 32
    $region69: #{tpu_custom_call.1} parent=1 // pred_fallthru
      _
    // Predicated region
    $region70: #{tpu_custom_call.1} parent=1 // pred_check
      _
    $region71: #{tpu_custom_call.1} parent=1 // pred_check_branch
      %132 = sbr.rel (0) target = $region73
    $region72: #{tpu_custom_call.1} parent=1 // pred_region
      %133 = dma.done [#allocation6], 32
    $region73: #{tpu_custom_call.1} parent=1 // pred_fallthru
      _
    // Predicated region
    $region74: #{tpu_custom_call.1} parent=1 // pred_check
      _
    $region75: #{tpu_custom_call.1} parent=1 // pred_check_branch
      %135 = sbr.rel (0) target = $region77
    $region76: #{tpu_custom_call.1} parent=1 // pred_region
      %136 = dma.done [#allocation9], 32
    $region77: #{tpu_custom_call.1} parent=1 // pred_fallthru
      _
    // Predicated region
    $region78: #{tpu_custom_call.1} parent=1 // pred_check
      _
    $region79: #{tpu_custom_call.1} parent=1 // pred_check_branch
      %138 = sbr.rel (0) target = $region81
    $region80: #{tpu_custom_call.1} parent=1 // pred_region
      %139 = dma.done [#allocation9], 32
    $region81: #{tpu_custom_call.1} parent=1 // pred_fallthru
      _
    // Predicated region
    $region82: #{tpu_custom_call.1} parent=1 // pred_check
      _
    $region83: #{tpu_custom_call.1} parent=1 // pred_check_branch
      %141 = sbr.rel (0) target = $region85
    $region84: #{tpu_custom_call.1} parent=1 // pred_region
      %142 = dma.done [#allocation12], 32
    $region85: #{tpu_custom_call.1} parent=1 // pred_fallthru
      _
    // Predicated region
    $region86: #{tpu_custom_call.1} parent=1 // pred_check
      _
    $region87: #{tpu_custom_call.1} parent=1 // pred_check_branch
      %144 = sbr.rel (0) target = $region89
    $region88: #{tpu_custom_call.1} parent=1 // pred_region
      %145 = dma.done [#allocation12], 32
    $region89: #{tpu_custom_call.1} parent=1 // pred_fallthru
      _
    %v147 = vld [vmem:[#allocation2] sm:$0xff]
    %v148 = vld [vmem:[#allocation2 + $0x8] sm:$0xff]
    %v149 = vlaneseq
    %v150 = vshrl.u32 %v149, 7
    %v151 = vlaneseq
    %v152 = vand.u32 %v151, 127
    %vm153 = vcmp.ge.s32.totalorder %v150, %v152
    %v154 = vsel %vm153, 0.0, -1e+09
    %v155 = vld [vmem:[#allocation7] sm:$0x1]
    %v156 = vld [vmem:[#allocation8] sm:$0x1]
    %vm157 = vcmask 261120
    %v158 = vsel %vm157, %v147, 0.0
    %159 = vadd.xlane.f32.xlu0 %v158
    %v160 = vpop.xlane.xlu0 %159
    %v161 = vsel %vm157, %v148, 0.0
    %162 = vadd.xlane.f32.xlu0 %v161
    %v163 = vpop.xlane.xlu0 %162
    %v164 = vrcp.pop 32.0
    %v165 = vmul.f32 %v160, %v164
    %v166 = vmul.f32 %v163, %v164
    %v167 = vsub.f32 %v147, %v165
    %v168 = vsub.f32 %v148, %v166
    %v169 = vmul.f32 %v167, %v167
    %v170 = vmul.f32 %v168, %v168
    %v171 = vsel %vm157, %v169, 0.0
    %172 = vadd.xlane.f32.xlu0 %v171
    %v173 = vpop.xlane.xlu0 %172
    %v174 = vsel %vm157, %v170, 0.0
    %175 = vadd.xlane.f32.xlu0 %v174
    %v176 = vpop.xlane.xlu0 %175
    %v177 = vmul.f32 %v173, %v164
    %v178 = vmul.f32 %v176, %v164
    %v179 = vadd.f32 %v177, 1e-05
    %v180 = vadd.f32 %v178, 1e-05
    %v181 = vrsqrt.pop %v179
    %v182 = vrsqrt.pop %v180
    %v183 = vmul.f32 %v167, %v181
    %v184 = vmul.f32 %v168, %v182
    %v186 = vlaneseq
    %v187 = vshrl.u32 %v186, 7
    %v188 = vsub.s32 0, %v187
    %v189 = vrot.slane %v155, %v188
    %v191 = vmul.f32 %v183, %v189
    %v192 = vmul.f32 %v184, %v189
    %v194 = vlaneseq
    %v195 = vshrl.u32 %v194, 7
    %v196 = vsub.s32 0, %v195
    %v197 = vrot.slane %v156, %v196
    %v199 = vadd.f32 %v191, %v197
    %v200 = vadd.f32 %v192, %v197
    %v201 = vpack.c.bf16 %v200, %v199
    %v202 = vld [vmem:[%s1] sm:$0xf]
    %v203 = vld [vmem:[%s1 + $0x4] sm:$0xf]
    %v204 = vld [vmem:[%s1 + $0x8] sm:$0xf]
    %v205 = vld [vmem:[%s1 + $0xc] sm:$0xf]
    %v210 = vunpack.c.l.b16 %v202
    %v211 = vunpack.c.l.b16 %v203
    %v212 = vunpack.c.l.b16 %v204
    %v213 = vunpack.c.l.b16 %v205
    %v214 = vpack.c.b16 %v211, %v210
    %v215 = vpack.c.b16 %v213, %v212
    %v219 = vsel %vm157, %v201, 0
    %221 = vmatprep.subr.bf16.mxu0 0
    %222 = vmatpush1.bf16.msra.mxu0 0
    %223 = vmatprep.subr.bf16.mxu0 0
    %224 = vmatpush1.bf16.msra.mxu0 0
    %225 = vmatprep.subr.bf16.mxu0 0
    %226 = vmatpush1.bf16.msra.mxu0 0
    %227 = vmatprep.subr.bf16.mxu0 0
    %228 = vmatpush1.bf16.msra.mxu0 0
    %229 = vmatprep.subr.bf16.mxu0 0
    %230 = vmatpush1.bf16.msra.mxu0 0
    %231 = vmatprep.subr.bf16.mxu0 0
    %232 = vmatpush1.bf16.msra.mxu0 0
    %233 = vmatprep.subr.bf16.mxu0 0
    %234 = vmatpush1.bf16.msra.mxu0 %v215
    %235 = vmatprep.subr.bf16.mxu0 0
    %236 = vmatpush1.bf16.msra.mxu0 %v214
    %237 = vmatprep.subr.bf16.mxu0 0
    %238 = vmatpush2.bf16.msra.mxu0 0
    %239 = vmatprep.subr.bf16.mxu0 0
    %240 = vmatpush2.bf16.msra.mxu0 0
    %241 = vmatprep.subr.bf16.mxu0 0
    %242 = vmatpush2.bf16.msra.mxu0 0
    %243 = vmatprep.subr.bf16.mxu0 0
    %244 = vmatpush2.bf16.msra.mxu0 0
    %245 = vmatprep.subr.bf16.mxu0 0
    %246 = vmatpush2.bf16.msra.mxu0 0
    %247 = vmatprep.subr.bf16.mxu0 0
    %248 = vmatpush2.bf16.msra.mxu0 0
    %249 = vmatprep.subr.bf16.mxu0 0
    %250 = vmatpush2.bf16.msra.mxu0 0
    %251 = vmatprep.subr.bf16.mxu0 0
    %252 = vmatpush2.bf16.msra.mxu0 0
    %253 = vmatprep.mubr.bf16.mxu0 0
    %254 = vmatmul.mubr.bf16.gmra.mxu0 %v219
    %v255 = vpop.f32.mrf.mxu0
    %v256 = vadd.f32 0.0, %v255
    %v257 = vpop.f32.mrf.mxu0
    %v258 = vpop.f32.mrf.mxu0
    %v259 = vadd.f32 0.0, %v258
    %v260 = vpop.f32.mrf.mxu0
    %261 = vdwg.mxu0
    %263 = vrot.lane.b32.xlu0 %v256, 120
    %v264 = vpop.permute.xlu0 %263
    %266 = vrot.lane.b32.xlu0 %v256, 112
    %v267 = vpop.permute.xlu0 %266
    %269 = vrot.lane.b32.xlu0 %v256, 104
    %v270 = vpop.permute.xlu0 %269
    %273 = vrot.lane.b32.xlu0 %v259, 120
    %v274 = vpop.permute.xlu0 %273
    %276 = vrot.lane.b32.xlu0 %v259, 112
    %v277 = vpop.permute.xlu0 %276
    %279 = vrot.lane.b32.xlu0 %v259, 104
    %v280 = vpop.permute.xlu0 %279
    %v282 = vpack.c.bf16 %v256, %v256
    %v283 = vpack.c.bf16 %v264, %v264
    %v284 = vpack.c.bf16 %v267, %v267
    %v285 = vpack.c.bf16 %v270, %v270
    %v286 = vpack.c.bf16 %v259, %v259
    %v287 = vpack.c.bf16 %v274, %v274
    %v288 = vpack.c.bf16 %v277, %v277
    %v289 = vpack.c.bf16 %v280, %v280
    %291 = vrot.lane.b32.xlu0 %v282, 96
    %v292 = vpop.permute.xlu0 %291
    %vm293 = vcmask 64512
    %v295 = vsel %vm293, %v282, 0
    %v298 = vsel %vm293, %v292, 0
    %300 = vmatprep.subr.bf16.mxu0 0
    %301 = vmatpush1.bf16.xpose.msra.mxu0 0
    %302 = vmatprep.subr.bf16.mxu0 0
    %303 = vmatpush1.bf16.xpose.msra.mxu0 0
    %304 = vmatprep.subr.bf16.mxu0 0
    %305 = vmatpush1.bf16.xpose.msra.mxu0 0
    %306 = vmatprep.subr.bf16.mxu0 0
    %307 = vmatpush1.bf16.xpose.msra.mxu0 0
    %308 = vmatprep.subr.bf16.mxu0 0
    %309 = vmatpush1.bf16.xpose.msra.mxu0 0
    %310 = vmatprep.subr.bf16.mxu0 0
    %311 = vmatpush1.bf16.xpose.msra.mxu0 0
    %312 = vmatprep.subr.bf16.mxu0 0
    %313 = vmatpush1.bf16.xpose.msra.mxu0 0
    %314 = vmatprep.subr.bf16.mxu0 0
    %315 = vmatpush1.bf16.xpose.msra.mxu0 %v298
    %316 = vmatprep.subr.bf16.mxu0 0
    %317 = vmatpush2.bf16.xpose.msra.mxu0 0
    %318 = vmatprep.subr.bf16.mxu0 0
    %319 = vmatpush2.bf16.xpose.msra.mxu0 0
    %320 = vmatprep.subr.bf16.mxu0 0
    %321 = vmatpush2.bf16.xpose.msra.mxu0 0
    %322 = vmatprep.subr.bf16.mxu0 0
    %323 = vmatpush2.bf16.xpose.msra.mxu0 0
    %324 = vmatprep.subr.bf16.mxu0 0
    %325 = vmatpush2.bf16.xpose.msra.mxu0 0
    %326 = vmatprep.subr.bf16.mxu0 0
    %327 = vmatpush2.bf16.xpose.msra.mxu0 0
    %328 = vmatprep.subr.bf16.mxu0 0
    %329 = vmatpush2.bf16.xpose.msra.mxu0 0
    %330 = vmatprep.subr.bf16.mxu0 0
    %331 = vmatpush2.bf16.xpose.msra.mxu0 0
    %332 = vmatprep.mubr.bf16.mxu0 0
    %333 = vmatmul.mubr.bf16.gmra.mxu0 %v295
    %v334 = vpop.f32.mrf.mxu0
    %v335 = vadd.f32 0.0, %v334
    %v336 = vpop.f32.mrf.mxu0
    %v337 = vpop.f32.mrf.mxu0
    %v338 = vpop.f32.mrf.mxu0
    %339 = vdwg.mxu0
    %341 = vrot.lane.b32.xlu0 %v283, 96
    %v342 = vpop.permute.xlu0 %341
    %v344 = vsel %vm293, %v283, 0
    %v347 = vsel %vm293, %v342, 0
    %349 = vmatprep.subr.bf16.mxu0 0
    %350 = vmatpush1.bf16.xpose.msra.mxu0 0
    %351 = vmatprep.subr.bf16.mxu0 0
    %352 = vmatpush1.bf16.xpose.msra.mxu0 0
    %353 = vmatprep.subr.bf16.mxu0 0
    %354 = vmatpush1.bf16.xpose.msra.mxu0 0
    %355 = vmatprep.subr.bf16.mxu0 0
    %356 = vmatpush1.bf16.xpose.msra.mxu0 0
    %357 = vmatprep.subr.bf16.mxu0 0
    %358 = vmatpush1.bf16.xpose.msra.mxu0 0
    %359 = vmatprep.subr.bf16.mxu0 0
    %360 = vmatpush1.bf16.xpose.msra.mxu0 0
    %361 = vmatprep.subr.bf16.mxu0 0
    %362 = vmatpush1.bf16.xpose.msra.mxu0 0
    %363 = vmatprep.subr.bf16.mxu0 0
    %364 = vmatpush1.bf16.xpose.msra.mxu0 %v347
    %365 = vmatprep.subr.bf16.mxu0 0
    %366 = vmatpush2.bf16.xpose.msra.mxu0 0
    %367 = vmatprep.subr.bf16.mxu0 0
    %368 = vmatpush2.bf16.xpose.msra.mxu0 0
    %369 = vmatprep.subr.bf16.mxu0 0
    %370 = vmatpush2.bf16.xpose.msra.mxu0 0
    %371 = vmatprep.subr.bf16.mxu0 0
    %372 = vmatpush2.bf16.xpose.msra.mxu0 0
    %373 = vmatprep.subr.bf16.mxu0 0
    %374 = vmatpush2.bf16.xpose.msra.mxu0 0
    %375 = vmatprep.subr.bf16.mxu0 0
    %376 = vmatpush2.bf16.xpose.msra.mxu0 0
    %377 = vmatprep.subr.bf16.mxu0 0
    %378 = vmatpush2.bf16.xpose.msra.mxu0 0
    %379 = vmatprep.subr.bf16.mxu0 0
    %380 = vmatpush2.bf16.xpose.msra.mxu0 0
    %381 = vmatprep.mubr.bf16.mxu0 0
    %382 = vmatmul.mubr.bf16.gmra.mxu0 %v344
    %v383 = vpop.f32.mrf.mxu0
    %v384 = vadd.f32 0.0, %v383
    %v385 = vpop.f32.mrf.mxu0
    %v386 = vpop.f32.mrf.mxu0
    %v387 = vpop.f32.mrf.mxu0
    %388 = vdwg.mxu0
    %390 = vrot.lane.b32.xlu0 %v284, 96
    %v391 = vpop.permute.xlu0 %390
    %v393 = vsel %vm293, %v284, 0
    %v396 = vsel %vm293, %v391, 0
    %398 = vmatprep.subr.bf16.mxu0 0
    %399 = vmatpush1.bf16.xpose.msra.mxu0 0
    %400 = vmatprep.subr.bf16.mxu0 0
    %401 = vmatpush1.bf16.xpose.msra.mxu0 0
    %402 = vmatprep.subr.bf16.mxu0 0
    %403 = vmatpush1.bf16.xpose.msra.mxu0 0
    %404 = vmatprep.subr.bf16.mxu0 0
    %405 = vmatpush1.bf16.xpose.msra.mxu0 0
    %406 = vmatprep.subr.bf16.mxu0 0
    %407 = vmatpush1.bf16.xpose.msra.mxu0 0
    %408 = vmatprep.subr.bf16.mxu0 0
    %409 = vmatpush1.bf16.xpose.msra.mxu0 0
    %410 = vmatprep.subr.bf16.mxu0 0
    %411 = vmatpush1.bf16.xpose.msra.mxu0 0
    %412 = vmatprep.subr.bf16.mxu0 0
    %413 = vmatpush1.bf16.xpose.msra.mxu0 %v396
    %414 = vmatprep.subr.bf16.mxu0 0
    %415 = vmatpush2.bf16.xpose.msra.mxu0 0
    %416 = vmatprep.subr.bf16.mxu0 0
    %417 = vmatpush2.bf16.xpose.msra.mxu0 0
    %418 = vmatprep.subr.bf16.mxu0 0
    %419 = vmatpush2.bf16.xpose.msra.mxu0 0
    %420 = vmatprep.subr.bf16.mxu0 0
    %421 = vmatpush2.bf16.xpose.msra.mxu0 0
    %422 = vmatprep.subr.bf16.mxu0 0
    %423 = vmatpush2.bf16.xpose.msra.mxu0 0
    %424 = vmatprep.subr.bf16.mxu0 0
    %425 = vmatpush2.bf16.xpose.msra.mxu0 0
    %426 = vmatprep.subr.bf16.mxu0 0
    %427 = vmatpush2.bf16.xpose.msra.mxu0 0
    %428 = vmatprep.subr.bf16.mxu0 0
    %429 = vmatpush2.bf16.xpose.msra.mxu0 0
    %430 = vmatprep.mubr.bf16.mxu0 0
    %431 = vmatmul.mubr.bf16.gmra.mxu0 %v393
    %v432 = vpop.f32.mrf.mxu0
    %v433 = vadd.f32 0.0, %v432
    %v434 = vpop.f32.mrf.mxu0
    %v435 = vpop.f32.mrf.mxu0
    %v436 = vpop.f32.mrf.mxu0
    %437 = vdwg.mxu0
    %439 = vrot.lane.b32.xlu0 %v285, 96
    %v440 = vpop.permute.xlu0 %439
    %v442 = vsel %vm293, %v285, 0
    %v445 = vsel %vm293, %v440, 0
    %447 = vmatprep.subr.bf16.mxu0 0
    %448 = vmatpush1.bf16.xpose.msra.mxu0 0
    %449 = vmatprep.subr.bf16.mxu0 0
    %450 = vmatpush1.bf16.xpose.msra.mxu0 0
    %451 = vmatprep.subr.bf16.mxu0 0
    %452 = vmatpush1.bf16.xpose.msra.mxu0 0
    %453 = vmatprep.subr.bf16.mxu0 0
    %454 = vmatpush1.bf16.xpose.msra.mxu0 0
    %455 = vmatprep.subr.bf16.mxu0 0
    %456 = vmatpush1.bf16.xpose.msra.mxu0 0
    %457 = vmatprep.subr.bf16.mxu0 0
    %458 = vmatpush1.bf16.xpose.msra.mxu0 0
    %459 = vmatprep.subr.bf16.mxu0 0
    %460 = vmatpush1.bf16.xpose.msra.mxu0 0
    %461 = vmatprep.subr.bf16.mxu0 0
    %462 = vmatpush1.bf16.xpose.msra.mxu0 %v445
    %463 = vmatprep.subr.bf16.mxu0 0
    %464 = vmatpush2.bf16.xpose.msra.mxu0 0
    %465 = vmatprep.subr.bf16.mxu0 0
    %466 = vmatpush2.bf16.xpose.msra.mxu0 0
    %467 = vmatprep.subr.bf16.mxu0 0
    %468 = vmatpush2.bf16.xpose.msra.mxu0 0
    %469 = vmatprep.subr.bf16.mxu0 0
    %470 = vmatpush2.bf16.xpose.msra.mxu0 0
    %471 = vmatprep.subr.bf16.mxu0 0
    %472 = vmatpush2.bf16.xpose.msra.mxu0 0
    %473 = vmatprep.subr.bf16.mxu0 0
    %474 = vmatpush2.bf16.xpose.msra.mxu0 0
    %475 = vmatprep.subr.bf16.mxu0 0
    %476 = vmatpush2.bf16.xpose.msra.mxu0 0
    %477 = vmatprep.subr.bf16.mxu0 0
    %478 = vmatpush2.bf16.xpose.msra.mxu0 0
    %479 = vmatprep.mubr.bf16.mxu0 0
    %480 = vmatmul.mubr.bf16.gmra.mxu0 %v442
    %v481 = vpop.f32.mrf.mxu0
    %v482 = vadd.f32 0.0, %v481
    %v483 = vpop.f32.mrf.mxu0
    %v484 = vpop.f32.mrf.mxu0
    %v485 = vpop.f32.mrf.mxu0
    %486 = vdwg.mxu0
    %488 = vrot.lane.b32.xlu0 %v286, 96
    %v489 = vpop.permute.xlu0 %488
    %v491 = vsel %vm293, %v286, 0
    %v494 = vsel %vm293, %v489, 0
    %496 = vmatprep.subr.bf16.mxu0 0
    %497 = vmatpush1.bf16.xpose.msra.mxu0 0
    %498 = vmatprep.subr.bf16.mxu0 0
    %499 = vmatpush1.bf16.xpose.msra.mxu0 0
    %500 = vmatprep.subr.bf16.mxu0 0
    %501 = vmatpush1.bf16.xpose.msra.mxu0 0
    %502 = vmatprep.subr.bf16.mxu0 0
    %503 = vmatpush1.bf16.xpose.msra.mxu0 0
    %504 = vmatprep.subr.bf16.mxu0 0
    %505 = vmatpush1.bf16.xpose.msra.mxu0 0
    %506 = vmatprep.subr.bf16.mxu0 0
    %507 = vmatpush1.bf16.xpose.msra.mxu0 0
    %508 = vmatprep.subr.bf16.mxu0 0
    %509 = vmatpush1.bf16.xpose.msra.mxu0 0
    %510 = vmatprep.subr.bf16.mxu0 0
    %511 = vmatpush1.bf16.xpose.msra.mxu0 %v494
    %512 = vmatprep.subr.bf16.mxu0 0
    %513 = vmatpush2.bf16.xpose.msra.mxu0 0
    %514 = vmatprep.subr.bf16.mxu0 0
    %515 = vmatpush2.bf16.xpose.msra.mxu0 0
    %516 = vmatprep.subr.bf16.mxu0 0
    %517 = vmatpush2.bf16.xpose.msra.mxu0 0
    %518 = vmatprep.subr.bf16.mxu0 0
    %519 = vmatpush2.bf16.xpose.msra.mxu0 0
    %520 = vmatprep.subr.bf16.mxu0 0
    %521 = vmatpush2.bf16.xpose.msra.mxu0 0
    %522 = vmatprep.subr.bf16.mxu0 0
    %523 = vmatpush2.bf16.xpose.msra.mxu0 0
    %524 = vmatprep.subr.bf16.mxu0 0
    %525 = vmatpush2.bf16.xpose.msra.mxu0 0
    %526 = vmatprep.subr.bf16.mxu0 0
    %527 = vmatpush2.bf16.xpose.msra.mxu0 0
    %528 = vmatprep.mubr.bf16.mxu0 0
    %529 = vmatmul.mubr.bf16.gmra.mxu0 %v491
    %v530 = vpop.f32.mrf.mxu0
    %v531 = vadd.f32 0.0, %v530
    %v532 = vpop.f32.mrf.mxu0
    %v533 = vpop.f32.mrf.mxu0
    %v534 = vpop.f32.mrf.mxu0
    %535 = vdwg.mxu0
    %537 = vrot.lane.b32.xlu0 %v287, 96
    %v538 = vpop.permute.xlu0 %537
    %v540 = vsel %vm293, %v287, 0
    %v543 = vsel %vm293, %v538, 0
    %545 = vmatprep.subr.bf16.mxu0 0
    %546 = vmatpush1.bf16.xpose.msra.mxu0 0
    %547 = vmatprep.subr.bf16.mxu0 0
    %548 = vmatpush1.bf16.xpose.msra.mxu0 0
    %549 = vmatprep.subr.bf16.mxu0 0
    %550 = vmatpush1.bf16.xpose.msra.mxu0 0
    %551 = vmatprep.subr.bf16.mxu0 0
    %552 = vmatpush1.bf16.xpose.msra.mxu0 0
    %553 = vmatprep.subr.bf16.mxu0 0
    %554 = vmatpush1.bf16.xpose.msra.mxu0 0
    %555 = vmatprep.subr.bf16.mxu0 0
    %556 = vmatpush1.bf16.xpose.msra.mxu0 0
    %557 = vmatprep.subr.bf16.mxu0 0
    %558 = vmatpush1.bf16.xpose.msra.mxu0 0
    %559 = vmatprep.subr.bf16.mxu0 0
    %560 = vmatpush1.bf16.xpose.msra.mxu0 %v543
    %561 = vmatprep.subr.bf16.mxu0 0
    %562 = vmatpush2.bf16.xpose.msra.mxu0 0
    %563 = vmatprep.subr.bf16.mxu0 0
    %564 = vmatpush2.bf16.xpose.msra.mxu0 0
    %565 = vmatprep.subr.bf16.mxu0 0
    %566 = vmatpush2.bf16.xpose.msra.mxu0 0
    %567 = vmatprep.subr.bf16.mxu0 0
    %568 = vmatpush2.bf16.xpose.msra.mxu0 0
    %569 = vmatprep.subr.bf16.mxu0 0
    %570 = vmatpush2.bf16.xpose.msra.mxu0 0
    %571 = vmatprep.subr.bf16.mxu0 0
    %572 = vmatpush2.bf16.xpose.msra.mxu0 0
    %573 = vmatprep.subr.bf16.mxu0 0
    %574 = vmatpush2.bf16.xpose.msra.mxu0 0
    %575 = vmatprep.subr.bf16.mxu0 0
    %576 = vmatpush2.bf16.xpose.msra.mxu0 0
    %577 = vmatprep.mubr.bf16.mxu0 0
    %578 = vmatmul.mubr.bf16.gmra.mxu0 %v540
    %v579 = vpop.f32.mrf.mxu0
    %v580 = vadd.f32 0.0, %v579
    %v581 = vpop.f32.mrf.mxu0
    %v582 = vpop.f32.mrf.mxu0
    %v583 = vpop.f32.mrf.mxu0
    %584 = vdwg.mxu0
    %586 = vrot.lane.b32.xlu0 %v288, 96
    %v587 = vpop.permute.xlu0 %586
    %v589 = vsel %vm293, %v288, 0
    %v592 = vsel %vm293, %v587, 0
    %594 = vmatprep.subr.bf16.mxu0 0
    %595 = vmatpush1.bf16.xpose.msra.mxu0 0
    %596 = vmatprep.subr.bf16.mxu0 0
    %597 = vmatpush1.bf16.xpose.msra.mxu0 0
    %598 = vmatprep.subr.bf16.mxu0 0
    %599 = vmatpush1.bf16.xpose.msra.mxu0 0
    %600 = vmatprep.subr.bf16.mxu0 0
    %601 = vmatpush1.bf16.xpose.msra.mxu0 0
    %602 = vmatprep.subr.bf16.mxu0 0
    %603 = vmatpush1.bf16.xpose.msra.mxu0 0
    %604 = vmatprep.subr.bf16.mxu0 0
    %605 = vmatpush1.bf16.xpose.msra.mxu0 0
    %606 = vmatprep.subr.bf16.mxu0 0
    %607 = vmatpush1.bf16.xpose.msra.mxu0 0
    %608 = vmatprep.subr.bf16.mxu0 0
    %609 = vmatpush1.bf16.xpose.msra.mxu0 %v592
    %610 = vmatprep.subr.bf16.mxu0 0
    %611 = vmatpush2.bf16.xpose.msra.mxu0 0
    %612 = vmatprep.subr.bf16.mxu0 0
    %613 = vmatpush2.bf16.xpose.msra.mxu0 0
    %614 = vmatprep.subr.bf16.mxu0 0
    %615 = vmatpush2.bf16.xpose.msra.mxu0 0
    %616 = vmatprep.subr.bf16.mxu0 0
    %617 = vmatpush2.bf16.xpose.msra.mxu0 0
    %618 = vmatprep.subr.bf16.mxu0 0
    %619 = vmatpush2.bf16.xpose.msra.mxu0 0
    %620 = vmatprep.subr.bf16.mxu0 0
    %621 = vmatpush2.bf16.xpose.msra.mxu0 0
    %622 = vmatprep.subr.bf16.mxu0 0
    %623 = vmatpush2.bf16.xpose.msra.mxu0 0
    %624 = vmatprep.subr.bf16.mxu0 0
    %625 = vmatpush2.bf16.xpose.msra.mxu0 0
    %626 = vmatprep.mubr.bf16.mxu0 0
    %627 = vmatmul.mubr.bf16.gmra.mxu0 %v589
    %v628 = vpop.f32.mrf.mxu0
    %v629 = vadd.f32 0.0, %v628
    %v630 = vpop.f32.mrf.mxu0
    %v631 = vpop.f32.mrf.mxu0
    %v632 = vpop.f32.mrf.mxu0
    %633 = vdwg.mxu0
    %635 = vrot.lane.b32.xlu0 %v289, 96
    %v636 = vpop.permute.xlu0 %635
    %v638 = vsel %vm293, %v289, 0
    %v641 = vsel %vm293, %v636, 0
    %643 = vmatprep.subr.bf16.mxu0 0
    %644 = vmatpush1.bf16.xpose.msra.mxu0 0
    %645 = vmatprep.subr.bf16.mxu0 0
    %646 = vmatpush1.bf16.xpose.msra.mxu0 0
    %647 = vmatprep.subr.bf16.mxu0 0
    %648 = vmatpush1.bf16.xpose.msra.mxu0 0
    %649 = vmatprep.subr.bf16.mxu0 0
    %650 = vmatpush1.bf16.xpose.msra.mxu0 0
    %651 = vmatprep.subr.bf16.mxu0 0
    %652 = vmatpush1.bf16.xpose.msra.mxu0 0
    %653 = vmatprep.subr.bf16.mxu0 0
    %654 = vmatpush1.bf16.xpose.msra.mxu0 0
    %655 = vmatprep.subr.bf16.mxu0 0
    %656 = vmatpush1.bf16.xpose.msra.mxu0 0
    %657 = vmatprep.subr.bf16.mxu0 0
    %658 = vmatpush1.bf16.xpose.msra.mxu0 %v641
    %659 = vmatprep.subr.bf16.mxu0 0
    %660 = vmatpush2.bf16.xpose.msra.mxu0 0
    %661 = vmatprep.subr.bf16.mxu0 0
    %662 = vmatpush2.bf16.xpose.msra.mxu0 0
    %663 = vmatprep.subr.bf16.mxu0 0
    %664 = vmatpush2.bf16.xpose.msra.mxu0 0
    %665 = vmatprep.subr.bf16.mxu0 0
    %666 = vmatpush2.bf16.xpose.msra.mxu0 0
    %667 = vmatprep.subr.bf16.mxu0 0
    %668 = vmatpush2.bf16.xpose.msra.mxu0 0
    %669 = vmatprep.subr.bf16.mxu0 0
    %670 = vmatpush2.bf16.xpose.msra.mxu0 0
    %671 = vmatprep.subr.bf16.mxu0 0
    %672 = vmatpush2.bf16.xpose.msra.mxu0 0
    %673 = vmatprep.subr.bf16.mxu0 0
    %674 = vmatpush2.bf16.xpose.msra.mxu0 0
    %675 = vmatprep.mubr.bf16.mxu0 0
    %676 = vmatmul.mubr.bf16.gmra.mxu0 %v638
    %v677 = vpop.f32.mrf.mxu0
    %v678 = vadd.f32 0.0, %v677
    %v679 = vpop.f32.mrf.mxu0
    %v680 = vpop.f32.mrf.mxu0
    %v681 = vpop.f32.mrf.mxu0
    %682 = vdwg.mxu0
    %v683 = vmul.f32 %v335, 0.35355338
    %v684 = vmul.f32 %v384, 0.35355338
    %v685 = vmul.f32 %v433, 0.35355338
    %v686 = vmul.f32 %v482, 0.35355338
    %v687 = vmul.f32 %v531, 0.35355338
    %v688 = vmul.f32 %v580, 0.35355338
    %v689 = vmul.f32 %v629, 0.35355338
    %v690 = vmul.f32 %v678, 0.35355338
    %v691 = vadd.f32 %v683, %v154
    %v692 = vadd.f32 %v684, %v154
    %v693 = vadd.f32 %v685, %v154
    %v694 = vadd.f32 %v686, %v154
    %v695 = vadd.f32 %v687, %v154
    %v696 = vadd.f32 %v688, %v154
    %v697 = vadd.f32 %v689, %v154
    %v698 = vadd.f32 %v690, %v154
    %v699 = vsel %vm293, %v691, -inf
    %700 = vmax.xlane.f32.xlu0 %v699
    %v701 = vpop.xlane.xlu0 %700
    %v702 = vsel %vm293, %v692, -inf
    %703 = vmax.xlane.f32.xlu0 %v702
    %v704 = vpop.xlane.xlu0 %703
    %v705 = vsel %vm293, %v693, -inf
    %706 = vmax.xlane.f32.xlu0 %v705
    %v707 = vpop.xlane.xlu0 %706
    %v708 = vsel %vm293, %v694, -inf
    %709 = vmax.xlane.f32.xlu0 %v708
    %v710 = vpop.xlane.xlu0 %709
    %v711 = vsel %vm293, %v695, -inf
    %712 = vmax.xlane.f32.xlu0 %v711
    %v713 = vpop.xlane.xlu0 %712
    %v714 = vsel %vm293, %v696, -inf
    %715 = vmax.xlane.f32.xlu0 %v714
    %v716 = vpop.xlane.xlu0 %715
    %v717 = vsel %vm293, %v697, -inf
    %718 = vmax.xlane.f32.xlu0 %v717
    %v719 = vpop.xlane.xlu0 %718
    %v720 = vsel %vm293, %v698, -inf
    %721 = vmax.xlane.f32.xlu0 %v720
    %v722 = vpop.xlane.xlu0 %721
    %v723 = vsub.f32 %v691, %v701
    %v724 = vsub.f32 %v692, %v704
    %v725 = vsub.f32 %v693, %v707
    %v726 = vsub.f32 %v694, %v710
    %v727 = vsub.f32 %v695, %v713
    %v728 = vsub.f32 %v696, %v716
    %v729 = vsub.f32 %v697, %v719
    %v730 = vsub.f32 %v698, %v722
    %v731 = vmul.f32 %v723, 1.442695
    %v732 = vpow.pop %v731
    %v733 = vmul.f32 %v724, 1.442695
    %v734 = vpow.pop %v733
    %v735 = vmul.f32 %v725, 1.442695
    %v736 = vpow.pop %v735
    %v737 = vmul.f32 %v726, 1.442695
    %v738 = vpow.pop %v737
    %v739 = vmul.f32 %v727, 1.442695
    %v740 = vpow.pop %v739
    %v741 = vmul.f32 %v728, 1.442695
    %v742 = vpow.pop %v741
    %v743 = vmul.f32 %v729, 1.442695
    %v744 = vpow.pop %v743
    %v745 = vmul.f32 %v730, 1.442695
    %v746 = vpow.pop %v745
    %v747 = vsel %vm293, %v732, 0.0
    %748 = vadd.xlane.f32.xlu0 %v747
    %v749 = vpop.xlane.xlu0 %748
    %v750 = vsel %vm293, %v734, 0.0
    %751 = vadd.xlane.f32.xlu0 %v750
    %v752 = vpop.xlane.xlu0 %751
    %v753 = vsel %vm293, %v736, 0.0
    %754 = vadd.xlane.f32.xlu0 %v753
    %v755 = vpop.xlane.xlu0 %754
    %v756 = vsel %vm293, %v738, 0.0
    %757 = vadd.xlane.f32.xlu0 %v756
    %v758 = vpop.xlane.xlu0 %757
    %v759 = vsel %vm293, %v740, 0.0
    %760 = vadd.xlane.f32.xlu0 %v759
    %v761 = vpop.xlane.xlu0 %760
    %v762 = vsel %vm293, %v742, 0.0
    %763 = vadd.xlane.f32.xlu0 %v762
    %v764 = vpop.xlane.xlu0 %763
    %v765 = vsel %vm293, %v744, 0.0
    %766 = vadd.xlane.f32.xlu0 %v765
    %v767 = vpop.xlane.xlu0 %766
    %v768 = vsel %vm293, %v746, 0.0
    %769 = vadd.xlane.f32.xlu0 %v768
    %v770 = vpop.xlane.xlu0 %769
    %v771 = vrcp.pop %v749
    %v772 = vrcp.pop %v752
    %v773 = vrcp.pop %v755
    %v774 = vrcp.pop %v758
    %v775 = vrcp.pop %v761
    %v776 = vrcp.pop %v764
    %v777 = vrcp.pop %v767
    %v778 = vrcp.pop %v770
    %v779 = vmul.f32 %v732, %v771
    %v780 = vmul.f32 %v734, %v772
    %v781 = vmul.f32 %v736, %v773
    %v782 = vmul.f32 %v738, %v774
    %v783 = vmul.f32 %v740, %v775
    %v784 = vmul.f32 %v742, %v776
    %v785 = vmul.f32 %v744, %v777
    %v786 = vmul.f32 %v746, %v778
    %v787 = vpack.c.bf16 %v779, %v779
    %v788 = vpack.c.bf16 %v780, %v780
    %v789 = vpack.c.bf16 %v781, %v781
    %v790 = vpack.c.bf16 %v782, %v782
    %v791 = vpack.c.bf16 %v783, %v783
    %v792 = vpack.c.bf16 %v784, %v784
    %v793 = vpack.c.bf16 %v785, %v785
    %v794 = vpack.c.bf16 %v786, %v786
    %795 = vrot.lane.b32.xlu0 %v282, 64
    %v796 = vpop.permute.xlu0 %795
    %v798 = vsel %vm293, %v787, 0
    %vm800 = vcmask 1043456
    %v802 = vsel %vm800, %v796, 0
    %804 = vmatprep.subr.bf16.mxu0 0
    %805 = vmatpush1.bf16.msra.mxu0 0
    %806 = vmatprep.subr.bf16.mxu0 0
    %807 = vmatpush1.bf16.msra.mxu0 0
    %808 = vmatprep.subr.bf16.mxu0 0
    %809 = vmatpush1.bf16.msra.mxu0 0
    %810 = vmatprep.subr.bf16.mxu0 0
    %811 = vmatpush1.bf16.msra.mxu0 0
    %812 = vmatprep.subr.bf16.mxu0 0
    %813 = vmatpush1.bf16.msra.mxu0 0
    %814 = vmatprep.subr.bf16.mxu0 0
    %815 = vmatpush1.bf16.msra.mxu0 0
    %816 = vmatprep.subr.bf16.mxu0 0
    %817 = vmatpush1.bf16.msra.mxu0 0
    %818 = vmatprep.subr.bf16.mxu0 0
    %819 = vmatpush1.bf16.msra.mxu0 %v802
    %820 = vmatprep.subr.bf16.mxu0 0
    %821 = vmatpush2.bf16.msra.mxu0 0
    %822 = vmatprep.subr.bf16.mxu0 0
    %823 = vmatpush2.bf16.msra.mxu0 0
    %824 = vmatprep.subr.bf16.mxu0 0
    %825 = vmatpush2.bf16.msra.mxu0 0
    %826 = vmatprep.subr.bf16.mxu0 0
    %827 = vmatpush2.bf16.msra.mxu0 0
    %828 = vmatprep.subr.bf16.mxu0 0
    %829 = vmatpush2.bf16.msra.mxu0 0
    %830 = vmatprep.subr.bf16.mxu0 0
    %831 = vmatpush2.bf16.msra.mxu0 0
    %832 = vmatprep.subr.bf16.mxu0 0
    %833 = vmatpush2.bf16.msra.mxu0 0
    %834 = vmatprep.subr.bf16.mxu0 0
    %835 = vmatpush2.bf16.msra.mxu0 0
    %836 = vmatprep.mubr.bf16.mxu0 0
    %837 = vmatmul.mubr.bf16.gmra.mxu0 %v798
    %v838 = vpop.f32.mrf.mxu0
    %v839 = vadd.f32 0.0, %v838
    %v840 = vpop.f32.mrf.mxu0
    %v841 = vpop.f32.mrf.mxu0
    %v842 = vpop.f32.mrf.mxu0
    %843 = vdwg.mxu0
    %844 = vrot.lane.b32.xlu0 %v283, 64
    %v845 = vpop.permute.xlu0 %844
    %v847 = vsel %vm293, %v788, 0
    %v850 = vsel %vm800, %v845, 0
    %852 = vmatprep.subr.bf16.mxu0 0
    %853 = vmatpush1.bf16.msra.mxu0 0
    %854 = vmatprep.subr.bf16.mxu0 0
    %855 = vmatpush1.bf16.msra.mxu0 0
    %856 = vmatprep.subr.bf16.mxu0 0
    %857 = vmatpush1.bf16.msra.mxu0 0
    %858 = vmatprep.subr.bf16.mxu0 0
    %859 = vmatpush1.bf16.msra.mxu0 0
    %860 = vmatprep.subr.bf16.mxu0 0
    %861 = vmatpush1.bf16.msra.mxu0 0
    %862 = vmatprep.subr.bf16.mxu0 0
    %863 = vmatpush1.bf16.msra.mxu0 0
    %864 = vmatprep.subr.bf16.mxu0 0
    %865 = vmatpush1.bf16.msra.mxu0 0
    %866 = vmatprep.subr.bf16.mxu0 0
    %867 = vmatpush1.bf16.msra.mxu0 %v850
    %868 = vmatprep.subr.bf16.mxu0 0
    %869 = vmatpush2.bf16.msra.mxu0 0
    %870 = vmatprep.subr.bf16.mxu0 0
    %871 = vmatpush2.bf16.msra.mxu0 0
    %872 = vmatprep.subr.bf16.mxu0 0
    %873 = vmatpush2.bf16.msra.mxu0 0
    %874 = vmatprep.subr.bf16.mxu0 0
    %875 = vmatpush2.bf16.msra.mxu0 0
    %876 = vmatprep.subr.bf16.mxu0 0
    %877 = vmatpush2.bf16.msra.mxu0 0
    %878 = vmatprep.subr.bf16.mxu0 0
    %879 = vmatpush2.bf16.msra.mxu0 0
    %880 = vmatprep.subr.bf16.mxu0 0
    %881 = vmatpush2.bf16.msra.mxu0 0
    %882 = vmatprep.subr.bf16.mxu0 0
    %883 = vmatpush2.bf16.msra.mxu0 0
    %884 = vmatprep.mubr.bf16.mxu0 0
    %885 = vmatmul.mubr.bf16.gmra.mxu0 %v847
    %v886 = vpop.f32.mrf.mxu0
    %v887 = vadd.f32 0.0, %v886
    %v888 = vpop.f32.mrf.mxu0
    %v889 = vpop.f32.mrf.mxu0
    %v890 = vpop.f32.mrf.mxu0
    %891 = vdwg.mxu0
    %892 = vrot.lane.b32.xlu0 %v284, 64
    %v893 = vpop.permute.xlu0 %892
    %v895 = vsel %vm293, %v789, 0
    %v898 = vsel %vm800, %v893, 0
    %900 = vmatprep.subr.bf16.mxu0 0
    %901 = vmatpush1.bf16.msra.mxu0 0
    %902 = vmatprep.subr.bf16.mxu0 0
    %903 = vmatpush1.bf16.msra.mxu0 0
    %904 = vmatprep.subr.bf16.mxu0 0
    %905 = vmatpush1.bf16.msra.mxu0 0
    %906 = vmatprep.subr.bf16.mxu0 0
    %907 = vmatpush1.bf16.msra.mxu0 0
    %908 = vmatprep.subr.bf16.mxu0 0
    %909 = vmatpush1.bf16.msra.mxu0 0
    %910 = vmatprep.subr.bf16.mxu0 0
    %911 = vmatpush1.bf16.msra.mxu0 0
    %912 = vmatprep.subr.bf16.mxu0 0
    %913 = vmatpush1.bf16.msra.mxu0 0
    %914 = vmatprep.subr.bf16.mxu0 0
    %915 = vmatpush1.bf16.msra.mxu0 %v898
    %916 = vmatprep.subr.bf16.mxu0 0
    %917 = vmatpush2.bf16.msra.mxu0 0
    %918 = vmatprep.subr.bf16.mxu0 0
    %919 = vmatpush2.bf16.msra.mxu0 0
    %920 = vmatprep.subr.bf16.mxu0 0
    %921 = vmatpush2.bf16.msra.mxu0 0
    %922 = vmatprep.subr.bf16.mxu0 0
    %923 = vmatpush2.bf16.msra.mxu0 0
    %924 = vmatprep.subr.bf16.mxu0 0
    %925 = vmatpush2.bf16.msra.mxu0 0
    %926 = vmatprep.subr.bf16.mxu0 0
    %927 = vmatpush2.bf16.msra.mxu0 0
    %928 = vmatprep.subr.bf16.mxu0 0
    %929 = vmatpush2.bf16.msra.mxu0 0
    %930 = vmatprep.subr.bf16.mxu0 0
    %931 = vmatpush2.bf16.msra.mxu0 0
    %932 = vmatprep.mubr.bf16.mxu0 0
    %933 = vmatmul.mubr.bf16.gmra.mxu0 %v895
    %v934 = vpop.f32.mrf.mxu0
    %v935 = vadd.f32 0.0, %v934
    %v936 = vpop.f32.mrf.mxu0
    %v937 = vpop.f32.mrf.mxu0
    %v938 = vpop.f32.mrf.mxu0
    %939 = vdwg.mxu0
    %940 = vrot.lane.b32.xlu0 %v285, 64
    %v941 = vpop.permute.xlu0 %940
    %v943 = vsel %vm293, %v790, 0
    %v946 = vsel %vm800, %v941, 0
    %948 = vmatprep.subr.bf16.mxu0 0
    %949 = vmatpush1.bf16.msra.mxu0 0
    %950 = vmatprep.subr.bf16.mxu0 0
    %951 = vmatpush1.bf16.msra.mxu0 0
    %952 = vmatprep.subr.bf16.mxu0 0
    %953 = vmatpush1.bf16.msra.mxu0 0
    %954 = vmatprep.subr.bf16.mxu0 0
    %955 = vmatpush1.bf16.msra.mxu0 0
    %956 = vmatprep.subr.bf16.mxu0 0
    %957 = vmatpush1.bf16.msra.mxu0 0
    %958 = vmatprep.subr.bf16.mxu0 0
    %959 = vmatpush1.bf16.msra.mxu0 0
    %960 = vmatprep.subr.bf16.mxu0 0
    %961 = vmatpush1.bf16.msra.mxu0 0
    %962 = vmatprep.subr.bf16.mxu0 0
    %963 = vmatpush1.bf16.msra.mxu0 %v946
    %964 = vmatprep.subr.bf16.mxu0 0
    %965 = vmatpush2.bf16.msra.mxu0 0
    %966 = vmatprep.subr.bf16.mxu0 0
    %967 = vmatpush2.bf16.msra.mxu0 0
    %968 = vmatprep.subr.bf16.mxu0 0
    %969 = vmatpush2.bf16.msra.mxu0 0
    %970 = vmatprep.subr.bf16.mxu0 0
    %971 = vmatpush2.bf16.msra.mxu0 0
    %972 = vmatprep.subr.bf16.mxu0 0
    %973 = vmatpush2.bf16.msra.mxu0 0
    %974 = vmatprep.subr.bf16.mxu0 0
    %975 = vmatpush2.bf16.msra.mxu0 0
    %976 = vmatprep.subr.bf16.mxu0 0
    %977 = vmatpush2.bf16.msra.mxu0 0
    %978 = vmatprep.subr.bf16.mxu0 0
    %979 = vmatpush2.bf16.msra.mxu0 0
    %980 = vmatprep.mubr.bf16.mxu0 0
    %981 = vmatmul.mubr.bf16.gmra.mxu0 %v943
    %v982 = vpop.f32.mrf.mxu0
    %v983 = vadd.f32 0.0, %v982
    %v984 = vpop.f32.mrf.mxu0
    %v985 = vpop.f32.mrf.mxu0
    %v986 = vpop.f32.mrf.mxu0
    %987 = vdwg.mxu0
    %988 = vrot.lane.b32.xlu0 %v286, 64
    %v989 = vpop.permute.xlu0 %988
    %v991 = vsel %vm293, %v791, 0
    %v994 = vsel %vm800, %v989, 0
    %996 = vmatprep.subr.bf16.mxu0 0
    %997 = vmatpush1.bf16.msra.mxu0 0
    %998 = vmatprep.subr.bf16.mxu0 0
    %999 = vmatpush1.bf16.msra.mxu0 0
    %1000 = vmatprep.subr.bf16.mxu0 0
    %1001 = vmatpush1.bf16.msra.mxu0 0
    %1002 = vmatprep.subr.bf16.mxu0 0
    %1003 = vmatpush1.bf16.msra.mxu0 0
    %1004 = vmatprep.subr.bf16.mxu0 0
    %1005 = vmatpush1.bf16.msra.mxu0 0
    %1006 = vmatprep.subr.bf16.mxu0 0
    %1007 = vmatpush1.bf16.msra.mxu0 0
    %1008 = vmatprep.subr.bf16.mxu0 0
    %1009 = vmatpush1.bf16.msra.mxu0 0
    %1010 = vmatprep.subr.bf16.mxu0 0
    %1011 = vmatpush1.bf16.msra.mxu0 %v994
    %1012 = vmatprep.subr.bf16.mxu0 0
    %1013 = vmatpush2.bf16.msra.mxu0 0
    %1014 = vmatprep.subr.bf16.mxu0 0
    %1015 = vmatpush2.bf16.msra.mxu0 0
    %1016 = vmatprep.subr.bf16.mxu0 0
    %1017 = vmatpush2.bf16.msra.mxu0 0
    %1018 = vmatprep.subr.bf16.mxu0 0
    %1019 = vmatpush2.bf16.msra.mxu0 0
    %1020 = vmatprep.subr.bf16.mxu0 0
    %1021 = vmatpush2.bf16.msra.mxu0 0
    %1022 = vmatprep.subr.bf16.mxu0 0
    %1023 = vmatpush2.bf16.msra.mxu0 0
    %1024 = vmatprep.subr.bf16.mxu0 0
    %1025 = vmatpush2.bf16.msra.mxu0 0
    %1026 = vmatprep.subr.bf16.mxu0 0
    %1027 = vmatpush2.bf16.msra.mxu0 0
    %1028 = vmatprep.mubr.bf16.mxu0 0
    %1029 = vmatmul.mubr.bf16.gmra.mxu0 %v991
    %v1030 = vpop.f32.mrf.mxu0
    %v1031 = vadd.f32 0.0, %v1030
    %v1032 = vpop.f32.mrf.mxu0
    %v1033 = vpop.f32.mrf.mxu0
    %v1034 = vpop.f32.mrf.mxu0
    %1035 = vdwg.mxu0
    %1036 = vrot.lane.b32.xlu0 %v287, 64
    %v1037 = vpop.permute.xlu0 %1036
    %v1039 = vsel %vm293, %v792, 0
    %v1042 = vsel %vm800, %v1037, 0
    %1044 = vmatprep.subr.bf16.mxu0 0
    %1045 = vmatpush1.bf16.msra.mxu0 0
    %1046 = vmatprep.subr.bf16.mxu0 0
    %1047 = vmatpush1.bf16.msra.mxu0 0
    %1048 = vmatprep.subr.bf16.mxu0 0
    %1049 = vmatpush1.bf16.msra.mxu0 0
    %1050 = vmatprep.subr.bf16.mxu0 0
    %1051 = vmatpush1.bf16.msra.mxu0 0
    %1052 = vmatprep.subr.bf16.mxu0 0
    %1053 = vmatpush1.bf16.msra.mxu0 0
    %1054 = vmatprep.subr.bf16.mxu0 0
    %1055 = vmatpush1.bf16.msra.mxu0 0
    %1056 = vmatprep.subr.bf16.mxu0 0
    %1057 = vmatpush1.bf16.msra.mxu0 0
    %1058 = vmatprep.subr.bf16.mxu0 0
    %1059 = vmatpush1.bf16.msra.mxu0 %v1042
    %1060 = vmatprep.subr.bf16.mxu0 0
    %1061 = vmatpush2.bf16.msra.mxu0 0
    %1062 = vmatprep.subr.bf16.mxu0 0
    %1063 = vmatpush2.bf16.msra.mxu0 0
    %1064 = vmatprep.subr.bf16.mxu0 0
    %1065 = vmatpush2.bf16.msra.mxu0 0
    %1066 = vmatprep.subr.bf16.mxu0 0
    %1067 = vmatpush2.bf16.msra.mxu0 0
    %1068 = vmatprep.subr.bf16.mxu0 0
    %1069 = vmatpush2.bf16.msra.mxu0 0
    %1070 = vmatprep.subr.bf16.mxu0 0
    %1071 = vmatpush2.bf16.msra.mxu0 0
    %1072 = vmatprep.subr.bf16.mxu0 0
    %1073 = vmatpush2.bf16.msra.mxu0 0
    %1074 = vmatprep.subr.bf16.mxu0 0
    %1075 = vmatpush2.bf16.msra.mxu0 0
    %1076 = vmatprep.mubr.bf16.mxu0 0
    %1077 = vmatmul.mubr.bf16.gmra.mxu0 %v1039
    %v1078 = vpop.f32.mrf.mxu0
    %v1079 = vadd.f32 0.0, %v1078
    %v1080 = vpop.f32.mrf.mxu0
    %v1081 = vpop.f32.mrf.mxu0
    %v1082 = vpop.f32.mrf.mxu0
    %1083 = vdwg.mxu0
    %1084 = vrot.lane.b32.xlu0 %v288, 64
    %v1085 = vpop.permute.xlu0 %1084
    %v1087 = vsel %vm293, %v793, 0
    %v1090 = vsel %vm800, %v1085, 0
    %1092 = vmatprep.subr.bf16.mxu0 0
    %1093 = vmatpush1.bf16.msra.mxu0 0
    %1094 = vmatprep.subr.bf16.mxu0 0
    %1095 = vmatpush1.bf16.msra.mxu0 0
    %1096 = vmatprep.subr.bf16.mxu0 0
    %1097 = vmatpush1.bf16.msra.mxu0 0
    %1098 = vmatprep.subr.bf16.mxu0 0
    %1099 = vmatpush1.bf16.msra.mxu0 0
    %1100 = vmatprep.subr.bf16.mxu0 0
    %1101 = vmatpush1.bf16.msra.mxu0 0
    %1102 = vmatprep.subr.bf16.mxu0 0
    %1103 = vmatpush1.bf16.msra.mxu0 0
    %1104 = vmatprep.subr.bf16.mxu0 0
    %1105 = vmatpush1.bf16.msra.mxu0 0
    %1106 = vmatprep.subr.bf16.mxu0 0
    %1107 = vmatpush1.bf16.msra.mxu0 %v1090
    %1108 = vmatprep.subr.bf16.mxu0 0
    %1109 = vmatpush2.bf16.msra.mxu0 0
    %1110 = vmatprep.subr.bf16.mxu0 0
    %1111 = vmatpush2.bf16.msra.mxu0 0
    %1112 = vmatprep.subr.bf16.mxu0 0
    %1113 = vmatpush2.bf16.msra.mxu0 0
    %1114 = vmatprep.subr.bf16.mxu0 0
    %1115 = vmatpush2.bf16.msra.mxu0 0
    %1116 = vmatprep.subr.bf16.mxu0 0
    %1117 = vmatpush2.bf16.msra.mxu0 0
    %1118 = vmatprep.subr.bf16.mxu0 0
    %1119 = vmatpush2.bf16.msra.mxu0 0
    %1120 = vmatprep.subr.bf16.mxu0 0
    %1121 = vmatpush2.bf16.msra.mxu0 0
    %1122 = vmatprep.subr.bf16.mxu0 0
    %1123 = vmatpush2.bf16.msra.mxu0 0
    %1124 = vmatprep.mubr.bf16.mxu0 0
    %1125 = vmatmul.mubr.bf16.gmra.mxu0 %v1087
    %v1126 = vpop.f32.mrf.mxu0
    %v1127 = vadd.f32 0.0, %v1126
    %v1128 = vpop.f32.mrf.mxu0
    %v1129 = vpop.f32.mrf.mxu0
    %v1130 = vpop.f32.mrf.mxu0
    %1131 = vdwg.mxu0
    %1132 = vrot.lane.b32.xlu0 %v289, 64
    %v1133 = vpop.permute.xlu0 %1132
    %v1135 = vsel %vm293, %v794, 0
    %v1138 = vsel %vm800, %v1133, 0
    %1140 = vmatprep.subr.bf16.mxu0 0
    %1141 = vmatpush1.bf16.msra.mxu0 0
    %1142 = vmatprep.subr.bf16.mxu0 0
    %1143 = vmatpush1.bf16.msra.mxu0 0
    %1144 = vmatprep.subr.bf16.mxu0 0
    %1145 = vmatpush1.bf16.msra.mxu0 0
    %1146 = vmatprep.subr.bf16.mxu0 0
    %1147 = vmatpush1.bf16.msra.mxu0 0
    %1148 = vmatprep.subr.bf16.mxu0 0
    %1149 = vmatpush1.bf16.msra.mxu0 0
    %1150 = vmatprep.subr.bf16.mxu0 0
    %1151 = vmatpush1.bf16.msra.mxu0 0
    %1152 = vmatprep.subr.bf16.mxu0 0
    %1153 = vmatpush1.bf16.msra.mxu0 0
    %1154 = vmatprep.subr.bf16.mxu0 0
    %1155 = vmatpush1.bf16.msra.mxu0 %v1138
    %1156 = vmatprep.subr.bf16.mxu0 0
    %1157 = vmatpush2.bf16.msra.mxu0 0
    %1158 = vmatprep.subr.bf16.mxu0 0
    %1159 = vmatpush2.bf16.msra.mxu0 0
    %1160 = vmatprep.subr.bf16.mxu0 0
    %1161 = vmatpush2.bf16.msra.mxu0 0
    %1162 = vmatprep.subr.bf16.mxu0 0
    %1163 = vmatpush2.bf16.msra.mxu0 0
    %1164 = vmatprep.subr.bf16.mxu0 0
    %1165 = vmatpush2.bf16.msra.mxu0 0
    %1166 = vmatprep.subr.bf16.mxu0 0
    %1167 = vmatpush2.bf16.msra.mxu0 0
    %1168 = vmatprep.subr.bf16.mxu0 0
    %1169 = vmatpush2.bf16.msra.mxu0 0
    %1170 = vmatprep.subr.bf16.mxu0 0
    %1171 = vmatpush2.bf16.msra.mxu0 0
    %1172 = vmatprep.mubr.bf16.mxu0 0
    %1173 = vmatmul.mubr.bf16.gmra.mxu0 %v1135
    %v1174 = vpop.f32.mrf.mxu0
    %v1175 = vadd.f32 0.0, %v1174
    %v1176 = vpop.f32.mrf.mxu0
    %v1177 = vpop.f32.mrf.mxu0
    %v1178 = vpop.f32.mrf.mxu0
    %1179 = vdwg.mxu0
    %1181 = vrot.lane.b32.xlu0 %v887, 8
    %v1182 = vpop.permute.xlu0 %1181
    %1185 = vrot.lane.b32.xlu0 %v935, 16
    %v1186 = vpop.permute.xlu0 %1185
    %1189 = vrot.lane.b32.xlu0 %v983, 24
    %v1190 = vpop.permute.xlu0 %1189
    %v1192 = vsel %vm293, %v839, %v1182
    %vm1193 = vcmask 130048
    %v1194 = vsel %vm1193, %v1192, %v1186
    %vm1195 = vcmask 195584
    %v1196 = vsel %vm1195, %v1194, %v1190
    %1198 = vrot.lane.b32.xlu0 %v1079, 8
    %v1199 = vpop.permute.xlu0 %1198
    %1202 = vrot.lane.b32.xlu0 %v1127, 16
    %v1203 = vpop.permute.xlu0 %1202
    %1206 = vrot.lane.b32.xlu0 %v1175, 24
    %v1207 = vpop.permute.xlu0 %1206
    %v1209 = vsel %vm293, %v1031, %v1199
    %v1210 = vsel %vm1193, %v1209, %v1203
    %v1211 = vsel %vm1195, %v1210, %v1207
    %v1212 = vpack.c.bf16 %v1211, %v1196
    %v1213 = vld [vmem:[%s2] sm:$0xf]
    %v1214 = vld [vmem:[%s2 + $0x4] sm:$0xf]
    %v1215 = vld [vmem:[%s2 + $0x8] sm:$0xf]
    %v1216 = vld [vmem:[%s2 + $0xc] sm:$0xf]
    %v1217 = vld [vmem:[#allocation5] sm:$0x1]
    %v1219 = vlaneseq
    %v1220 = vshrl.u32 %v1219, 7
    %v1221 = vsub.s32 0, %v1220
    %v1222 = vrot.slane %v1217, %v1221
    %v1228 = vunpack.c.l.b16 %v1213
    %v1229 = vunpack.c.l.b16 %v1214
    %v1230 = vunpack.c.l.b16 %v1215
    %v1231 = vunpack.c.l.b16 %v1216
    %v1232 = vpack.c.b16 %v1229, %v1228
    %v1233 = vpack.c.b16 %v1231, %v1230
    %v1237 = vsel %vm157, %v1212, 0
    %1239 = vmatprep.subr.bf16.mxu0 0
    %1240 = vmatpush1.bf16.msra.mxu0 0
    %1241 = vmatprep.subr.bf16.mxu0 0
    %1242 = vmatpush1.bf16.msra.mxu0 0
    %1243 = vmatprep.subr.bf16.mxu0 0
    %1244 = vmatpush1.bf16.msra.mxu0 0
    %1245 = vmatprep.subr.bf16.mxu0 0
    %1246 = vmatpush1.bf16.msra.mxu0 0
    %1247 = vmatprep.subr.bf16.mxu0 0
    %1248 = vmatpush1.bf16.msra.mxu0 0
    %1249 = vmatprep.subr.bf16.mxu0 0
    %1250 = vmatpush1.bf16.msra.mxu0 0
    %1251 = vmatprep.subr.bf16.mxu0 0
    %1252 = vmatpush1.bf16.msra.mxu0 %v1233
    %1253 = vmatprep.subr.bf16.mxu0 0
    %1254 = vmatpush1.bf16.msra.mxu0 %v1232
    %1255 = vmatprep.subr.bf16.mxu0 0
    %1256 = vmatpush2.bf16.msra.mxu0 0
    %1257 = vmatprep.subr.bf16.mxu0 0
    %1258 = vmatpush2.bf16.msra.mxu0 0
    %1259 = vmatprep.subr.bf16.mxu0 0
    %1260 = vmatpush2.bf16.msra.mxu0 0
    %1261 = vmatprep.subr.bf16.mxu0 0
    %1262 = vmatpush2.bf16.msra.mxu0 0
    %1263 = vmatprep.subr.bf16.mxu0 0
    %1264 = vmatpush2.bf16.msra.mxu0 0
    %1265 = vmatprep.subr.bf16.mxu0 0
    %1266 = vmatpush2.bf16.msra.mxu0 0
    %1267 = vmatprep.subr.bf16.mxu0 0
    %1268 = vmatpush2.bf16.msra.mxu0 0
    %1269 = vmatprep.subr.bf16.mxu0 0
    %1270 = vmatpush2.bf16.msra.mxu0 0
    %1271 = vmatprep.mubr.bf16.mxu0 0
    %1272 = vmatmul.mubr.bf16.gmra.mxu0 %v1237
    %v1273 = vpop.f32.mrf.mxu0
    %v1274 = vadd.f32 %v1222, %v1273
    %v1275 = vpop.f32.mrf.mxu0
    %v1276 = vpop.f32.mrf.mxu0
    %v1277 = vadd.f32 %v1222, %v1276
    %v1278 = vpop.f32.mrf.mxu0
    %1279 = vdwg.mxu0
    %v1280 = vadd.f32 %v147, %v1274
    %v1281 = vadd.f32 %v148, %v1277
    %v1282 = vld [vmem:[#allocation10] sm:$0x1]
    %v1283 = vld [vmem:[#allocation11] sm:$0x1]
    %v1284 = vsel %vm157, %v1280, 0.0
    %1285 = vadd.xlane.f32.xlu0 %v1284
    %v1286 = vpop.xlane.xlu0 %1285
    %v1287 = vsel %vm157, %v1281, 0.0
    %1288 = vadd.xlane.f32.xlu0 %v1287
    %v1289 = vpop.xlane.xlu0 %1288
    %v1290 = vmul.f32 %v1286, %v164
    %v1291 = vmul.f32 %v1289, %v164
    %v1292 = vsub.f32 %v1280, %v1290
    %v1293 = vsub.f32 %v1281, %v1291
    %v1294 = vmul.f32 %v1292, %v1292
    %v1295 = vmul.f32 %v1293, %v1293
    %v1296 = vsel %vm157, %v1294, 0.0
    %1297 = vadd.xlane.f32.xlu0 %v1296
    %v1298 = vpop.xlane.xlu0 %1297
    %v1299 = vsel %vm157, %v1295, 0.0
    %1300 = vadd.xlane.f32.xlu0 %v1299
    %v1301 = vpop.xlane.xlu0 %1300
    %v1302 = vmul.f32 %v1298, %v164
    %v1303 = vmul.f32 %v1301, %v164
    %v1304 = vadd.f32 %v1302, 1e-05
    %v1305 = vadd.f32 %v1303, 1e-05
    %v1306 = vrsqrt.pop %v1304
    %v1307 = vrsqrt.pop %v1305
    %v1308 = vmul.f32 %v1292, %v1306
    %v1309 = vmul.f32 %v1293, %v1307
    %v1311 = vlaneseq
    %v1312 = vshrl.u32 %v1311, 7
    %v1313 = vsub.s32 0, %v1312
    %v1314 = vrot.slane %v1282, %v1313
    %v1316 = vmul.f32 %v1308, %v1314
    %v1317 = vmul.f32 %v1309, %v1314
    %v1319 = vlaneseq
    %v1320 = vshrl.u32 %v1319, 7
    %v1321 = vsub.s32 0, %v1320
    %v1322 = vrot.slane %v1283, %v1321
    %v1324 = vadd.f32 %v1316, %v1322
    %v1325 = vadd.f32 %v1317, %v1322
    %v1326 = vpack.c.bf16 %v1325, %v1324
    %v1327 = vld [vmem:[%s8] sm:$0xf]
    %v1328 = vld [vmem:[%s8 + $0x4] sm:$0xf]
    %v1329 = vld [vmem:[%s8 + $0x8] sm:$0xf]
    %v1330 = vld [vmem:[%s8 + $0xc] sm:$0xf]
    %v1331 = vld [vmem:[#allocation13] sm:$0x1]
    %v1333 = vlaneseq
    %v1334 = vshrl.u32 %v1333, 7
    %v1335 = vsub.s32 0, %v1334
    %v1336 = vrot.slane %v1331, %v1335
    %v1342 = vunpack.c.l.b16 %v1327
    %v1343 = vunpack.c.l.b16 %v1328
    %v1344 = vunpack.c.l.b16 %v1329
    %v1345 = vunpack.c.l.b16 %v1330
    %v1346 = vpack.c.b16 %v1343, %v1342
    %v1347 = vpack.c.b16 %v1345, %v1344
    %v1351 = vsel %vm157, %v1326, 0
    %1353 = vmatprep.subr.bf16.mxu0 0
    %1354 = vmatpush1.bf16.msra.mxu0 0
    %1355 = vmatprep.subr.bf16.mxu0 0
    %1356 = vmatpush1.bf16.msra.mxu0 0
    %1357 = vmatprep.subr.bf16.mxu0 0
    %1358 = vmatpush1.bf16.msra.mxu0 0
    %1359 = vmatprep.subr.bf16.mxu0 0
    %1360 = vmatpush1.bf16.msra.mxu0 0
    %1361 = vmatprep.subr.bf16.mxu0 0
    %1362 = vmatpush1.bf16.msra.mxu0 0
    %1363 = vmatprep.subr.bf16.mxu0 0
    %1364 = vmatpush1.bf16.msra.mxu0 0
    %1365 = vmatprep.subr.bf16.mxu0 0
    %1366 = vmatpush1.bf16.msra.mxu0 %v1347
    %1367 = vmatprep.subr.bf16.mxu0 0
    %1368 = vmatpush1.bf16.msra.mxu0 %v1346
    %1369 = vmatprep.subr.bf16.mxu0 0
    %1370 = vmatpush2.bf16.msra.mxu0 0
    %1371 = vmatprep.subr.bf16.mxu0 0
    %1372 = vmatpush2.bf16.msra.mxu0 0
    %1373 = vmatprep.subr.bf16.mxu0 0
    %1374 = vmatpush2.bf16.msra.mxu0 0
    %1375 = vmatprep.subr.bf16.mxu0 0
    %1376 = vmatpush2.bf16.msra.mxu0 0
    %1377 = vmatprep.subr.bf16.mxu0 0
    %1378 = vmatpush2.bf16.msra.mxu0 0
    %1379 = vmatprep.subr.bf16.mxu0 0
    %1380 = vmatpush2.bf16.msra.mxu0 0
    %1381 = vmatprep.subr.bf16.mxu0 0
    %1382 = vmatpush2.bf16.msra.mxu0 0
    %1383 = vmatprep.subr.bf16.mxu0 0
    %1384 = vmatpush2.bf16.msra.mxu0 0
    %1385 = vmatprep.mubr.bf16.mxu0 0
    %1386 = vmatmul.mubr.bf16.gmra.mxu0 %v1351
    %v1387 = vpop.f32.mrf.mxu0
    %v1388 = vadd.f32 %v1336, %v1387
    %v1389 = vpop.f32.mrf.mxu0
    %v1390 = vpop.f32.mrf.mxu0
    %v1391 = vadd.f32 %v1336, %v1390
    %v1392 = vpop.f32.mrf.mxu0
    %1393 = vdwg.mxu0
    %v1394 = vxor.u32 %v1388, 2147483648
    %v1395 = vxor.u32 %v1391, 2147483648
    %v1396 = vmul.f32 %v1394, 1.442695
    %v1397 = vpow.pop %v1396
    %v1398 = vmul.f32 %v1395, 1.442695
    %v1399 = vpow.pop %v1398
    %v1400 = vadd.f32 %v1397, 1.0
    %v1401 = vadd.f32 %v1399, 1.0
    %v1402 = vrcp.pop %v1400
    %v1403 = vmul.f32 1.0, %v1402
    %v1404 = vrcp.pop %v1401
    %v1405 = vmul.f32 1.0, %v1404
    %v1406 = vmul.f32 %v1388, %v1403
    %v1407 = vmul.f32 %v1391, %v1405
    %v1408 = vpack.c.bf16 %v1407, %v1406
    %v1409 = vld [vmem:[%s10] sm:$0xf]
    %v1410 = vld [vmem:[%s10 + $0x4] sm:$0xf]
    %v1411 = vld [vmem:[%s10 + $0x8] sm:$0xf]
    %v1412 = vld [vmem:[%s10 + $0xc] sm:$0xf]
    %v1413 = vld [vmem:[%s10 + $0x10] sm:$0xf]
    %v1414 = vld [vmem:[%s10 + $0x14] sm:$0xf]
    %v1415 = vld [vmem:[%s10 + $0x18] sm:$0xf]
    %v1416 = vld [vmem:[%s10 + $0x1c] sm:$0xf]
    %v1417 = vld [vmem:[%s11] sm:$0x1]
    %v1419 = vlaneseq
    %v1420 = vshrl.u32 %v1419, 7
    %v1421 = vsub.s32 0, %v1420
    %v1422 = vrot.slane %v1417, %v1421
    %v1432 = vunpack.c.l.b16 %v1409
    %v1433 = vunpack.c.l.b16 %v1410
    %v1434 = vunpack.c.l.b16 %v1411
    %v1435 = vunpack.c.l.b16 %v1412
    %v1436 = vunpack.c.l.b16 %v1413
    %v1437 = vunpack.c.l.b16 %v1414
    %v1438 = vunpack.c.l.b16 %v1415
    %v1439 = vunpack.c.l.b16 %v1416
    %v1440 = vpack.c.b16 %v1433, %v1432
    %v1441 = vpack.c.b16 %v1435, %v1434
    %v1442 = vpack.c.b16 %v1437, %v1436
    %v1443 = vpack.c.b16 %v1439, %v1438
    %vm1448 = vcmask 523264
    %v1450 = vsel %vm1448, %v1408, 0
    %1452 = vmatprep.subr.bf16.mxu0 0
    %1453 = vmatpush1.bf16.msra.mxu0 0
    %1454 = vmatprep.subr.bf16.mxu0 0
    %1455 = vmatpush1.bf16.msra.mxu0 0
    %1456 = vmatprep.subr.bf16.mxu0 0
    %1457 = vmatpush1.bf16.msra.mxu0 0
    %1458 = vmatprep.subr.bf16.mxu0 0
    %1459 = vmatpush1.bf16.msra.mxu0 0
    %1460 = vmatprep.subr.bf16.mxu0 0
    %1461 = vmatpush1.bf16.msra.mxu0 %v1443
    %1462 = vmatprep.subr.bf16.mxu0 0
    %1463 = vmatpush1.bf16.msra.mxu0 %v1442
    %1464 = vmatprep.subr.bf16.mxu0 0
    %1465 = vmatpush1.bf16.msra.mxu0 %v1441
    %1466 = vmatprep.subr.bf16.mxu0 0
    %1467 = vmatpush1.bf16.msra.mxu0 %v1440
    %1468 = vmatprep.subr.bf16.mxu0 0
    %1469 = vmatpush2.bf16.msra.mxu0 0
    %1470 = vmatprep.subr.bf16.mxu0 0
    %1471 = vmatpush2.bf16.msra.mxu0 0
    %1472 = vmatprep.subr.bf16.mxu0 0
    %1473 = vmatpush2.bf16.msra.mxu0 0
    %1474 = vmatprep.subr.bf16.mxu0 0
    %1475 = vmatpush2.bf16.msra.mxu0 0
    %1476 = vmatprep.subr.bf16.mxu0 0
    %1477 = vmatpush2.bf16.msra.mxu0 0
    %1478 = vmatprep.subr.bf16.mxu0 0
    %1479 = vmatpush2.bf16.msra.mxu0 0
    %1480 = vmatprep.subr.bf16.mxu0 0
    %1481 = vmatpush2.bf16.msra.mxu0 0
    %1482 = vmatprep.subr.bf16.mxu0 0
    %1483 = vmatpush2.bf16.msra.mxu0 0
    %1484 = vmatprep.mubr.bf16.mxu0 0
    %1485 = vmatmul.mubr.bf16.gmra.mxu0 %v1450
    %v1486 = vpop.f32.mrf.mxu0
    %v1487 = vadd.f32 %v1422, %v1486
    %v1488 = vpop.f32.mrf.mxu0
    %v1489 = vpop.f32.mrf.mxu0
    %v1490 = vadd.f32 %v1422, %v1489
    %v1491 = vpop.f32.mrf.mxu0
    %1492 = vdwg.mxu0
    %v1493 = vadd.f32 %v1280, %v1487
    %v1494 = vadd.f32 %v1281, %v1490
    %s1495 = scalar_lea.vmem [#allocation7], 1
    %v1496 = vld [vmem:[%s1495] sm:$0x1]
    %s1497 = scalar_lea.vmem [#allocation8], 1
    %v1498 = vld [vmem:[%s1497] sm:$0x1]
    %v1499 = vsel %vm157, %v1493, 0.0
    %1500 = vadd.xlane.f32.xlu0 %v1499
    %v1501 = vpop.xlane.xlu0 %1500
    %v1502 = vsel %vm157, %v1494, 0.0
    %1503 = vadd.xlane.f32.xlu0 %v1502
    %v1504 = vpop.xlane.xlu0 %1503
    %v1505 = vmul.f32 %v1501, %v164
    %v1506 = vmul.f32 %v1504, %v164
    %v1507 = vsub.f32 %v1493, %v1505
    %v1508 = vsub.f32 %v1494, %v1506
    %v1509 = vmul.f32 %v1507, %v1507
    %v1510 = vmul.f32 %v1508, %v1508
    %v1511 = vsel %vm157, %v1509, 0.0
    %1512 = vadd.xlane.f32.xlu0 %v1511
    %v1513 = vpop.xlane.xlu0 %1512
    %v1514 = vsel %vm157, %v1510, 0.0
    %1515 = vadd.xlane.f32.xlu0 %v1514
    %v1516 = vpop.xlane.xlu0 %1515
    %v1517 = vmul.f32 %v1513, %v164
    %v1518 = vmul.f32 %v1516, %v164
    %v1519 = vadd.f32 %v1517, 1e-05
    %v1520 = vadd.f32 %v1518, 1e-05
    %v1521 = vrsqrt.pop %v1519
    %v1522 = vrsqrt.pop %v1520
    %v1523 = vmul.f32 %v1507, %v1521
    %v1524 = vmul.f32 %v1508, %v1522
    %v1526 = vlaneseq
    %v1527 = vshrl.u32 %v1526, 7
    %v1528 = vsub.s32 0, %v1527
    %v1529 = vrot.slane %v1496, %v1528
    %v1531 = vmul.f32 %v1523, %v1529
    %v1532 = vmul.f32 %v1524, %v1529
    %v1534 = vlaneseq
    %v1535 = vshrl.u32 %v1534, 7
    %v1536 = vsub.s32 0, %v1535
    %v1537 = vrot.slane %v1498, %v1536
    %v1539 = vadd.f32 %v1531, %v1537
    %v1540 = vadd.f32 %v1532, %v1537
    %v1541 = vpack.c.bf16 %v1540, %v1539
    %s1542 = scalar_lea.vmem %s1, 16
    %v1543 = vld [vmem:[%s1542] sm:$0xf]
    %v1544 = vld [vmem:[%s1542 + $0x4] sm:$0xf]
    %v1545 = vld [vmem:[%s1542 + $0x8] sm:$0xf]
    %v1546 = vld [vmem:[%s1542 + $0xc] sm:$0xf]
    %v1551 = vunpack.c.l.b16 %v1543
    %v1552 = vunpack.c.l.b16 %v1544
    %v1553 = vunpack.c.l.b16 %v1545
    %v1554 = vunpack.c.l.b16 %v1546
    %v1555 = vpack.c.b16 %v1552, %v1551
    %v1556 = vpack.c.b16 %v1554, %v1553
    %v1560 = vsel %vm157, %v1541, 0
    %1562 = vmatprep.subr.bf16.mxu0 0
    %1563 = vmatpush1.bf16.msra.mxu0 0
    %1564 = vmatprep.subr.bf16.mxu0 0
    %1565 = vmatpush1.bf16.msra.mxu0 0
    %1566 = vmatprep.subr.bf16.mxu0 0
    %1567 = vmatpush1.bf16.msra.mxu0 0
    %1568 = vmatprep.subr.bf16.mxu0 0
    %1569 = vmatpush1.bf16.msra.mxu0 0
    %1570 = vmatprep.subr.bf16.mxu0 0
    %1571 = vmatpush1.bf16.msra.mxu0 0
    %1572 = vmatprep.subr.bf16.mxu0 0
    %1573 = vmatpush1.bf16.msra.mxu0 0
    %1574 = vmatprep.subr.bf16.mxu0 0
    %1575 = vmatpush1.bf16.msra.mxu0 %v1556
    %1576 = vmatprep.subr.bf16.mxu0 0
    %1577 = vmatpush1.bf16.msra.mxu0 %v1555
    %1578 = vmatprep.subr.bf16.mxu0 0
    %1579 = vmatpush2.bf16.msra.mxu0 0
    %1580 = vmatprep.subr.bf16.mxu0 0
    %1581 = vmatpush2.bf16.msra.mxu0 0
    %1582 = vmatprep.subr.bf16.mxu0 0
    %1583 = vmatpush2.bf16.msra.mxu0 0
    %1584 = vmatprep.subr.bf16.mxu0 0
    %1585 = vmatpush2.bf16.msra.mxu0 0
    %1586 = vmatprep.subr.bf16.mxu0 0
    %1587 = vmatpush2.bf16.msra.mxu0 0
    %1588 = vmatprep.subr.bf16.mxu0 0
    %1589 = vmatpush2.bf16.msra.mxu0 0
    %1590 = vmatprep.subr.bf16.mxu0 0
    %1591 = vmatpush2.bf16.msra.mxu0 0
    %1592 = vmatprep.subr.bf16.mxu0 0
    %1593 = vmatpush2.bf16.msra.mxu0 0
    %1594 = vmatprep.mubr.bf16.mxu0 0
    %1595 = vmatmul.mubr.bf16.gmra.mxu0 %v1560
    %v1596 = vpop.f32.mrf.mxu0
    %v1597 = vadd.f32 0.0, %v1596
    %v1598 = vpop.f32.mrf.mxu0
    %v1599 = vpop.f32.mrf.mxu0
    %v1600 = vadd.f32 0.0, %v1599
    %v1601 = vpop.f32.mrf.mxu0
    %1602 = vdwg.mxu0
    %1604 = vrot.lane.b32.xlu0 %v1597, 120
    %v1605 = vpop.permute.xlu0 %1604
    %1607 = vrot.lane.b32.xlu0 %v1597, 112
    %v1608 = vpop.permute.xlu0 %1607
    %1610 = vrot.lane.b32.xlu0 %v1597, 104
    %v1611 = vpop.permute.xlu0 %1610
    %1614 = vrot.lane.b32.xlu0 %v1600, 120
    %v1615 = vpop.permute.xlu0 %1614
    %1617 = vrot.lane.b32.xlu0 %v1600, 112
    %v1618 = vpop.permute.xlu0 %1617
    %1620 = vrot.lane.b32.xlu0 %v1600, 104
    %v1621 = vpop.permute.xlu0 %1620
    %v1623 = vpack.c.bf16 %v1597, %v1597
    %v1624 = vpack.c.bf16 %v1605, %v1605
    %v1625 = vpack.c.bf16 %v1608, %v1608
    %v1626 = vpack.c.bf16 %v1611, %v1611
    %v1627 = vpack.c.bf16 %v1600, %v1600
    %v1628 = vpack.c.bf16 %v1615, %v1615
    %v1629 = vpack.c.bf16 %v1618, %v1618
    %v1630 = vpack.c.bf16 %v1621, %v1621
    %1632 = vrot.lane.b32.xlu0 %v1623, 96
    %v1633 = vpop.permute.xlu0 %1632
    %v1635 = vsel %vm293, %v1623, 0
    %v1638 = vsel %vm293, %v1633, 0
    %1640 = vmatprep.subr.bf16.mxu0 0
    %1641 = vmatpush1.bf16.xpose.msra.mxu0 0
    %1642 = vmatprep.subr.bf16.mxu0 0
    %1643 = vmatpush1.bf16.xpose.msra.mxu0 0
    %1644 = vmatprep.subr.bf16.mxu0 0
    %1645 = vmatpush1.bf16.xpose.msra.mxu0 0
    %1646 = vmatprep.subr.bf16.mxu0 0
    %1647 = vmatpush1.bf16.xpose.msra.mxu0 0
    %1648 = vmatprep.subr.bf16.mxu0 0
    %1649 = vmatpush1.bf16.xpose.msra.mxu0 0
    %1650 = vmatprep.subr.bf16.mxu0 0
    %1651 = vmatpush1.bf16.xpose.msra.mxu0 0
    %1652 = vmatprep.subr.bf16.mxu0 0
    %1653 = vmatpush1.bf16.xpose.msra.mxu0 0
    %1654 = vmatprep.subr.bf16.mxu0 0
    %1655 = vmatpush1.bf16.xpose.msra.mxu0 %v1638
    %1656 = vmatprep.subr.bf16.mxu0 0
    %1657 = vmatpush2.bf16.xpose.msra.mxu0 0
    %1658 = vmatprep.subr.bf16.mxu0 0
    %1659 = vmatpush2.bf16.xpose.msra.mxu0 0
    %1660 = vmatprep.subr.bf16.mxu0 0
    %1661 = vmatpush2.bf16.xpose.msra.mxu0 0
    %1662 = vmatprep.subr.bf16.mxu0 0
    %1663 = vmatpush2.bf16.xpose.msra.mxu0 0
    %1664 = vmatprep.subr.bf16.mxu0 0
    %1665 = vmatpush2.bf16.xpose.msra.mxu0 0
    %1666 = vmatprep.subr.bf16.mxu0 0
    %1667 = vmatpush2.bf16.xpose.msra.mxu0 0
    %1668 = vmatprep.subr.bf16.mxu0 0
    %1669 = vmatpush2.bf16.xpose.msra.mxu0 0
    %1670 = vmatprep.subr.bf16.mxu0 0
    %1671 = vmatpush2.bf16.xpose.msra.mxu0 0
    %1672 = vmatprep.mubr.bf16.mxu0 0
    %1673 = vmatmul.mubr.bf16.gmra.mxu0 %v1635
    %v1674 = vpop.f32.mrf.mxu0
    %v1675 = vadd.f32 0.0, %v1674
    %v1676 = vpop.f32.mrf.mxu0
    %v1677 = vpop.f32.mrf.mxu0
    %v1678 = vpop.f32.mrf.mxu0
    %1679 = vdwg.mxu0
    %1681 = vrot.lane.b32.xlu0 %v1624, 96
    %v1682 = vpop.permute.xlu0 %1681
    %v1684 = vsel %vm293, %v1624, 0
    %v1687 = vsel %vm293, %v1682, 0
    %1689 = vmatprep.subr.bf16.mxu0 0
    %1690 = vmatpush1.bf16.xpose.msra.mxu0 0
    %1691 = vmatprep.subr.bf16.mxu0 0
    %1692 = vmatpush1.bf16.xpose.msra.mxu0 0
    %1693 = vmatprep.subr.bf16.mxu0 0
    %1694 = vmatpush1.bf16.xpose.msra.mxu0 0
    %1695 = vmatprep.subr.bf16.mxu0 0
    %1696 = vmatpush1.bf16.xpose.msra.mxu0 0
    %1697 = vmatprep.subr.bf16.mxu0 0
    %1698 = vmatpush1.bf16.xpose.msra.mxu0 0
    %1699 = vmatprep.subr.bf16.mxu0 0
    %1700 = vmatpush1.bf16.xpose.msra.mxu0 0
    %1701 = vmatprep.subr.bf16.mxu0 0
    %1702 = vmatpush1.bf16.xpose.msra.mxu0 0
    %1703 = vmatprep.subr.bf16.mxu0 0
    %1704 = vmatpush1.bf16.xpose.msra.mxu0 %v1687
    %1705 = vmatprep.subr.bf16.mxu0 0
    %1706 = vmatpush2.bf16.xpose.msra.mxu0 0
    %1707 = vmatprep.subr.bf16.mxu0 0
    %1708 = vmatpush2.bf16.xpose.msra.mxu0 0
    %1709 = vmatprep.subr.bf16.mxu0 0
    %1710 = vmatpush2.bf16.xpose.msra.mxu0 0
    %1711 = vmatprep.subr.bf16.mxu0 0
    %1712 = vmatpush2.bf16.xpose.msra.mxu0 0
    %1713 = vmatprep.subr.bf16.mxu0 0
    %1714 = vmatpush2.bf16.xpose.msra.mxu0 0
    %1715 = vmatprep.subr.bf16.mxu0 0
    %1716 = vmatpush2.bf16.xpose.msra.mxu0 0
    %1717 = vmatprep.subr.bf16.mxu0 0
    %1718 = vmatpush2.bf16.xpose.msra.mxu0 0
    %1719 = vmatprep.subr.bf16.mxu0 0
    %1720 = vmatpush2.bf16.xpose.msra.mxu0 0
    %1721 = vmatprep.mubr.bf16.mxu0 0
    %1722 = vmatmul.mubr.bf16.gmra.mxu0 %v1684
    %v1723 = vpop.f32.mrf.mxu0
    %v1724 = vadd.f32 0.0, %v1723
    %v1725 = vpop.f32.mrf.mxu0
    %v1726 = vpop.f32.mrf.mxu0
    %v1727 = vpop.f32.mrf.mxu0
    %1728 = vdwg.mxu0
    %1730 = vrot.lane.b32.xlu0 %v1625, 96
    %v1731 = vpop.permute.xlu0 %1730
    %v1733 = vsel %vm293, %v1625, 0
    %v1736 = vsel %vm293, %v1731, 0
    %1738 = vmatprep.subr.bf16.mxu0 0
    %1739 = vmatpush1.bf16.xpose.msra.mxu0 0
    %1740 = vmatprep.subr.bf16.mxu0 0
    %1741 = vmatpush1.bf16.xpose.msra.mxu0 0
    %1742 = vmatprep.subr.bf16.mxu0 0
    %1743 = vmatpush1.bf16.xpose.msra.mxu0 0
    %1744 = vmatprep.subr.bf16.mxu0 0
    %1745 = vmatpush1.bf16.xpose.msra.mxu0 0
    %1746 = vmatprep.subr.bf16.mxu0 0
    %1747 = vmatpush1.bf16.xpose.msra.mxu0 0
    %1748 = vmatprep.subr.bf16.mxu0 0
    %1749 = vmatpush1.bf16.xpose.msra.mxu0 0
    %1750 = vmatprep.subr.bf16.mxu0 0
    %1751 = vmatpush1.bf16.xpose.msra.mxu0 0
    %1752 = vmatprep.subr.bf16.mxu0 0
    %1753 = vmatpush1.bf16.xpose.msra.mxu0 %v1736
    %1754 = vmatprep.subr.bf16.mxu0 0
    %1755 = vmatpush2.bf16.xpose.msra.mxu0 0
    %1756 = vmatprep.subr.bf16.mxu0 0
    %1757 = vmatpush2.bf16.xpose.msra.mxu0 0
    %1758 = vmatprep.subr.bf16.mxu0 0
    %1759 = vmatpush2.bf16.xpose.msra.mxu0 0
    %1760 = vmatprep.subr.bf16.mxu0 0
    %1761 = vmatpush2.bf16.xpose.msra.mxu0 0
    %1762 = vmatprep.subr.bf16.mxu0 0
    %1763 = vmatpush2.bf16.xpose.msra.mxu0 0
    %1764 = vmatprep.subr.bf16.mxu0 0
    %1765 = vmatpush2.bf16.xpose.msra.mxu0 0
    %1766 = vmatprep.subr.bf16.mxu0 0
    %1767 = vmatpush2.bf16.xpose.msra.mxu0 0
    %1768 = vmatprep.subr.bf16.mxu0 0
    %1769 = vmatpush2.bf16.xpose.msra.mxu0 0
    %1770 = vmatprep.mubr.bf16.mxu0 0
    %1771 = vmatmul.mubr.bf16.gmra.mxu0 %v1733
    %v1772 = vpop.f32.mrf.mxu0
    %v1773 = vadd.f32 0.0, %v1772
    %v1774 = vpop.f32.mrf.mxu0
    %v1775 = vpop.f32.mrf.mxu0
    %v1776 = vpop.f32.mrf.mxu0
    %1777 = vdwg.mxu0
    %1779 = vrot.lane.b32.xlu0 %v1626, 96
    %v1780 = vpop.permute.xlu0 %1779
    %v1782 = vsel %vm293, %v1626, 0
    %v1785 = vsel %vm293, %v1780, 0
    %1787 = vmatprep.subr.bf16.mxu0 0
    %1788 = vmatpush1.bf16.xpose.msra.mxu0 0
    %1789 = vmatprep.subr.bf16.mxu0 0
    %1790 = vmatpush1.bf16.xpose.msra.mxu0 0
    %1791 = vmatprep.subr.bf16.mxu0 0
    %1792 = vmatpush1.bf16.xpose.msra.mxu0 0
    %1793 = vmatprep.subr.bf16.mxu0 0
    %1794 = vmatpush1.bf16.xpose.msra.mxu0 0
    %1795 = vmatprep.subr.bf16.mxu0 0
    %1796 = vmatpush1.bf16.xpose.msra.mxu0 0
    %1797 = vmatprep.subr.bf16.mxu0 0
    %1798 = vmatpush1.bf16.xpose.msra.mxu0 0
    %1799 = vmatprep.subr.bf16.mxu0 0
    %1800 = vmatpush1.bf16.xpose.msra.mxu0 0
    %1801 = vmatprep.subr.bf16.mxu0 0
    %1802 = vmatpush1.bf16.xpose.msra.mxu0 %v1785
    %1803 = vmatprep.subr.bf16.mxu0 0
    %1804 = vmatpush2.bf16.xpose.msra.mxu0 0
    %1805 = vmatprep.subr.bf16.mxu0 0
    %1806 = vmatpush2.bf16.xpose.msra.mxu0 0
    %1807 = vmatprep.subr.bf16.mxu0 0
    %1808 = vmatpush2.bf16.xpose.msra.mxu0 0
    %1809 = vmatprep.subr.bf16.mxu0 0
    %1810 = vmatpush2.bf16.xpose.msra.mxu0 0
    %1811 = vmatprep.subr.bf16.mxu0 0
    %1812 = vmatpush2.bf16.xpose.msra.mxu0 0
    %1813 = vmatprep.subr.bf16.mxu0 0
    %1814 = vmatpush2.bf16.xpose.msra.mxu0 0
    %1815 = vmatprep.subr.bf16.mxu0 0
    %1816 = vmatpush2.bf16.xpose.msra.mxu0 0
    %1817 = vmatprep.subr.bf16.mxu0 0
    %1818 = vmatpush2.bf16.xpose.msra.mxu0 0
    %1819 = vmatprep.mubr.bf16.mxu0 0
    %1820 = vmatmul.mubr.bf16.gmra.mxu0 %v1782
    %v1821 = vpop.f32.mrf.mxu0
    %v1822 = vadd.f32 0.0, %v1821
    %v1823 = vpop.f32.mrf.mxu0
    %v1824 = vpop.f32.mrf.mxu0
    %v1825 = vpop.f32.mrf.mxu0
    %1826 = vdwg.mxu0
    %1828 = vrot.lane.b32.xlu0 %v1627, 96
    %v1829 = vpop.permute.xlu0 %1828
    %v1831 = vsel %vm293, %v1627, 0
    %v1834 = vsel %vm293, %v1829, 0
    %1836 = vmatprep.subr.bf16.mxu0 0
    %1837 = vmatpush1.bf16.xpose.msra.mxu0 0
    %1838 = vmatprep.subr.bf16.mxu0 0
    %1839 = vmatpush1.bf16.xpose.msra.mxu0 0
    %1840 = vmatprep.subr.bf16.mxu0 0
    %1841 = vmatpush1.bf16.xpose.msra.mxu0 0
    %1842 = vmatprep.subr.bf16.mxu0 0
    %1843 = vmatpush1.bf16.xpose.msra.mxu0 0
    %1844 = vmatprep.subr.bf16.mxu0 0
    %1845 = vmatpush1.bf16.xpose.msra.mxu0 0
    %1846 = vmatprep.subr.bf16.mxu0 0
    %1847 = vmatpush1.bf16.xpose.msra.mxu0 0
    %1848 = vmatprep.subr.bf16.mxu0 0
    %1849 = vmatpush1.bf16.xpose.msra.mxu0 0
    %1850 = vmatprep.subr.bf16.mxu0 0
    %1851 = vmatpush1.bf16.xpose.msra.mxu0 %v1834
    %1852 = vmatprep.subr.bf16.mxu0 0
    %1853 = vmatpush2.bf16.xpose.msra.mxu0 0
    %1854 = vmatprep.subr.bf16.mxu0 0
    %1855 = vmatpush2.bf16.xpose.msra.mxu0 0
    %1856 = vmatprep.subr.bf16.mxu0 0
    %1857 = vmatpush2.bf16.xpose.msra.mxu0 0
    %1858 = vmatprep.subr.bf16.mxu0 0
    %1859 = vmatpush2.bf16.xpose.msra.mxu0 0
    %1860 = vmatprep.subr.bf16.mxu0 0
    %1861 = vmatpush2.bf16.xpose.msra.mxu0 0
    %1862 = vmatprep.subr.bf16.mxu0 0
    %1863 = vmatpush2.bf16.xpose.msra.mxu0 0
    %1864 = vmatprep.subr.bf16.mxu0 0
    %1865 = vmatpush2.bf16.xpose.msra.mxu0 0
    %1866 = vmatprep.subr.bf16.mxu0 0
    %1867 = vmatpush2.bf16.xpose.msra.mxu0 0
    %1868 = vmatprep.mubr.bf16.mxu0 0
    %1869 = vmatmul.mubr.bf16.gmra.mxu0 %v1831
    %v1870 = vpop.f32.mrf.mxu0
    %v1871 = vadd.f32 0.0, %v1870
    %v1872 = vpop.f32.mrf.mxu0
    %v1873 = vpop.f32.mrf.mxu0
    %v1874 = vpop.f32.mrf.mxu0
    %1875 = vdwg.mxu0
    %1877 = vrot.lane.b32.xlu0 %v1628, 96
    %v1878 = vpop.permute.xlu0 %1877
    %v1880 = vsel %vm293, %v1628, 0
    %v1883 = vsel %vm293, %v1878, 0
    %1885 = vmatprep.subr.bf16.mxu0 0
    %1886 = vmatpush1.bf16.xpose.msra.mxu0 0
    %1887 = vmatprep.subr.bf16.mxu0 0
    %1888 = vmatpush1.bf16.xpose.msra.mxu0 0
    %1889 = vmatprep.subr.bf16.mxu0 0
    %1890 = vmatpush1.bf16.xpose.msra.mxu0 0
    %1891 = vmatprep.subr.bf16.mxu0 0
    %1892 = vmatpush1.bf16.xpose.msra.mxu0 0
    %1893 = vmatprep.subr.bf16.mxu0 0
    %1894 = vmatpush1.bf16.xpose.msra.mxu0 0
    %1895 = vmatprep.subr.bf16.mxu0 0
    %1896 = vmatpush1.bf16.xpose.msra.mxu0 0
    %1897 = vmatprep.subr.bf16.mxu0 0
    %1898 = vmatpush1.bf16.xpose.msra.mxu0 0
    %1899 = vmatprep.subr.bf16.mxu0 0
    %1900 = vmatpush1.bf16.xpose.msra.mxu0 %v1883
    %1901 = vmatprep.subr.bf16.mxu0 0
    %1902 = vmatpush2.bf16.xpose.msra.mxu0 0
    %1903 = vmatprep.subr.bf16.mxu0 0
    %1904 = vmatpush2.bf16.xpose.msra.mxu0 0
    %1905 = vmatprep.subr.bf16.mxu0 0
    %1906 = vmatpush2.bf16.xpose.msra.mxu0 0
    %1907 = vmatprep.subr.bf16.mxu0 0
    %1908 = vmatpush2.bf16.xpose.msra.mxu0 0
    %1909 = vmatprep.subr.bf16.mxu0 0
    %1910 = vmatpush2.bf16.xpose.msra.mxu0 0
    %1911 = vmatprep.subr.bf16.mxu0 0
    %1912 = vmatpush2.bf16.xpose.msra.mxu0 0
    %1913 = vmatprep.subr.bf16.mxu0 0
    %1914 = vmatpush2.bf16.xpose.msra.mxu0 0
    %1915 = vmatprep.subr.bf16.mxu0 0
    %1916 = vmatpush2.bf16.xpose.msra.mxu0 0
    %1917 = vmatprep.mubr.bf16.mxu0 0
    %1918 = vmatmul.mubr.bf16.gmra.mxu0 %v1880
    %v1919 = vpop.f32.mrf.mxu0
    %v1920 = vadd.f32 0.0, %v1919
    %v1921 = vpop.f32.mrf.mxu0
    %v1922 = vpop.f32.mrf.mxu0
    %v1923 = vpop.f32.mrf.mxu0
    %1924 = vdwg.mxu0
    %1926 = vrot.lane.b32.xlu0 %v1629, 96
    %v1927 = vpop.permute.xlu0 %1926
    %v1929 = vsel %vm293, %v1629, 0
    %v1932 = vsel %vm293, %v1927, 0
    %1934 = vmatprep.subr.bf16.mxu0 0
    %1935 = vmatpush1.bf16.xpose.msra.mxu0 0
    %1936 = vmatprep.subr.bf16.mxu0 0
    %1937 = vmatpush1.bf16.xpose.msra.mxu0 0
    %1938 = vmatprep.subr.bf16.mxu0 0
    %1939 = vmatpush1.bf16.xpose.msra.mxu0 0
    %1940 = vmatprep.subr.bf16.mxu0 0
    %1941 = vmatpush1.bf16.xpose.msra.mxu0 0
    %1942 = vmatprep.subr.bf16.mxu0 0
    %1943 = vmatpush1.bf16.xpose.msra.mxu0 0
    %1944 = vmatprep.subr.bf16.mxu0 0
    %1945 = vmatpush1.bf16.xpose.msra.mxu0 0
    %1946 = vmatprep.subr.bf16.mxu0 0
    %1947 = vmatpush1.bf16.xpose.msra.mxu0 0
    %1948 = vmatprep.subr.bf16.mxu0 0
    %1949 = vmatpush1.bf16.xpose.msra.mxu0 %v1932
    %1950 = vmatprep.subr.bf16.mxu0 0
    %1951 = vmatpush2.bf16.xpose.msra.mxu0 0
    %1952 = vmatprep.subr.bf16.mxu0 0
    %1953 = vmatpush2.bf16.xpose.msra.mxu0 0
    %1954 = vmatprep.subr.bf16.mxu0 0
    %1955 = vmatpush2.bf16.xpose.msra.mxu0 0
    %1956 = vmatprep.subr.bf16.mxu0 0
    %1957 = vmatpush2.bf16.xpose.msra.mxu0 0
    %1958 = vmatprep.subr.bf16.mxu0 0
    %1959 = vmatpush2.bf16.xpose.msra.mxu0 0
    %1960 = vmatprep.subr.bf16.mxu0 0
    %1961 = vmatpush2.bf16.xpose.msra.mxu0 0
    %1962 = vmatprep.subr.bf16.mxu0 0
    %1963 = vmatpush2.bf16.xpose.msra.mxu0 0
    %1964 = vmatprep.subr.bf16.mxu0 0
    %1965 = vmatpush2.bf16.xpose.msra.mxu0 0
    %1966 = vmatprep.mubr.bf16.mxu0 0
    %1967 = vmatmul.mubr.bf16.gmra.mxu0 %v1929
    %v1968 = vpop.f32.mrf.mxu0
    %v1969 = vadd.f32 0.0, %v1968
    %v1970 = vpop.f32.mrf.mxu0
    %v1971 = vpop.f32.mrf.mxu0
    %v1972 = vpop.f32.mrf.mxu0
    %1973 = vdwg.mxu0
    %1975 = vrot.lane.b32.xlu0 %v1630, 96
    %v1976 = vpop.permute.xlu0 %1975
    %v1978 = vsel %vm293, %v1630, 0
    %v1981 = vsel %vm293, %v1976, 0
    %1983 = vmatprep.subr.bf16.mxu0 0
    %1984 = vmatpush1.bf16.xpose.msra.mxu0 0
    %1985 = vmatprep.subr.bf16.mxu0 0
    %1986 = vmatpush1.bf16.xpose.msra.mxu0 0
    %1987 = vmatprep.subr.bf16.mxu0 0
    %1988 = vmatpush1.bf16.xpose.msra.mxu0 0
    %1989 = vmatprep.subr.bf16.mxu0 0
    %1990 = vmatpush1.bf16.xpose.msra.mxu0 0
    %1991 = vmatprep.subr.bf16.mxu0 0
    %1992 = vmatpush1.bf16.xpose.msra.mxu0 0
    %1993 = vmatprep.subr.bf16.mxu0 0
    %1994 = vmatpush1.bf16.xpose.msra.mxu0 0
    %1995 = vmatprep.subr.bf16.mxu0 0
    %1996 = vmatpush1.bf16.xpose.msra.mxu0 0
    %1997 = vmatprep.subr.bf16.mxu0 0
    %1998 = vmatpush1.bf16.xpose.msra.mxu0 %v1981
    %1999 = vmatprep.subr.bf16.mxu0 0
    %2000 = vmatpush2.bf16.xpose.msra.mxu0 0
    %2001 = vmatprep.subr.bf16.mxu0 0
    %2002 = vmatpush2.bf16.xpose.msra.mxu0 0
    %2003 = vmatprep.subr.bf16.mxu0 0
    %2004 = vmatpush2.bf16.xpose.msra.mxu0 0
    %2005 = vmatprep.subr.bf16.mxu0 0
    %2006 = vmatpush2.bf16.xpose.msra.mxu0 0
    %2007 = vmatprep.subr.bf16.mxu0 0
    %2008 = vmatpush2.bf16.xpose.msra.mxu0 0
    %2009 = vmatprep.subr.bf16.mxu0 0
    %2010 = vmatpush2.bf16.xpose.msra.mxu0 0
    %2011 = vmatprep.subr.bf16.mxu0 0
    %2012 = vmatpush2.bf16.xpose.msra.mxu0 0
    %2013 = vmatprep.subr.bf16.mxu0 0
    %2014 = vmatpush2.bf16.xpose.msra.mxu0 0
    %2015 = vmatprep.mubr.bf16.mxu0 0
    %2016 = vmatmul.mubr.bf16.gmra.mxu0 %v1978
    %v2017 = vpop.f32.mrf.mxu0
    %v2018 = vadd.f32 0.0, %v2017
    %v2019 = vpop.f32.mrf.mxu0
    %v2020 = vpop.f32.mrf.mxu0
    %v2021 = vpop.f32.mrf.mxu0
    %2022 = vdwg.mxu0
    %v2023 = vmul.f32 %v1675, 0.35355338
    %v2024 = vmul.f32 %v1724, 0.35355338
    %v2025 = vmul.f32 %v1773, 0.35355338
    %v2026 = vmul.f32 %v1822, 0.35355338
    %v2027 = vmul.f32 %v1871, 0.35355338
    %v2028 = vmul.f32 %v1920, 0.35355338
    %v2029 = vmul.f32 %v1969, 0.35355338
    %v2030 = vmul.f32 %v2018, 0.35355338
    %v2031 = vadd.f32 %v2023, %v154
    %v2032 = vadd.f32 %v2024, %v154
    %v2033 = vadd.f32 %v2025, %v154
    %v2034 = vadd.f32 %v2026, %v154
    %v2035 = vadd.f32 %v2027, %v154
    %v2036 = vadd.f32 %v2028, %v154
    %v2037 = vadd.f32 %v2029, %v154
    %v2038 = vadd.f32 %v2030, %v154
    %v2039 = vsel %vm293, %v2031, -inf
    %2040 = vmax.xlane.f32.xlu0 %v2039
    %v2041 = vpop.xlane.xlu0 %2040
    %v2042 = vsel %vm293, %v2032, -inf
    %2043 = vmax.xlane.f32.xlu0 %v2042
    %v2044 = vpop.xlane.xlu0 %2043
    %v2045 = vsel %vm293, %v2033, -inf
    %2046 = vmax.xlane.f32.xlu0 %v2045
    %v2047 = vpop.xlane.xlu0 %2046
    %v2048 = vsel %vm293, %v2034, -inf
    %2049 = vmax.xlane.f32.xlu0 %v2048
    %v2050 = vpop.xlane.xlu0 %2049
    %v2051 = vsel %vm293, %v2035, -inf
    %2052 = vmax.xlane.f32.xlu0 %v2051
    %v2053 = vpop.xlane.xlu0 %2052
    %v2054 = vsel %vm293, %v2036, -inf
    %2055 = vmax.xlane.f32.xlu0 %v2054
    %v2056 = vpop.xlane.xlu0 %2055
    %v2057 = vsel %vm293, %v2037, -inf
    %2058 = vmax.xlane.f32.xlu0 %v2057
    %v2059 = vpop.xlane.xlu0 %2058
    %v2060 = vsel %vm293, %v2038, -inf
    %2061 = vmax.xlane.f32.xlu0 %v2060
    %v2062 = vpop.xlane.xlu0 %2061
    %v2063 = vsub.f32 %v2031, %v2041
    %v2064 = vsub.f32 %v2032, %v2044
    %v2065 = vsub.f32 %v2033, %v2047
    %v2066 = vsub.f32 %v2034, %v2050
    %v2067 = vsub.f32 %v2035, %v2053
    %v2068 = vsub.f32 %v2036, %v2056
    %v2069 = vsub.f32 %v2037, %v2059
    %v2070 = vsub.f32 %v2038, %v2062
    %v2071 = vmul.f32 %v2063, 1.442695
    %v2072 = vpow.pop %v2071
    %v2073 = vmul.f32 %v2064, 1.442695
    %v2074 = vpow.pop %v2073
    %v2075 = vmul.f32 %v2065, 1.442695
    %v2076 = vpow.pop %v2075
    %v2077 = vmul.f32 %v2066, 1.442695
    %v2078 = vpow.pop %v2077
    %v2079 = vmul.f32 %v2067, 1.442695
    %v2080 = vpow.pop %v2079
    %v2081 = vmul.f32 %v2068, 1.442695
    %v2082 = vpow.pop %v2081
    %v2083 = vmul.f32 %v2069, 1.442695
    %v2084 = vpow.pop %v2083
    %v2085 = vmul.f32 %v2070, 1.442695
    %v2086 = vpow.pop %v2085
    %v2087 = vsel %vm293, %v2072, 0.0
    %2088 = vadd.xlane.f32.xlu0 %v2087
    %v2089 = vpop.xlane.xlu0 %2088
    %v2090 = vsel %vm293, %v2074, 0.0
    %2091 = vadd.xlane.f32.xlu0 %v2090
    %v2092 = vpop.xlane.xlu0 %2091
    %v2093 = vsel %vm293, %v2076, 0.0
    %2094 = vadd.xlane.f32.xlu0 %v2093
    %v2095 = vpop.xlane.xlu0 %2094
    %v2096 = vsel %vm293, %v2078, 0.0
    %2097 = vadd.xlane.f32.xlu0 %v2096
    %v2098 = vpop.xlane.xlu0 %2097
    %v2099 = vsel %vm293, %v2080, 0.0
    %2100 = vadd.xlane.f32.xlu0 %v2099
    %v2101 = vpop.xlane.xlu0 %2100
    %v2102 = vsel %vm293, %v2082, 0.0
    %2103 = vadd.xlane.f32.xlu0 %v2102
    %v2104 = vpop.xlane.xlu0 %2103
    %v2105 = vsel %vm293, %v2084, 0.0
    %2106 = vadd.xlane.f32.xlu0 %v2105
    %v2107 = vpop.xlane.xlu0 %2106
    %v2108 = vsel %vm293, %v2086, 0.0
    %2109 = vadd.xlane.f32.xlu0 %v2108
    %v2110 = vpop.xlane.xlu0 %2109
    %v2111 = vrcp.pop %v2089
    %v2112 = vrcp.pop %v2092
    %v2113 = vrcp.pop %v2095
    %v2114 = vrcp.pop %v2098
    %v2115 = vrcp.pop %v2101
    %v2116 = vrcp.pop %v2104
    %v2117 = vrcp.pop %v2107
    %v2118 = vrcp.pop %v2110
    %v2119 = vmul.f32 %v2072, %v2111
    %v2120 = vmul.f32 %v2074, %v2112
    %v2121 = vmul.f32 %v2076, %v2113
    %v2122 = vmul.f32 %v2078, %v2114
    %v2123 = vmul.f32 %v2080, %v2115
    %v2124 = vmul.f32 %v2082, %v2116
    %v2125 = vmul.f32 %v2084, %v2117
    %v2126 = vmul.f32 %v2086, %v2118
    %v2127 = vpack.c.bf16 %v2119, %v2119
    %v2128 = vpack.c.bf16 %v2120, %v2120
    %v2129 = vpack.c.bf16 %v2121, %v2121
    %v2130 = vpack.c.bf16 %v2122, %v2122
    %v2131 = vpack.c.bf16 %v2123, %v2123
    %v2132 = vpack.c.bf16 %v2124, %v2124
    %v2133 = vpack.c.bf16 %v2125, %v2125
    %v2134 = vpack.c.bf16 %v2126, %v2126
    %2135 = vrot.lane.b32.xlu0 %v1623, 64
    %v2136 = vpop.permute.xlu0 %2135
    %v2138 = vsel %vm293, %v2127, 0
    %v2141 = vsel %vm800, %v2136, 0
    %2143 = vmatprep.subr.bf16.mxu0 0
    %2144 = vmatpush1.bf16.msra.mxu0 0
    %2145 = vmatprep.subr.bf16.mxu0 0
    %2146 = vmatpush1.bf16.msra.mxu0 0
    %2147 = vmatprep.subr.bf16.mxu0 0
    %2148 = vmatpush1.bf16.msra.mxu0 0
    %2149 = vmatprep.subr.bf16.mxu0 0
    %2150 = vmatpush1.bf16.msra.mxu0 0
    %2151 = vmatprep.subr.bf16.mxu0 0
    %2152 = vmatpush1.bf16.msra.mxu0 0
    %2153 = vmatprep.subr.bf16.mxu0 0
    %2154 = vmatpush1.bf16.msra.mxu0 0
    %2155 = vmatprep.subr.bf16.mxu0 0
    %2156 = vmatpush1.bf16.msra.mxu0 0
    %2157 = vmatprep.subr.bf16.mxu0 0
    %2158 = vmatpush1.bf16.msra.mxu0 %v2141
    %2159 = vmatprep.subr.bf16.mxu0 0
    %2160 = vmatpush2.bf16.msra.mxu0 0
    %2161 = vmatprep.subr.bf16.mxu0 0
    %2162 = vmatpush2.bf16.msra.mxu0 0
    %2163 = vmatprep.subr.bf16.mxu0 0
    %2164 = vmatpush2.bf16.msra.mxu0 0
    %2165 = vmatprep.subr.bf16.mxu0 0
    %2166 = vmatpush2.bf16.msra.mxu0 0
    %2167 = vmatprep.subr.bf16.mxu0 0
    %2168 = vmatpush2.bf16.msra.mxu0 0
    %2169 = vmatprep.subr.bf16.mxu0 0
    %2170 = vmatpush2.bf16.msra.mxu0 0
    %2171 = vmatprep.subr.bf16.mxu0 0
    %2172 = vmatpush2.bf16.msra.mxu0 0
    %2173 = vmatprep.subr.bf16.mxu0 0
    %2174 = vmatpush2.bf16.msra.mxu0 0
    %2175 = vmatprep.mubr.bf16.mxu0 0
    %2176 = vmatmul.mubr.bf16.gmra.mxu0 %v2138
    %v2177 = vpop.f32.mrf.mxu0
    %v2178 = vadd.f32 0.0, %v2177
    %v2179 = vpop.f32.mrf.mxu0
    %v2180 = vpop.f32.mrf.mxu0
    %v2181 = vpop.f32.mrf.mxu0
    %2182 = vdwg.mxu0
    %2183 = vrot.lane.b32.xlu0 %v1624, 64
    %v2184 = vpop.permute.xlu0 %2183
    %v2186 = vsel %vm293, %v2128, 0
    %v2189 = vsel %vm800, %v2184, 0
    %2191 = vmatprep.subr.bf16.mxu0 0
    %2192 = vmatpush1.bf16.msra.mxu0 0
    %2193 = vmatprep.subr.bf16.mxu0 0
    %2194 = vmatpush1.bf16.msra.mxu0 0
    %2195 = vmatprep.subr.bf16.mxu0 0
    %2196 = vmatpush1.bf16.msra.mxu0 0
    %2197 = vmatprep.subr.bf16.mxu0 0
    %2198 = vmatpush1.bf16.msra.mxu0 0
    %2199 = vmatprep.subr.bf16.mxu0 0
    %2200 = vmatpush1.bf16.msra.mxu0 0
    %2201 = vmatprep.subr.bf16.mxu0 0
    %2202 = vmatpush1.bf16.msra.mxu0 0
    %2203 = vmatprep.subr.bf16.mxu0 0
    %2204 = vmatpush1.bf16.msra.mxu0 0
    %2205 = vmatprep.subr.bf16.mxu0 0
    %2206 = vmatpush1.bf16.msra.mxu0 %v2189
    %2207 = vmatprep.subr.bf16.mxu0 0
    %2208 = vmatpush2.bf16.msra.mxu0 0
    %2209 = vmatprep.subr.bf16.mxu0 0
    %2210 = vmatpush2.bf16.msra.mxu0 0
    %2211 = vmatprep.subr.bf16.mxu0 0
    %2212 = vmatpush2.bf16.msra.mxu0 0
    %2213 = vmatprep.subr.bf16.mxu0 0
    %2214 = vmatpush2.bf16.msra.mxu0 0
    %2215 = vmatprep.subr.bf16.mxu0 0
    %2216 = vmatpush2.bf16.msra.mxu0 0
    %2217 = vmatprep.subr.bf16.mxu0 0
    %2218 = vmatpush2.bf16.msra.mxu0 0
    %2219 = vmatprep.subr.bf16.mxu0 0
    %2220 = vmatpush2.bf16.msra.mxu0 0
    %2221 = vmatprep.subr.bf16.mxu0 0
    %2222 = vmatpush2.bf16.msra.mxu0 0
    %2223 = vmatprep.mubr.bf16.mxu0 0
    %2224 = vmatmul.mubr.bf16.gmra.mxu0 %v2186
    %v2225 = vpop.f32.mrf.mxu0
    %v2226 = vadd.f32 0.0, %v2225
    %v2227 = vpop.f32.mrf.mxu0
    %v2228 = vpop.f32.mrf.mxu0
    %v2229 = vpop.f32.mrf.mxu0
    %2230 = vdwg.mxu0
    %2231 = vrot.lane.b32.xlu0 %v1625, 64
    %v2232 = vpop.permute.xlu0 %2231
    %v2234 = vsel %vm293, %v2129, 0
    %v2237 = vsel %vm800, %v2232, 0
    %2239 = vmatprep.subr.bf16.mxu0 0
    %2240 = vmatpush1.bf16.msra.mxu0 0
    %2241 = vmatprep.subr.bf16.mxu0 0
    %2242 = vmatpush1.bf16.msra.mxu0 0
    %2243 = vmatprep.subr.bf16.mxu0 0
    %2244 = vmatpush1.bf16.msra.mxu0 0
    %2245 = vmatprep.subr.bf16.mxu0 0
    %2246 = vmatpush1.bf16.msra.mxu0 0
    %2247 = vmatprep.subr.bf16.mxu0 0
    %2248 = vmatpush1.bf16.msra.mxu0 0
    %2249 = vmatprep.subr.bf16.mxu0 0
    %2250 = vmatpush1.bf16.msra.mxu0 0
    %2251 = vmatprep.subr.bf16.mxu0 0
    %2252 = vmatpush1.bf16.msra.mxu0 0
    %2253 = vmatprep.subr.bf16.mxu0 0
    %2254 = vmatpush1.bf16.msra.mxu0 %v2237
    %2255 = vmatprep.subr.bf16.mxu0 0
    %2256 = vmatpush2.bf16.msra.mxu0 0
    %2257 = vmatprep.subr.bf16.mxu0 0
    %2258 = vmatpush2.bf16.msra.mxu0 0
    %2259 = vmatprep.subr.bf16.mxu0 0
    %2260 = vmatpush2.bf16.msra.mxu0 0
    %2261 = vmatprep.subr.bf16.mxu0 0
    %2262 = vmatpush2.bf16.msra.mxu0 0
    %2263 = vmatprep.subr.bf16.mxu0 0
    %2264 = vmatpush2.bf16.msra.mxu0 0
    %2265 = vmatprep.subr.bf16.mxu0 0
    %2266 = vmatpush2.bf16.msra.mxu0 0
    %2267 = vmatprep.subr.bf16.mxu0 0
    %2268 = vmatpush2.bf16.msra.mxu0 0
    %2269 = vmatprep.subr.bf16.mxu0 0
    %2270 = vmatpush2.bf16.msra.mxu0 0
    %2271 = vmatprep.mubr.bf16.mxu0 0
    %2272 = vmatmul.mubr.bf16.gmra.mxu0 %v2234
    %v2273 = vpop.f32.mrf.mxu0
    %v2274 = vadd.f32 0.0, %v2273
    %v2275 = vpop.f32.mrf.mxu0
    %v2276 = vpop.f32.mrf.mxu0
    %v2277 = vpop.f32.mrf.mxu0
    %2278 = vdwg.mxu0
    %2279 = vrot.lane.b32.xlu0 %v1626, 64
    %v2280 = vpop.permute.xlu0 %2279
    %v2282 = vsel %vm293, %v2130, 0
    %v2285 = vsel %vm800, %v2280, 0
    %2287 = vmatprep.subr.bf16.mxu0 0
    %2288 = vmatpush1.bf16.msra.mxu0 0
    %2289 = vmatprep.subr.bf16.mxu0 0
    %2290 = vmatpush1.bf16.msra.mxu0 0
    %2291 = vmatprep.subr.bf16.mxu0 0
    %2292 = vmatpush1.bf16.msra.mxu0 0
    %2293 = vmatprep.subr.bf16.mxu0 0
    %2294 = vmatpush1.bf16.msra.mxu0 0
    %2295 = vmatprep.subr.bf16.mxu0 0
    %2296 = vmatpush1.bf16.msra.mxu0 0
    %2297 = vmatprep.subr.bf16.mxu0 0
    %2298 = vmatpush1.bf16.msra.mxu0 0
    %2299 = vmatprep.subr.bf16.mxu0 0
    %2300 = vmatpush1.bf16.msra.mxu0 0
    %2301 = vmatprep.subr.bf16.mxu0 0
    %2302 = vmatpush1.bf16.msra.mxu0 %v2285
    %2303 = vmatprep.subr.bf16.mxu0 0
    %2304 = vmatpush2.bf16.msra.mxu0 0
    %2305 = vmatprep.subr.bf16.mxu0 0
    %2306 = vmatpush2.bf16.msra.mxu0 0
    %2307 = vmatprep.subr.bf16.mxu0 0
    %2308 = vmatpush2.bf16.msra.mxu0 0
    %2309 = vmatprep.subr.bf16.mxu0 0
    %2310 = vmatpush2.bf16.msra.mxu0 0
    %2311 = vmatprep.subr.bf16.mxu0 0
    %2312 = vmatpush2.bf16.msra.mxu0 0
    %2313 = vmatprep.subr.bf16.mxu0 0
    %2314 = vmatpush2.bf16.msra.mxu0 0
    %2315 = vmatprep.subr.bf16.mxu0 0
    %2316 = vmatpush2.bf16.msra.mxu0 0
    %2317 = vmatprep.subr.bf16.mxu0 0
    %2318 = vmatpush2.bf16.msra.mxu0 0
    %2319 = vmatprep.mubr.bf16.mxu0 0
    %2320 = vmatmul.mubr.bf16.gmra.mxu0 %v2282
    %v2321 = vpop.f32.mrf.mxu0
    %v2322 = vadd.f32 0.0, %v2321
    %v2323 = vpop.f32.mrf.mxu0
    %v2324 = vpop.f32.mrf.mxu0
    %v2325 = vpop.f32.mrf.mxu0
    %2326 = vdwg.mxu0
    %2327 = vrot.lane.b32.xlu0 %v1627, 64
    %v2328 = vpop.permute.xlu0 %2327
    %v2330 = vsel %vm293, %v2131, 0
    %v2333 = vsel %vm800, %v2328, 0
    %2335 = vmatprep.subr.bf16.mxu0 0
    %2336 = vmatpush1.bf16.msra.mxu0 0
    %2337 = vmatprep.subr.bf16.mxu0 0
    %2338 = vmatpush1.bf16.msra.mxu0 0
    %2339 = vmatprep.subr.bf16.mxu0 0
    %2340 = vmatpush1.bf16.msra.mxu0 0
    %2341 = vmatprep.subr.bf16.mxu0 0
    %2342 = vmatpush1.bf16.msra.mxu0 0
    %2343 = vmatprep.subr.bf16.mxu0 0
    %2344 = vmatpush1.bf16.msra.mxu0 0
    %2345 = vmatprep.subr.bf16.mxu0 0
    %2346 = vmatpush1.bf16.msra.mxu0 0
    %2347 = vmatprep.subr.bf16.mxu0 0
    %2348 = vmatpush1.bf16.msra.mxu0 0
    %2349 = vmatprep.subr.bf16.mxu0 0
    %2350 = vmatpush1.bf16.msra.mxu0 %v2333
    %2351 = vmatprep.subr.bf16.mxu0 0
    %2352 = vmatpush2.bf16.msra.mxu0 0
    %2353 = vmatprep.subr.bf16.mxu0 0
    %2354 = vmatpush2.bf16.msra.mxu0 0
    %2355 = vmatprep.subr.bf16.mxu0 0
    %2356 = vmatpush2.bf16.msra.mxu0 0
    %2357 = vmatprep.subr.bf16.mxu0 0
    %2358 = vmatpush2.bf16.msra.mxu0 0
    %2359 = vmatprep.subr.bf16.mxu0 0
    %2360 = vmatpush2.bf16.msra.mxu0 0
    %2361 = vmatprep.subr.bf16.mxu0 0
    %2362 = vmatpush2.bf16.msra.mxu0 0
    %2363 = vmatprep.subr.bf16.mxu0 0
    %2364 = vmatpush2.bf16.msra.mxu0 0
    %2365 = vmatprep.subr.bf16.mxu0 0
    %2366 = vmatpush2.bf16.msra.mxu0 0
    %2367 = vmatprep.mubr.bf16.mxu0 0
    %2368 = vmatmul.mubr.bf16.gmra.mxu0 %v2330
    %v2369 = vpop.f32.mrf.mxu0
    %v2370 = vadd.f32 0.0, %v2369
    %v2371 = vpop.f32.mrf.mxu0
    %v2372 = vpop.f32.mrf.mxu0
    %v2373 = vpop.f32.mrf.mxu0
    %2374 = vdwg.mxu0
    %2375 = vrot.lane.b32.xlu0 %v1628, 64
    %v2376 = vpop.permute.xlu0 %2375
    %v2378 = vsel %vm293, %v2132, 0
    %v2381 = vsel %vm800, %v2376, 0
    %2383 = vmatprep.subr.bf16.mxu0 0
    %2384 = vmatpush1.bf16.msra.mxu0 0
    %2385 = vmatprep.subr.bf16.mxu0 0
    %2386 = vmatpush1.bf16.msra.mxu0 0
    %2387 = vmatprep.subr.bf16.mxu0 0
    %2388 = vmatpush1.bf16.msra.mxu0 0
    %2389 = vmatprep.subr.bf16.mxu0 0
    %2390 = vmatpush1.bf16.msra.mxu0 0
    %2391 = vmatprep.subr.bf16.mxu0 0
    %2392 = vmatpush1.bf16.msra.mxu0 0
    %2393 = vmatprep.subr.bf16.mxu0 0
    %2394 = vmatpush1.bf16.msra.mxu0 0
    %2395 = vmatprep.subr.bf16.mxu0 0
    %2396 = vmatpush1.bf16.msra.mxu0 0
    %2397 = vmatprep.subr.bf16.mxu0 0
    %2398 = vmatpush1.bf16.msra.mxu0 %v2381
    %2399 = vmatprep.subr.bf16.mxu0 0
    %2400 = vmatpush2.bf16.msra.mxu0 0
    %2401 = vmatprep.subr.bf16.mxu0 0
    %2402 = vmatpush2.bf16.msra.mxu0 0
    %2403 = vmatprep.subr.bf16.mxu0 0
    %2404 = vmatpush2.bf16.msra.mxu0 0
    %2405 = vmatprep.subr.bf16.mxu0 0
    %2406 = vmatpush2.bf16.msra.mxu0 0
    %2407 = vmatprep.subr.bf16.mxu0 0
    %2408 = vmatpush2.bf16.msra.mxu0 0
    %2409 = vmatprep.subr.bf16.mxu0 0
    %2410 = vmatpush2.bf16.msra.mxu0 0
    %2411 = vmatprep.subr.bf16.mxu0 0
    %2412 = vmatpush2.bf16.msra.mxu0 0
    %2413 = vmatprep.subr.bf16.mxu0 0
    %2414 = vmatpush2.bf16.msra.mxu0 0
    %2415 = vmatprep.mubr.bf16.mxu0 0
    %2416 = vmatmul.mubr.bf16.gmra.mxu0 %v2378
    %v2417 = vpop.f32.mrf.mxu0
    %v2418 = vadd.f32 0.0, %v2417
    %v2419 = vpop.f32.mrf.mxu0
    %v2420 = vpop.f32.mrf.mxu0
    %v2421 = vpop.f32.mrf.mxu0
    %2422 = vdwg.mxu0
    %2423 = vrot.lane.b32.xlu0 %v1629, 64
    %v2424 = vpop.permute.xlu0 %2423
    %v2426 = vsel %vm293, %v2133, 0
    %v2429 = vsel %vm800, %v2424, 0
    %2431 = vmatprep.subr.bf16.mxu0 0
    %2432 = vmatpush1.bf16.msra.mxu0 0
    %2433 = vmatprep.subr.bf16.mxu0 0
    %2434 = vmatpush1.bf16.msra.mxu0 0
    %2435 = vmatprep.subr.bf16.mxu0 0
    %2436 = vmatpush1.bf16.msra.mxu0 0
    %2437 = vmatprep.subr.bf16.mxu0 0
    %2438 = vmatpush1.bf16.msra.mxu0 0
    %2439 = vmatprep.subr.bf16.mxu0 0
    %2440 = vmatpush1.bf16.msra.mxu0 0
    %2441 = vmatprep.subr.bf16.mxu0 0
    %2442 = vmatpush1.bf16.msra.mxu0 0
    %2443 = vmatprep.subr.bf16.mxu0 0
    %2444 = vmatpush1.bf16.msra.mxu0 0
    %2445 = vmatprep.subr.bf16.mxu0 0
    %2446 = vmatpush1.bf16.msra.mxu0 %v2429
    %2447 = vmatprep.subr.bf16.mxu0 0
    %2448 = vmatpush2.bf16.msra.mxu0 0
    %2449 = vmatprep.subr.bf16.mxu0 0
    %2450 = vmatpush2.bf16.msra.mxu0 0
    %2451 = vmatprep.subr.bf16.mxu0 0
    %2452 = vmatpush2.bf16.msra.mxu0 0
    %2453 = vmatprep.subr.bf16.mxu0 0
    %2454 = vmatpush2.bf16.msra.mxu0 0
    %2455 = vmatprep.subr.bf16.mxu0 0
    %2456 = vmatpush2.bf16.msra.mxu0 0
    %2457 = vmatprep.subr.bf16.mxu0 0
    %2458 = vmatpush2.bf16.msra.mxu0 0
    %2459 = vmatprep.subr.bf16.mxu0 0
    %2460 = vmatpush2.bf16.msra.mxu0 0
    %2461 = vmatprep.subr.bf16.mxu0 0
    %2462 = vmatpush2.bf16.msra.mxu0 0
    %2463 = vmatprep.mubr.bf16.mxu0 0
    %2464 = vmatmul.mubr.bf16.gmra.mxu0 %v2426
    %v2465 = vpop.f32.mrf.mxu0
    %v2466 = vadd.f32 0.0, %v2465
    %v2467 = vpop.f32.mrf.mxu0
    %v2468 = vpop.f32.mrf.mxu0
    %v2469 = vpop.f32.mrf.mxu0
    %2470 = vdwg.mxu0
    %2471 = vrot.lane.b32.xlu0 %v1630, 64
    %v2472 = vpop.permute.xlu0 %2471
    %v2474 = vsel %vm293, %v2134, 0
    %v2477 = vsel %vm800, %v2472, 0
    %2479 = vmatprep.subr.bf16.mxu0 0
    %2480 = vmatpush1.bf16.msra.mxu0 0
    %2481 = vmatprep.subr.bf16.mxu0 0
    %2482 = vmatpush1.bf16.msra.mxu0 0
    %2483 = vmatprep.subr.bf16.mxu0 0
    %2484 = vmatpush1.bf16.msra.mxu0 0
    %2485 = vmatprep.subr.bf16.mxu0 0
    %2486 = vmatpush1.bf16.msra.mxu0 0
    %2487 = vmatprep.subr.bf16.mxu0 0
    %2488 = vmatpush1.bf16.msra.mxu0 0
    %2489 = vmatprep.subr.bf16.mxu0 0
    %2490 = vmatpush1.bf16.msra.mxu0 0
    %2491 = vmatprep.subr.bf16.mxu0 0
    %2492 = vmatpush1.bf16.msra.mxu0 0
    %2493 = vmatprep.subr.bf16.mxu0 0
    %2494 = vmatpush1.bf16.msra.mxu0 %v2477
    %2495 = vmatprep.subr.bf16.mxu0 0
    %2496 = vmatpush2.bf16.msra.mxu0 0
    %2497 = vmatprep.subr.bf16.mxu0 0
    %2498 = vmatpush2.bf16.msra.mxu0 0
    %2499 = vmatprep.subr.bf16.mxu0 0
    %2500 = vmatpush2.bf16.msra.mxu0 0
    %2501 = vmatprep.subr.bf16.mxu0 0
    %2502 = vmatpush2.bf16.msra.mxu0 0
    %2503 = vmatprep.subr.bf16.mxu0 0
    %2504 = vmatpush2.bf16.msra.mxu0 0
    %2505 = vmatprep.subr.bf16.mxu0 0
    %2506 = vmatpush2.bf16.msra.mxu0 0
    %2507 = vmatprep.subr.bf16.mxu0 0
    %2508 = vmatpush2.bf16.msra.mxu0 0
    %2509 = vmatprep.subr.bf16.mxu0 0
    %2510 = vmatpush2.bf16.msra.mxu0 0
    %2511 = vmatprep.mubr.bf16.mxu0 0
    %2512 = vmatmul.mubr.bf16.gmra.mxu0 %v2474
    %v2513 = vpop.f32.mrf.mxu0
    %v2514 = vadd.f32 0.0, %v2513
    %v2515 = vpop.f32.mrf.mxu0
    %v2516 = vpop.f32.mrf.mxu0
    %v2517 = vpop.f32.mrf.mxu0
    %2518 = vdwg.mxu0
    %2520 = vrot.lane.b32.xlu0 %v2226, 8
    %v2521 = vpop.permute.xlu0 %2520
    %2524 = vrot.lane.b32.xlu0 %v2274, 16
    %v2525 = vpop.permute.xlu0 %2524
    %2528 = vrot.lane.b32.xlu0 %v2322, 24
    %v2529 = vpop.permute.xlu0 %2528
    %v2531 = vsel %vm293, %v2178, %v2521
    %v2532 = vsel %vm1193, %v2531, %v2525
    %v2533 = vsel %vm1195, %v2532, %v2529
    %2535 = vrot.lane.b32.xlu0 %v2418, 8
    %v2536 = vpop.permute.xlu0 %2535
    %2539 = vrot.lane.b32.xlu0 %v2466, 16
    %v2540 = vpop.permute.xlu0 %2539
    %2543 = vrot.lane.b32.xlu0 %v2514, 24
    %v2544 = vpop.permute.xlu0 %2543
    %v2546 = vsel %vm293, %v2370, %v2536
    %v2547 = vsel %vm1193, %v2546, %v2540
    %v2548 = vsel %vm1195, %v2547, %v2544
    %v2549 = vpack.c.bf16 %v2548, %v2533
    %s2550 = scalar_lea.vmem %s2, 16
    %v2551 = vld [vmem:[%s2550] sm:$0xf]
    %v2552 = vld [vmem:[%s2550 + $0x4] sm:$0xf]
    %v2553 = vld [vmem:[%s2550 + $0x8] sm:$0xf]
    %v2554 = vld [vmem:[%s2550 + $0xc] sm:$0xf]
    %s2555 = scalar_lea.vmem [#allocation5], 1
    %v2556 = vld [vmem:[%s2555] sm:$0x1]
    %v2558 = vlaneseq
    %v2559 = vshrl.u32 %v2558, 7
    %v2560 = vsub.s32 0, %v2559
    %v2561 = vrot.slane %v2556, %v2560
    %v2567 = vunpack.c.l.b16 %v2551
    %v2568 = vunpack.c.l.b16 %v2552
    %v2569 = vunpack.c.l.b16 %v2553
    %v2570 = vunpack.c.l.b16 %v2554
    %v2571 = vpack.c.b16 %v2568, %v2567
    %v2572 = vpack.c.b16 %v2570, %v2569
    %v2576 = vsel %vm157, %v2549, 0
    %2578 = vmatprep.subr.bf16.mxu0 0
    %2579 = vmatpush1.bf16.msra.mxu0 0
    %2580 = vmatprep.subr.bf16.mxu0 0
    %2581 = vmatpush1.bf16.msra.mxu0 0
    %2582 = vmatprep.subr.bf16.mxu0 0
    %2583 = vmatpush1.bf16.msra.mxu0 0
    %2584 = vmatprep.subr.bf16.mxu0 0
    %2585 = vmatpush1.bf16.msra.mxu0 0
    %2586 = vmatprep.subr.bf16.mxu0 0
    %2587 = vmatpush1.bf16.msra.mxu0 0
    %2588 = vmatprep.subr.bf16.mxu0 0
    %2589 = vmatpush1.bf16.msra.mxu0 0
    %2590 = vmatprep.subr.bf16.mxu0 0
    %2591 = vmatpush1.bf16.msra.mxu0 %v2572
    %2592 = vmatprep.subr.bf16.mxu0 0
    %2593 = vmatpush1.bf16.msra.mxu0 %v2571
    %2594 = vmatprep.subr.bf16.mxu0 0
    %2595 = vmatpush2.bf16.msra.mxu0 0
    %2596 = vmatprep.subr.bf16.mxu0 0
    %2597 = vmatpush2.bf16.msra.mxu0 0
    %2598 = vmatprep.subr.bf16.mxu0 0
    %2599 = vmatpush2.bf16.msra.mxu0 0
    %2600 = vmatprep.subr.bf16.mxu0 0
    %2601 = vmatpush2.bf16.msra.mxu0 0
    %2602 = vmatprep.subr.bf16.mxu0 0
    %2603 = vmatpush2.bf16.msra.mxu0 0
    %2604 = vmatprep.subr.bf16.mxu0 0
    %2605 = vmatpush2.bf16.msra.mxu0 0
    %2606 = vmatprep.subr.bf16.mxu0 0
    %2607 = vmatpush2.bf16.msra.mxu0 0
    %2608 = vmatprep.subr.bf16.mxu0 0
    %2609 = vmatpush2.bf16.msra.mxu0 0
    %2610 = vmatprep.mubr.bf16.mxu0 0
    %2611 = vmatmul.mubr.bf16.gmra.mxu0 %v2576
    %v2612 = vpop.f32.mrf.mxu0
    %v2613 = vadd.f32 %v2561, %v2612
    %v2614 = vpop.f32.mrf.mxu0
    %v2615 = vpop.f32.mrf.mxu0
    %v2616 = vadd.f32 %v2561, %v2615
    %v2617 = vpop.f32.mrf.mxu0
    %2618 = vdwg.mxu0
    %v2619 = vadd.f32 %v1493, %v2613
    %v2620 = vadd.f32 %v1494, %v2616
    %s2621 = scalar_lea.vmem [#allocation10], 1
    %v2622 = vld [vmem:[%s2621] sm:$0x1]
    %s2623 = scalar_lea.vmem [#allocation11], 1
    %v2624 = vld [vmem:[%s2623] sm:$0x1]
    %v2625 = vsel %vm157, %v2619, 0.0
    %2626 = vadd.xlane.f32.xlu0 %v2625
    %v2627 = vpop.xlane.xlu0 %2626
    %v2628 = vsel %vm157, %v2620, 0.0
    %2629 = vadd.xlane.f32.xlu0 %v2628
    %v2630 = vpop.xlane.xlu0 %2629
    %v2631 = vmul.f32 %v2627, %v164
    %v2632 = vmul.f32 %v2630, %v164
    %v2633 = vsub.f32 %v2619, %v2631
    %v2634 = vsub.f32 %v2620, %v2632
    %v2635 = vmul.f32 %v2633, %v2633
    %v2636 = vmul.f32 %v2634, %v2634
    %v2637 = vsel %vm157, %v2635, 0.0
    %2638 = vadd.xlane.f32.xlu0 %v2637
    %v2639 = vpop.xlane.xlu0 %2638
    %v2640 = vsel %vm157, %v2636, 0.0
    %2641 = vadd.xlane.f32.xlu0 %v2640
    %v2642 = vpop.xlane.xlu0 %2641
    %v2643 = vmul.f32 %v2639, %v164
    %v2644 = vmul.f32 %v2642, %v164
    %v2645 = vadd.f32 %v2643, 1e-05
    %v2646 = vadd.f32 %v2644, 1e-05
    %v2647 = vrsqrt.pop %v2645
    %v2648 = vrsqrt.pop %v2646
    %v2649 = vmul.f32 %v2633, %v2647
    %v2650 = vmul.f32 %v2634, %v2648
    %v2652 = vlaneseq
    %v2653 = vshrl.u32 %v2652, 7
    %v2654 = vsub.s32 0, %v2653
    %v2655 = vrot.slane %v2622, %v2654
    %v2657 = vmul.f32 %v2649, %v2655
    %v2658 = vmul.f32 %v2650, %v2655
    %v2660 = vlaneseq
    %v2661 = vshrl.u32 %v2660, 7
    %v2662 = vsub.s32 0, %v2661
    %v2663 = vrot.slane %v2624, %v2662
    %v2665 = vadd.f32 %v2657, %v2663
    %v2666 = vadd.f32 %v2658, %v2663
    %v2667 = vpack.c.bf16 %v2666, %v2665
    %s2668 = scalar_lea.vmem %s8, 16
    %v2669 = vld [vmem:[%s2668] sm:$0xf]
    %v2670 = vld [vmem:[%s2668 + $0x4] sm:$0xf]
    %v2671 = vld [vmem:[%s2668 + $0x8] sm:$0xf]
    %v2672 = vld [vmem:[%s2668 + $0xc] sm:$0xf]
    %s2673 = scalar_lea.vmem [#allocation13], 1
    %v2674 = vld [vmem:[%s2673] sm:$0x1]
    %v2676 = vlaneseq
    %v2677 = vshrl.u32 %v2676, 7
    %v2678 = vsub.s32 0, %v2677
    %v2679 = vrot.slane %v2674, %v2678
    %v2685 = vunpack.c.l.b16 %v2669
    %v2686 = vunpack.c.l.b16 %v2670
    %v2687 = vunpack.c.l.b16 %v2671
    %v2688 = vunpack.c.l.b16 %v2672
    %v2689 = vpack.c.b16 %v2686, %v2685
    %v2690 = vpack.c.b16 %v2688, %v2687
    %v2694 = vsel %vm157, %v2667, 0
    %2696 = vmatprep.subr.bf16.mxu0 0
    %2697 = vmatpush1.bf16.msra.mxu0 0
    %2698 = vmatprep.subr.bf16.mxu0 0
    %2699 = vmatpush1.bf16.msra.mxu0 0
    %2700 = vmatprep.subr.bf16.mxu0 0
    %2701 = vmatpush1.bf16.msra.mxu0 0
    %2702 = vmatprep.subr.bf16.mxu0 0
    %2703 = vmatpush1.bf16.msra.mxu0 0
    %2704 = vmatprep.subr.bf16.mxu0 0
    %2705 = vmatpush1.bf16.msra.mxu0 0
    %2706 = vmatprep.subr.bf16.mxu0 0
    %2707 = vmatpush1.bf16.msra.mxu0 0
    %2708 = vmatprep.subr.bf16.mxu0 0
    %2709 = vmatpush1.bf16.msra.mxu0 %v2690
    %2710 = vmatprep.subr.bf16.mxu0 0
    %2711 = vmatpush1.bf16.msra.mxu0 %v2689
    %2712 = vmatprep.subr.bf16.mxu0 0
    %2713 = vmatpush2.bf16.msra.mxu0 0
    %2714 = vmatprep.subr.bf16.mxu0 0
    %2715 = vmatpush2.bf16.msra.mxu0 0
    %2716 = vmatprep.subr.bf16.mxu0 0
    %2717 = vmatpush2.bf16.msra.mxu0 0
    %2718 = vmatprep.subr.bf16.mxu0 0
    %2719 = vmatpush2.bf16.msra.mxu0 0
    %2720 = vmatprep.subr.bf16.mxu0 0
    %2721 = vmatpush2.bf16.msra.mxu0 0
    %2722 = vmatprep.subr.bf16.mxu0 0
    %2723 = vmatpush2.bf16.msra.mxu0 0
    %2724 = vmatprep.subr.bf16.mxu0 0
    %2725 = vmatpush2.bf16.msra.mxu0 0
    %2726 = vmatprep.subr.bf16.mxu0 0
    %2727 = vmatpush2.bf16.msra.mxu0 0
    %2728 = vmatprep.mubr.bf16.mxu0 0
    %2729 = vmatmul.mubr.bf16.gmra.mxu0 %v2694
    %v2730 = vpop.f32.mrf.mxu0
    %v2731 = vadd.f32 %v2679, %v2730
    %v2732 = vpop.f32.mrf.mxu0
    %v2733 = vpop.f32.mrf.mxu0
    %v2734 = vadd.f32 %v2679, %v2733
    %v2735 = vpop.f32.mrf.mxu0
    %2736 = vdwg.mxu0
    %v2737 = vxor.u32 %v2731, 2147483648
    %v2738 = vxor.u32 %v2734, 2147483648
    %v2739 = vmul.f32 %v2737, 1.442695
    %v2740 = vpow.pop %v2739
    %v2741 = vmul.f32 %v2738, 1.442695
    %v2742 = vpow.pop %v2741
    %v2743 = vadd.f32 %v2740, 1.0
    %v2744 = vadd.f32 %v2742, 1.0
    %v2745 = vrcp.pop %v2743
    %v2746 = vmul.f32 1.0, %v2745
    %v2747 = vrcp.pop %v2744
    %v2748 = vmul.f32 1.0, %v2747
    %v2749 = vmul.f32 %v2731, %v2746
    %v2750 = vmul.f32 %v2734, %v2748
    %v2751 = vpack.c.bf16 %v2750, %v2749
    %s2752 = scalar_lea.vmem %s10, 32
    %v2753 = vld [vmem:[%s2752] sm:$0xf]
    %v2754 = vld [vmem:[%s2752 + $0x4] sm:$0xf]
    %v2755 = vld [vmem:[%s2752 + $0x8] sm:$0xf]
    %v2756 = vld [vmem:[%s2752 + $0xc] sm:$0xf]
    %v2757 = vld [vmem:[%s2752 + $0x10] sm:$0xf]
    %v2758 = vld [vmem:[%s2752 + $0x14] sm:$0xf]
    %v2759 = vld [vmem:[%s2752 + $0x18] sm:$0xf]
    %v2760 = vld [vmem:[%s2752 + $0x1c] sm:$0xf]
    %s2761 = scalar_lea.vmem %s11, 1
    %v2762 = vld [vmem:[%s2761] sm:$0x1]
    %v2764 = vlaneseq
    %v2765 = vshrl.u32 %v2764, 7
    %v2766 = vsub.s32 0, %v2765
    %v2767 = vrot.slane %v2762, %v2766
    %v2777 = vunpack.c.l.b16 %v2753
    %v2778 = vunpack.c.l.b16 %v2754
    %v2779 = vunpack.c.l.b16 %v2755
    %v2780 = vunpack.c.l.b16 %v2756
    %v2781 = vunpack.c.l.b16 %v2757
    %v2782 = vunpack.c.l.b16 %v2758
    %v2783 = vunpack.c.l.b16 %v2759
    %v2784 = vunpack.c.l.b16 %v2760
    %v2785 = vpack.c.b16 %v2778, %v2777
    %v2786 = vpack.c.b16 %v2780, %v2779
    %v2787 = vpack.c.b16 %v2782, %v2781
    %v2788 = vpack.c.b16 %v2784, %v2783
    %v2794 = vsel %vm1448, %v2751, 0
    %2796 = vmatprep.subr.bf16.mxu0 0
    %2797 = vmatpush1.bf16.msra.mxu0 0
    %2798 = vmatprep.subr.bf16.mxu0 0
    %2799 = vmatpush1.bf16.msra.mxu0 0
    %2800 = vmatprep.subr.bf16.mxu0 0
    %2801 = vmatpush1.bf16.msra.mxu0 0
    %2802 = vmatprep.subr.bf16.mxu0 0
    %2803 = vmatpush1.bf16.msra.mxu0 0
    %2804 = vmatprep.subr.bf16.mxu0 0
    %2805 = vmatpush1.bf16.msra.mxu0 %v2788
    %2806 = vmatprep.subr.bf16.mxu0 0
    %2807 = vmatpush1.bf16.msra.mxu0 %v2787
    %2808 = vmatprep.subr.bf16.mxu0 0
    %2809 = vmatpush1.bf16.msra.mxu0 %v2786
    %2810 = vmatprep.subr.bf16.mxu0 0
    %2811 = vmatpush1.bf16.msra.mxu0 %v2785
    %2812 = vmatprep.subr.bf16.mxu0 0
    %2813 = vmatpush2.bf16.msra.mxu0 0
    %2814 = vmatprep.subr.bf16.mxu0 0
    %2815 = vmatpush2.bf16.msra.mxu0 0
    %2816 = vmatprep.subr.bf16.mxu0 0
    %2817 = vmatpush2.bf16.msra.mxu0 0
    %2818 = vmatprep.subr.bf16.mxu0 0
    %2819 = vmatpush2.bf16.msra.mxu0 0
    %2820 = vmatprep.subr.bf16.mxu0 0
    %2821 = vmatpush2.bf16.msra.mxu0 0
    %2822 = vmatprep.subr.bf16.mxu0 0
    %2823 = vmatpush2.bf16.msra.mxu0 0
    %2824 = vmatprep.subr.bf16.mxu0 0
    %2825 = vmatpush2.bf16.msra.mxu0 0
    %2826 = vmatprep.subr.bf16.mxu0 0
    %2827 = vmatpush2.bf16.msra.mxu0 0
    %2828 = vmatprep.mubr.bf16.mxu0 0
    %2829 = vmatmul.mubr.bf16.gmra.mxu0 %v2794
    %v2830 = vpop.f32.mrf.mxu0
    %v2831 = vadd.f32 %v2767, %v2830
    %v2832 = vpop.f32.mrf.mxu0
    %v2833 = vpop.f32.mrf.mxu0
    %v2834 = vadd.f32 %v2767, %v2833
    %v2835 = vpop.f32.mrf.mxu0
    %2836 = vdwg.mxu0
    %v2837 = vadd.f32 %v2619, %v2831
    %v2838 = vadd.f32 %v2620, %v2834
    %v2839 = vld [vmem:[%s12] sm:$0x1]
    %v2840 = vld [vmem:[%s13] sm:$0x1]
    %v2841 = vsel %vm157, %v2837, 0.0
    %2842 = vadd.xlane.f32.xlu0 %v2841
    %v2843 = vpop.xlane.xlu0 %2842
    %v2844 = vsel %vm157, %v2838, 0.0
    %2845 = vadd.xlane.f32.xlu0 %v2844
    %v2846 = vpop.xlane.xlu0 %2845
    %v2847 = vmul.f32 %v2843, %v164
    %v2848 = vmul.f32 %v2846, %v164
    %v2849 = vsub.f32 %v2837, %v2847
    %v2850 = vsub.f32 %v2838, %v2848
    %v2851 = vmul.f32 %v2849, %v2849
    %v2852 = vmul.f32 %v2850, %v2850
    %v2853 = vsel %vm157, %v2851, 0.0
    %2854 = vadd.xlane.f32.xlu0 %v2853
    %v2855 = vpop.xlane.xlu0 %2854
    %v2856 = vsel %vm157, %v2852, 0.0
    %2857 = vadd.xlane.f32.xlu0 %v2856
    %v2858 = vpop.xlane.xlu0 %2857
    %v2859 = vmul.f32 %v2855, %v164
    %v2860 = vmul.f32 %v2858, %v164
    %v2861 = vadd.f32 %v2859, 1e-05
    %v2862 = vadd.f32 %v2860, 1e-05
    %v2863 = vrsqrt.pop %v2861
    %v2864 = vrsqrt.pop %v2862
    %v2865 = vmul.f32 %v2849, %v2863
    %v2866 = vmul.f32 %v2850, %v2864
    %v2868 = vlaneseq
    %v2869 = vshrl.u32 %v2868, 7
    %v2870 = vsub.s32 0, %v2869
    %v2871 = vrot.slane %v2839, %v2870
    %v2873 = vmul.f32 %v2865, %v2871
    %v2874 = vmul.f32 %v2866, %v2871
    %v2876 = vlaneseq
    %v2877 = vshrl.u32 %v2876, 7
    %v2878 = vsub.s32 0, %v2877
    %v2879 = vrot.slane %v2840, %v2878
    %v2881 = vadd.f32 %v2873, %v2879
    %v2882 = vadd.f32 %v2874, %v2879
    %v2883 = vpack.c.bf16 %v2882, %v2881
    %v2884 = vld [vmem:[%s14] sm:$0xf]
    %v2885 = vld [vmem:[%s14 + $0x4] sm:$0xf]
    %v2886 = vld [vmem:[%s14 + $0x8] sm:$0xf]
    %v2887 = vld [vmem:[%s14 + $0xc] sm:$0xf]
    %v2892 = vunpack.c.l.b16 %v2884
    %v2893 = vunpack.c.l.b16 %v2885
    %v2894 = vunpack.c.l.b16 %v2886
    %v2895 = vunpack.c.l.b16 %v2887
    %v2896 = vpack.c.b16 %v2893, %v2892
    %v2897 = vpack.c.b16 %v2895, %v2894
    %v2901 = vsel %vm157, %v2883, 0
    %2903 = vmatprep.subr.bf16.mxu0 0
    %2904 = vmatpush1.bf16.msra.mxu0 0
    %2905 = vmatprep.subr.bf16.mxu0 0
    %2906 = vmatpush1.bf16.msra.mxu0 0
    %2907 = vmatprep.subr.bf16.mxu0 0
    %2908 = vmatpush1.bf16.msra.mxu0 0
    %2909 = vmatprep.subr.bf16.mxu0 0
    %2910 = vmatpush1.bf16.msra.mxu0 0
    %2911 = vmatprep.subr.bf16.mxu0 0
    %2912 = vmatpush1.bf16.msra.mxu0 0
    %2913 = vmatprep.subr.bf16.mxu0 0
    %2914 = vmatpush1.bf16.msra.mxu0 0
    %2915 = vmatprep.subr.bf16.mxu0 0
    %2916 = vmatpush1.bf16.msra.mxu0 %v2897
    %2917 = vmatprep.subr.bf16.mxu0 0
    %2918 = vmatpush1.bf16.msra.mxu0 %v2896
    %2919 = vmatprep.subr.bf16.mxu0 0
    %2920 = vmatpush2.bf16.msra.mxu0 0
    %2921 = vmatprep.subr.bf16.mxu0 0
    %2922 = vmatpush2.bf16.msra.mxu0 0
    %2923 = vmatprep.subr.bf16.mxu0 0
    %2924 = vmatpush2.bf16.msra.mxu0 0
    %2925 = vmatprep.subr.bf16.mxu0 0
    %2926 = vmatpush2.bf16.msra.mxu0 0
    %2927 = vmatprep.subr.bf16.mxu0 0
    %2928 = vmatpush2.bf16.msra.mxu0 0
    %2929 = vmatprep.subr.bf16.mxu0 0
    %2930 = vmatpush2.bf16.msra.mxu0 0
    %2931 = vmatprep.subr.bf16.mxu0 0
    %2932 = vmatpush2.bf16.msra.mxu0 0
    %2933 = vmatprep.subr.bf16.mxu0 0
    %2934 = vmatpush2.bf16.msra.mxu0 0
    %2935 = vmatprep.mubr.bf16.mxu0 0
    %2936 = vmatmul.mubr.bf16.gmra.mxu0 %v2901
    %v2937 = vpop.f32.mrf.mxu0
    %v2938 = vadd.f32 0.0, %v2937
    %v2939 = vpop.f32.mrf.mxu0
    %v2940 = vpop.f32.mrf.mxu0
    %v2941 = vadd.f32 0.0, %v2940
    %v2942 = vpop.f32.mrf.mxu0
    %2943 = vdwg.mxu0
    %2944 = vst [vmem:[#allocation14] sm:$0xff] %v2938
    %2945 = vst [vmem:[#allocation14 + $0x8] sm:$0xff] %v2941
    // Predicated region
    $region90: #{tpu_custom_call.1} parent=1 // pred_check
      _
    $region91: #{tpu_custom_call.1} parent=1 // pred_check_branch
      %2947 = sbr.rel (0) target = $region93
    $region92: #{tpu_custom_call.1} parent=1 // pred_region
      %s2949 = ssub.s32 256, 256
      %2950 = vsyncadd [#allocation4], %s2949
      %s2951 = sshll.u32 [#allocation14], 4
      %s2952 = int_to_ptr.vmem [resolvable:$true] %s2951
      %2957 = dma.vmem_to_hbm [thread:$0]  %s2952, 256, %s15, [#allocation4], 128, 128, 8
    $region93: #{tpu_custom_call.1} parent=1 // pred_fallthru
      _
    // Predicated region
    $region94: #{tpu_custom_call.1} parent=1 // pred_check
      _
    $region95: #{tpu_custom_call.1} parent=1 // pred_check_branch
      %2959 = sbr.rel (0) target = $region97
    $region96: #{tpu_custom_call.1} parent=1 // pred_region
      %2960 = dma.done [#allocation4], 256
    $region97: #{tpu_custom_call.1} parent=1 // pred_fallthru
      _
    %2961 = vsyncpa [#allocation3], 1
    %2962 = vsyncpa [#allocation6], 1
    %2963 = vsyncpa [#allocation9], 1
    %2964 = vsyncpa [#allocation12], 1
    %2965 = vsyncpa [#allocation4], 1

</llo_original>
